<compile_context>
chip_gen: v5e
topology: v5e:2x2
jax: 0.10.0
libtpu: 0.0.40
codegen_flags: <defaults>
</compile_context>

<pallas_src>
import jax
import jax.numpy as jnp
from jax.experimental import pallas as pl
from jax.experimental.pallas import tpu as pltpu

LAMBD = 0.5            # Softshrink lambda
BN_EPS = 1e-5          # BatchNorm1d default eps
CONV1_K = 64           # first conv kernel size
CONV1_S = 8            # first conv stride
CONV1_P = 1            # first conv padding
FC_PAD = 128           # lane padding for the fc head (dense stores)


def _softshrink(v):
    # softshrink(x) = x - clip(x, -lambd, lambd)
    return v - jnp.clip(v, -LAMBD, LAMBD)


# ---------------------------------------------------------------------------
# Single fused Pallas kernel: one grid step == one branch (x or y)
# ---------------------------------------------------------------------------
def ticnn_kernel(pe_ref, po_ref,
                 w1_ref, s1_ref, t1_ref,
                 w2_ref, s2_ref, t2_ref,
                 w3_ref, s3_ref, t3_ref,
                 w4_ref, s4_ref, t4_ref,
                 fw1_ref, fb1_ref, fw2_ref, fb2_ref,
                 o1_ref, o2_ref):
    f32, bf16 = jnp.float32, jnp.bfloat16
    nb = pe_ref.shape[0]                      # per-branch batch size

    def bmm(a_bf16, w_bf16):
        # (nb, M, K) x (K, N) -> (nb, M, N); bf16 operands, f32 accumulation.
        wb = jnp.broadcast_to(w_bf16, (nb,) + w_bf16.shape)
        return jax.lax.dot_general(
            a_bf16, wb,
            dimension_numbers=(((2,), (1,)), ((0,), (0,))),
            preferred_element_type=f32)

    # ---- conv1 (K=64, s=8, p=1) + BN + Softshrink, fused with MaxPool(2) ----
    w1 = w1_ref[0]                            # (64, 16) bf16 (per-branch weight)
    s1 = s1_ref[0]                            # (1, 16)  f32
    t1 = t1_ref[0]                            # (1, 16)  f32 (bias folded in)

    def conv1(patches_bf16):                  # (nb, Lp, 64) -> (nb, Lp, 16)
        return _softshrink(bmm(patches_bf16, w1) * s1 + t1)

    act = jnp.maximum(conv1(pe_ref[...]), conv1(po_ref[...]))   # (nb, 60, 16)

    # ---- fused Conv1d(K=3, p=1) + BN + Softshrink + MaxPool(2) stages -------
    def stage(p, w_ref, s_ref, t_ref):
        n, m, _ = p.shape
        mh = m // 2
        pb = p.astype(bf16)
        row = jax.lax.broadcasted_iota(jnp.int32, (mh, m), 0)
        col = jax.lax.broadcasted_iota(jnp.int32, (mh, m), 1)

        def gather(off):
            # G[j] = P[2j + off] (zero outside [0, m)) via 0/1 selection matmul.
            sel = jnp.where(col == 2 * row + off, 1.0, 0.0).astype(bf16)
            selb = jnp.broadcast_to(sel, (n, mh, m))
            return jax.lax.dot_general(
                selb, pb,
                dimension_numbers=(((2,), (1,)), ((0,), (0,))),
                preferred_element_type=f32)

        g_m1, g0, g1, g2 = gather(-1), gather(0), gather(1), gather(2)
        w = w_ref[...]                        # (3*Cin, Cout) bf16
        s = s_ref[...]                        # (1, Cout)     f32
        t = t_ref[...]                        # (1, Cout)     f32

        def conv(u):                          # u: (n, mh, 3*Cin) f32 patches
            return _softshrink(bmm(u.astype(bf16), w) * s + t)

        even = conv(jnp.concatenate([g_m1, g0, g1], axis=-1))   # conv[2j]
        odd = conv(jnp.concatenate([g0, g1, g2], axis=-1))      # conv[2j+1]
        return jnp.maximum(even, odd)                           # MaxPool(2)

    act = stage(act, w2_ref, s2_ref, t2_ref)   # (nb, 30, 32)
    act = stage(act, w3_ref, s3_ref, t3_ref)   # (nb, 15, 64)
    act = stage(act, w4_ref, s4_ref, t4_ref)   # (nb, 7, 128)

    # ---- AdaptiveMaxPool1d(1) + fc1 + fc2 (lane padded to 128) --------------
    pooled = act[:, 0:1, :]
    for i in range(1, act.shape[1]):           # static unroll over L=7
        pooled = jnp.maximum(pooled, act[:, i:i + 1, :])        # (nb, 1, 128)

    h1 = bmm(pooled.astype(bf16), fw1_ref[...]) + fb1_ref[...]  # (nb, 1, 128)
    o1_ref[0] = h1
    h2 = bmm(h1.astype(bf16), fw2_ref[...]) + fb2_ref[...]      # (nb, 1, 128)
    o2_ref[0] = h2


# ---------------------------------------------------------------------------
# Glue: even/odd im2col for the first conv only (tiny gather on (B, 1, L))
# ---------------------------------------------------------------------------
def _conv1_patches(x_ncw):
    b, _, length = x_ncw.shape
    x = x_ncw[:, 0, :]
    xpad = jnp.pad(x, ((0, 0), (CONV1_P, CONV1_P)))
    l_out = (length + 2 * CONV1_P - CONV1_K) // CONV1_S + 1
    n_pool = l_out // 2                       # MaxPool(2,2) output length
    k = jnp.arange(CONV1_K)[None, :]
    m = jnp.arange(n_pool)[:, None]
    even = xpad[:, 2 * CONV1_S * m + k]               # conv positions 0,2,4,...
    odd = xpad[:, 2 * CONV1_S * m + CONV1_S + k]      # conv positions 1,3,5,...
    return even, odd                                  # each (B, n_pool, 64)


# ---------------------------------------------------------------------------
# One-time parameter folding (outside the per-call path)
# ---------------------------------------------------------------------------
def prepare_params(p, num_class=4):
    bf16, f32 = jnp.bfloat16, jnp.float32

    def conv_w(w):                 # (Cout, Cin, K) -> (K*Cin, Cout) bf16
        co, ci, k = w.shape
        return jnp.transpose(w, (2, 1, 0)).reshape(k * ci, co).astype(bf16)

    def fold_bn(bn, bias):         # fold conv bias into the BN shift
        scale, shift = bn
        return (scale.reshape(1, -1).astype(f32),
                (bias * scale + shift).reshape(1, -1).astype(f32))

    s1, t1 = fold_bn(p['bn1'], p['conv1_b'])
    s11, t11 = fold_bn(p['bn11'], p['conv11_b'])
    s2, t2 = fold_bn(p['bn2'], p['conv2_b'])
    s3, t3 = fold_bn(p['bn3'], p['conv3_b'])
    s4, t4 = fold_bn(p['bn4'], p['conv4_b'])

    fc1_out = p['fc1_w'].shape[1]
    return {
        'w1s': jnp.stack([conv_w(p['conv1_w']), conv_w(p['conv11_w'])], 0),
        's1s': jnp.stack([s1, s11], 0),        # (2, 1, 16)
        't1s': jnp.stack([t1, t11], 0),        # (2, 1, 16)
        'w2': conv_w(p['conv2_w']), 's2': s2, 't2': t2,
        'w3': conv_w(p['conv3_w']), 's3': s3, 't3': t3,
        'w4': conv_w(p['conv4_w']), 's4': s4, 't4': t4,
        'fw1': jnp.pad(p['fc1_w'], ((0, 0), (0, FC_PAD - fc1_out))).astype(bf16),
        'fb1': jnp.pad(p['fc1_b'], (0, FC_PAD - fc1_out)).reshape(1, FC_PAD).astype(f32),
        'fw2': jnp.pad(p['fc2_w'],
                       ((0, FC_PAD - fc1_out), (0, FC_PAD - num_class))).astype(bf16),
        'fb2': jnp.pad(p['fc2_b'], (0, FC_PAD - num_class)).reshape(1, FC_PAD).astype(f32),
    }


# ---------------------------------------------------------------------------
# Forward pass (mirrors TICNN.forward(x, y) -> (x1, x2, y1, y2))
# ---------------------------------------------------------------------------
def ticnn_forward(prep, x_ncw, y_ncw, num_class=4, fc1_dim=64):
    bf16 = jnp.bfloat16
    b = x_ncw.shape[0]

    pe_x, po_x = _conv1_patches(x_ncw)
    pe_y, po_y = _conv1_patches(y_ncw)
    pe = jnp.concatenate([pe_x, pe_y], axis=0).astype(bf16)    # (2B, 60, 64)
    po = jnp.concatenate([po_x, po_y], axis=0).astype(bf16)

    def shared_spec(a):
        nd = a.ndim
        return pl.BlockSpec(a.shape, lambda i, _n=nd: (0,) * _n)

    def stacked_spec(a, lead):
        nd = a.ndim
        return pl.BlockSpec((lead,) + a.shape[1:],
                            lambda i, _n=nd: (i,) + (0,) * (_n - 1))

    operands = (pe, po,
                prep['w1s'], prep['s1s'], prep['t1s'],
                prep['w2'], prep['s2'], prep['t2'],
                prep['w3'], prep['s3'], prep['t3'],
                prep['w4'], prep['s4'], prep['t4'],
                prep['fw1'], prep['fb1'], prep['fw2'], prep['fb2'])

    in_specs = [stacked_spec(pe, b), stacked_spec(po, b),
                stacked_spec(prep['w1s'], 1),
                stacked_spec(prep['s1s'], 1),
                stacked_spec(prep['t1s'], 1)]
    in_specs += [shared_spec(a) for a in operands[5:]]

    out_shape = (jax.ShapeDtypeStruct((2, b, 1, FC_PAD), jnp.float32),
                 jax.ShapeDtypeStruct((2, b, 1, FC_PAD), jnp.float32))
    out_specs = (pl.BlockSpec((1, b, 1, FC_PAD), lambda i: (i, 0, 0, 0)),
                 pl.BlockSpec((1, b, 1, FC_PAD), lambda i: (i, 0, 0, 0)))

    o1, o2 = pl.pallas_call(
        ticnn_kernel,
        grid=(2,),                               # one grid step per branch
        in_specs=in_specs,
        out_specs=out_specs,
        out_shape=out_shape,
        compiler_params=pltpu.CompilerParams(
            dimension_semantics=("parallel",)),  # v7x: one branch per TC
    )(*operands)

    x1 = o1[0, :, 0, :fc1_dim]
    x2 = o2[0, :, 0, :num_class]
    y1 = o1[1, :, 0, :fc1_dim]
    y2 = o2[1, :, 0, :num_class]
    return x1, x2, y1, y2


# ---------------------------------------------------------------------------
# Parameters (deterministic synthetic init matching module shapes)
# ---------------------------------------------------------------------------
def make_params(key, num_class=4):
    ks = jax.random.split(key, 20)

    def nrm(k, shape, scale=0.05):
        return (scale * jax.random.normal(k, shape)).astype(jnp.float32)

    def bn(k, c):
        k1, k2, k3, k4 = jax.random.split(k, 4)
        gamma = 1.0 + 0.1 * jax.random.normal(k1, (c,))
        beta = 0.1 * jax.random.normal(k2, (c,))
        mean = 0.1 * jax.random.normal(k3, (c,))
        var = 1.0 + 0.1 * jax.random.uniform(k4, (c,))
        scale = gamma / jnp.sqrt(var + BN_EPS)
        shift = beta - mean * scale
        return scale.astype(jnp.float32), shift.astype(jnp.float32)

    return {
        # feature_layers1 / feature_layers11 (separate first convs, bias = 0)
        'conv1_w': nrm(ks[0], (16, 1, 64)),  'conv1_b': jnp.zeros((16,), jnp.float32),
        'conv11_w': nrm(ks[1], (16, 1, 64)), 'conv11_b': jnp.zeros((16,), jnp.float32),
        'bn1': bn(ks[2], 16), 'bn11': bn(ks[3], 16),
        # shared trunk
        'conv2_w': nrm(ks[4], (32, 16, 3)),   'conv2_b': nrm(ks[5], (32,), 0.02),  'bn2': bn(ks[6], 32),
        'conv3_w': nrm(ks[7], (64, 32, 3)),   'conv3_b': nrm(ks[8], (64,), 0.02),  'bn3': bn(ks[9], 64),
        'conv4_w': nrm(ks[10], (128, 64, 3)), 'conv4_b': nrm(ks[11], (128,), 0.02), 'bn4': bn(ks[12], 128),
        # shared classifier head (stored already transposed: (in, out))
        'fc1_w': nrm(ks[13], (128, 64)), 'fc1_b': nrm(ks[14], (64,), 0.02),
        'fc2_w': nrm(ks[15], (64, num_class)), 'fc2_b': nrm(ks[16], (num_class,), 0.02),
    }


# ---------------------------------------------------------------------------
if __name__ == "__main__":
    key = jax.random.PRNGKey(0)
    kx, ky, kp = jax.random.split(key, 3)

    B, L = 2, 1024                       # small 1-D signal consistent with Conv1d(1, ...)
    NUM_CLASS = 4
    x = jax.random.normal(kx, (B, 1, L), dtype=jnp.float32)
    y = jax.random.normal(ky, (B, 1, L), dtype=jnp.float32)

    params = make_params(kp, num_class=NUM_CLASS)
    prepared = prepare_params(params, num_class=NUM_CLASS)   # one-time folding

    fwd = jax.jit(ticnn_forward)
    x1, x2, y1, y2 = fwd(prepared, x, y)
    jax.block_until_ready((x1, x2, y1, y2))

    assert x1.shape == (B, 64) and x2.shape == (B, NUM_CLASS)
    assert y1.shape == (B, 64) and y2.shape == (B, NUM_CLASS)
    assert bool(jnp.all(jnp.isfinite(x1))) and bool(jnp.all(jnp.isfinite(x2)))
    assert bool(jnp.all(jnp.isfinite(y1))) and bool(jnp.all(jnp.isfinite(y2)))
    print("KERNEL_OK")
</pallas_src>

<mosaic_0001>
module attributes {stable_mosaic.version = 11 : i64} {
  func.func @ticnn_kernel(%arg0: i32, %arg1: memref<2x60x64xbf16, #tpu.memory_space<vmem>>, %arg2: memref<2x60x64xbf16, #tpu.memory_space<vmem>>, %arg3: memref<1x64x16xbf16, #tpu.memory_space<vmem>>, %arg4: memref<1x1x16xf32, #tpu.memory_space<vmem>>, %arg5: memref<1x1x16xf32, #tpu.memory_space<vmem>>, %arg6: memref<48x32xbf16, #tpu.memory_space<vmem>>, %arg7: memref<1x32xf32, #tpu.memory_space<vmem>>, %arg8: memref<1x32xf32, #tpu.memory_space<vmem>>, %arg9: memref<96x64xbf16, #tpu.memory_space<vmem>>, %arg10: memref<1x64xf32, #tpu.memory_space<vmem>>, %arg11: memref<1x64xf32, #tpu.memory_space<vmem>>, %arg12: memref<192x128xbf16, #tpu.memory_space<vmem>>, %arg13: memref<1x128xf32, #tpu.memory_space<vmem>>, %arg14: memref<1x128xf32, #tpu.memory_space<vmem>>, %arg15: memref<128x128xbf16, #tpu.memory_space<vmem>>, %arg16: memref<1x128xf32, #tpu.memory_space<vmem>>, %arg17: memref<128x128xbf16, #tpu.memory_space<vmem>>, %arg18: memref<1x128xf32, #tpu.memory_space<vmem>>, %arg19: memref<1x2x1x128xf32, #tpu.memory_space<vmem>>, %arg20: memref<1x2x1x128xf32, #tpu.memory_space<vmem>>) attributes {dimension_semantics = [#tpu.dimension_semantics<parallel>], iteration_bounds = array<i64: 2>, scalar_prefetch = 0 : i64, scratch_operands = 0 : i64, tpu.core_type = #tpu.core_type<tc>, window_params = [{transform_indices = @transform_0, window_bounds = array<i64: 2, 60, 64>}, {transform_indices = @transform_1, window_bounds = array<i64: 2, 60, 64>}, {transform_indices = @transform_2, window_bounds = array<i64: 1, 64, 16>}, {transform_indices = @transform_3, window_bounds = array<i64: 1, 1, 16>}, {transform_indices = @transform_4, window_bounds = array<i64: 1, 1, 16>}, {pipeline_mode = #tpu.pipeline_mode<synchronous>, transform_indices = @transform_5, window_bounds = array<i64: 48, 32>}, {pipeline_mode = #tpu.pipeline_mode<synchronous>, transform_indices = @transform_6, window_bounds = array<i64: 1, 32>}, {pipeline_mode = #tpu.pipeline_mode<synchronous>, transform_indices = @transform_7, window_bounds = array<i64: 1, 32>}, {pipeline_mode = #tpu.pipeline_mode<synchronous>, transform_indices = @transform_8, window_bounds = array<i64: 96, 64>}, {pipeline_mode = #tpu.pipeline_mode<synchronous>, transform_indices = @transform_9, window_bounds = array<i64: 1, 64>}, {pipeline_mode = #tpu.pipeline_mode<synchronous>, transform_indices = @transform_10, window_bounds = array<i64: 1, 64>}, {pipeline_mode = #tpu.pipeline_mode<synchronous>, transform_indices = @transform_11, window_bounds = array<i64: 192, 128>}, {pipeline_mode = #tpu.pipeline_mode<synchronous>, transform_indices = @transform_12, window_bounds = array<i64: 1, 128>}, {pipeline_mode = #tpu.pipeline_mode<synchronous>, transform_indices = @transform_13, window_bounds = array<i64: 1, 128>}, {pipeline_mode = #tpu.pipeline_mode<synchronous>, transform_indices = @transform_14, window_bounds = array<i64: 128, 128>}, {pipeline_mode = #tpu.pipeline_mode<synchronous>, transform_indices = @transform_15, window_bounds = array<i64: 1, 128>}, {pipeline_mode = #tpu.pipeline_mode<synchronous>, transform_indices = @transform_16, window_bounds = array<i64: 128, 128>}, {pipeline_mode = #tpu.pipeline_mode<synchronous>, transform_indices = @transform_17, window_bounds = array<i64: 1, 128>}, {transform_indices = @transform_18, window_bounds = array<i64: 1, 2, 1, 128>}, {transform_indices = @transform_19, window_bounds = array<i64: 1, 2, 1, 128>}]} {
    %c0 = arith.constant 0 : index
    %c0_0 = arith.constant 0 : index
    %c0_1 = arith.constant 0 : index
    %0 = vector.load %arg3[%c0, %c0_0, %c0_1] : memref<1x64x16xbf16, #tpu.memory_space<vmem>>, vector<1x64x16xbf16>
    %1 = vector.shape_cast %0 : vector<1x64x16xbf16> to vector<64x16xbf16>
    %c0_2 = arith.constant 0 : index
    %c0_3 = arith.constant 0 : index
    %c0_4 = arith.constant 0 : index
    %2 = vector.load %arg4[%c0_2, %c0_3, %c0_4] : memref<1x1x16xf32, #tpu.memory_space<vmem>>, vector<1x1x16xf32>
    %3 = vector.shape_cast %2 : vector<1x1x16xf32> to vector<1x16xf32>
    %c0_5 = arith.constant 0 : index
    %c0_6 = arith.constant 0 : index
    %c0_7 = arith.constant 0 : index
    %4 = vector.load %arg5[%c0_5, %c0_6, %c0_7] : memref<1x1x16xf32, #tpu.memory_space<vmem>>, vector<1x1x16xf32>
    %5 = vector.shape_cast %4 : vector<1x1x16xf32> to vector<1x16xf32>
    %c0_8 = arith.constant 0 : index
    %c0_9 = arith.constant 0 : index
    %c0_10 = arith.constant 0 : index
    %6 = vector.load %arg1[%c0_8, %c0_9, %c0_10] : memref<2x60x64xbf16, #tpu.memory_space<vmem>>, vector<2x60x64xbf16>
    %7 = vector.shape_cast %1 : vector<64x16xbf16> to vector<1x64x16xbf16>
    %8 = vector.broadcast %7 : vector<1x64x16xbf16> to vector<2x64x16xbf16>
    %cst = arith.constant dense<0.000000e+00> : vector<2x60x16xf32>
    %9 = tpu.matmul %6, %8, %cst {dimension_numbers = #tpu.dot_dimension_numbers<[2], [1], [1], [2], [0, 0, 0, 1, 1, 2], [0], [0]>} : vector<2x60x64xbf16>, vector<2x64x16xbf16>, vector<2x60x16xf32> -> vector<2x60x16xf32>
    %10 = vector.shape_cast %3 : vector<1x16xf32> to vector<1x1x16xf32>
    %11 = vector.broadcast %10 : vector<1x1x16xf32> to vector<2x60x16xf32>
    %12 = arith.mulf %9, %11 : vector<2x60x16xf32>
    %13 = vector.shape_cast %5 : vector<1x16xf32> to vector<1x1x16xf32>
    %14 = vector.broadcast %13 : vector<1x1x16xf32> to vector<2x60x16xf32>
    %15 = arith.addf %12, %14 : vector<2x60x16xf32>
    %cst_11 = arith.constant -5.000000e-01 : f32
    %cst_12 = arith.constant 5.000000e-01 : f32
    %16 = vector.broadcast %cst_11 : f32 to vector<2x60x16xf32>
    %17 = arith.maximumf %16, %15 : vector<2x60x16xf32>
    %18 = vector.broadcast %cst_12 : f32 to vector<2x60x16xf32>
    %19 = arith.minimumf %18, %17 : vector<2x60x16xf32>
    %20 = arith.subf %15, %19 : vector<2x60x16xf32>
    %c0_13 = arith.constant 0 : index
    %c0_14 = arith.constant 0 : index
    %c0_15 = arith.constant 0 : index
    %21 = vector.load %arg2[%c0_13, %c0_14, %c0_15] : memref<2x60x64xbf16, #tpu.memory_space<vmem>>, vector<2x60x64xbf16>
    %22 = vector.shape_cast %1 : vector<64x16xbf16> to vector<1x64x16xbf16>
    %23 = vector.broadcast %22 : vector<1x64x16xbf16> to vector<2x64x16xbf16>
    %cst_16 = arith.constant dense<0.000000e+00> : vector<2x60x16xf32>
    %24 = tpu.matmul %21, %23, %cst_16 {dimension_numbers = #tpu.dot_dimension_numbers<[2], [1], [1], [2], [0, 0, 0, 1, 1, 2], [0], [0]>} : vector<2x60x64xbf16>, vector<2x64x16xbf16>, vector<2x60x16xf32> -> vector<2x60x16xf32>
    %25 = vector.shape_cast %3 : vector<1x16xf32> to vector<1x1x16xf32>
    %26 = vector.broadcast %25 : vector<1x1x16xf32> to vector<2x60x16xf32>
    %27 = arith.mulf %24, %26 : vector<2x60x16xf32>
    %28 = vector.shape_cast %5 : vector<1x16xf32> to vector<1x1x16xf32>
    %29 = vector.broadcast %28 : vector<1x1x16xf32> to vector<2x60x16xf32>
    %30 = arith.addf %27, %29 : vector<2x60x16xf32>
    %cst_17 = arith.constant -5.000000e-01 : f32
    %cst_18 = arith.constant 5.000000e-01 : f32
    %31 = vector.broadcast %cst_17 : f32 to vector<2x60x16xf32>
    %32 = arith.maximumf %31, %30 : vector<2x60x16xf32>
    %33 = vector.broadcast %cst_18 : f32 to vector<2x60x16xf32>
    %34 = arith.minimumf %33, %32 : vector<2x60x16xf32>
    %35 = arith.subf %30, %34 : vector<2x60x16xf32>
    %36 = arith.maximumf %20, %35 : vector<2x60x16xf32>
    %37 = arith.truncf %36 : vector<2x60x16xf32> to vector<2x60x16xbf16>
    %38 = tpu.iota {dimensions = array<i32: 0>} : vector<30x60xi32>
    %39 = tpu.iota {dimensions = array<i32: 1>} : vector<30x60xi32>
    %c2_i32 = arith.constant 2 : i32
    %40 = vector.broadcast %c2_i32 : i32 to vector<30x60xi32>
    %41 = arith.muli %40, %38 : vector<30x60xi32>
    %c-1_i32 = arith.constant -1 : i32
    %42 = vector.broadcast %c-1_i32 : i32 to vector<30x60xi32>
    %43 = arith.addi %41, %42 : vector<30x60xi32>
    %44 = arith.cmpi eq, %39, %43 : vector<30x60xi32>
    %cst_19 = arith.constant 1.000000e+00 : f32
    %cst_20 = arith.constant 0.000000e+00 : f32
    %45 = vector.broadcast %cst_19 : f32 to vector<30x60xf32>
    %46 = vector.broadcast %cst_20 : f32 to vector<30x60xf32>
    %47 = arith.select %44, %45, %46 : vector<30x60xi1>, vector<30x60xf32>
    %48 = arith.truncf %47 : vector<30x60xf32> to vector<30x60xbf16>
    %49 = vector.shape_cast %48 : vector<30x60xbf16> to vector<1x30x60xbf16>
    %50 = vector.broadcast %49 : vector<1x30x60xbf16> to vector<2x30x60xbf16>
    %cst_21 = arith.constant dense<0.000000e+00> : vector<2x30x16xf32>
    %51 = tpu.matmul %50, %37, %cst_21 {dimension_numbers = #tpu.dot_dimension_numbers<[2], [1], [1], [2], [0, 0, 0, 1, 1, 2], [0], [0]>} : vector<2x30x60xbf16>, vector<2x60x16xbf16>, vector<2x30x16xf32> -> vector<2x30x16xf32>
    %c2_i32_22 = arith.constant 2 : i32
    %52 = vector.broadcast %c2_i32_22 : i32 to vector<30x60xi32>
    %53 = arith.muli %52, %38 : vector<30x60xi32>
    %c0_i32 = arith.constant 0 : i32
    %54 = vector.broadcast %c0_i32 : i32 to vector<30x60xi32>
    %55 = arith.addi %53, %54 : vector<30x60xi32>
    %56 = arith.cmpi eq, %39, %55 : vector<30x60xi32>
    %cst_23 = arith.constant 1.000000e+00 : f32
    %cst_24 = arith.constant 0.000000e+00 : f32
    %57 = vector.broadcast %cst_23 : f32 to vector<30x60xf32>
    %58 = vector.broadcast %cst_24 : f32 to vector<30x60xf32>
    %59 = arith.select %56, %57, %58 : vector<30x60xi1>, vector<30x60xf32>
    %60 = arith.truncf %59 : vector<30x60xf32> to vector<30x60xbf16>
    %61 = vector.shape_cast %60 : vector<30x60xbf16> to vector<1x30x60xbf16>
    %62 = vector.broadcast %61 : vector<1x30x60xbf16> to vector<2x30x60xbf16>
    %cst_25 = arith.constant dense<0.000000e+00> : vector<2x30x16xf32>
    %63 = tpu.matmul %62, %37, %cst_25 {dimension_numbers = #tpu.dot_dimension_numbers<[2], [1], [1], [2], [0, 0, 0, 1, 1, 2], [0], [0]>} : vector<2x30x60xbf16>, vector<2x60x16xbf16>, vector<2x30x16xf32> -> vector<2x30x16xf32>
    %c2_i32_26 = arith.constant 2 : i32
    %64 = vector.broadcast %c2_i32_26 : i32 to vector<30x60xi32>
    %65 = arith.muli %64, %38 : vector<30x60xi32>
    %c1_i32 = arith.constant 1 : i32
    %66 = vector.broadcast %c1_i32 : i32 to vector<30x60xi32>
    %67 = arith.addi %65, %66 : vector<30x60xi32>
    %68 = arith.cmpi eq, %39, %67 : vector<30x60xi32>
    %cst_27 = arith.constant 1.000000e+00 : f32
    %cst_28 = arith.constant 0.000000e+00 : f32
    %69 = vector.broadcast %cst_27 : f32 to vector<30x60xf32>
    %70 = vector.broadcast %cst_28 : f32 to vector<30x60xf32>
    %71 = arith.select %68, %69, %70 : vector<30x60xi1>, vector<30x60xf32>
    %72 = arith.truncf %71 : vector<30x60xf32> to vector<30x60xbf16>
    %73 = vector.shape_cast %72 : vector<30x60xbf16> to vector<1x30x60xbf16>
    %74 = vector.broadcast %73 : vector<1x30x60xbf16> to vector<2x30x60xbf16>
    %cst_29 = arith.constant dense<0.000000e+00> : vector<2x30x16xf32>
    %75 = tpu.matmul %74, %37, %cst_29 {dimension_numbers = #tpu.dot_dimension_numbers<[2], [1], [1], [2], [0, 0, 0, 1, 1, 2], [0], [0]>} : vector<2x30x60xbf16>, vector<2x60x16xbf16>, vector<2x30x16xf32> -> vector<2x30x16xf32>
    %c2_i32_30 = arith.constant 2 : i32
    %76 = vector.broadcast %c2_i32_30 : i32 to vector<30x60xi32>
    %77 = arith.muli %76, %38 : vector<30x60xi32>
    %c2_i32_31 = arith.constant 2 : i32
    %78 = vector.broadcast %c2_i32_31 : i32 to vector<30x60xi32>
    %79 = arith.addi %77, %78 : vector<30x60xi32>
    %80 = arith.cmpi eq, %39, %79 : vector<30x60xi32>
    %cst_32 = arith.constant 1.000000e+00 : f32
    %cst_33 = arith.constant 0.000000e+00 : f32
    %81 = vector.broadcast %cst_32 : f32 to vector<30x60xf32>
    %82 = vector.broadcast %cst_33 : f32 to vector<30x60xf32>
    %83 = arith.select %80, %81, %82 : vector<30x60xi1>, vector<30x60xf32>
    %84 = arith.truncf %83 : vector<30x60xf32> to vector<30x60xbf16>
    %85 = vector.shape_cast %84 : vector<30x60xbf16> to vector<1x30x60xbf16>
    %86 = vector.broadcast %85 : vector<1x30x60xbf16> to vector<2x30x60xbf16>
    %cst_34 = arith.constant dense<0.000000e+00> : vector<2x30x16xf32>
    %87 = tpu.matmul %86, %37, %cst_34 {dimension_numbers = #tpu.dot_dimension_numbers<[2], [1], [1], [2], [0, 0, 0, 1, 1, 2], [0], [0]>} : vector<2x30x60xbf16>, vector<2x60x16xbf16>, vector<2x30x16xf32> -> vector<2x30x16xf32>
    %c0_35 = arith.constant 0 : index
    %c0_36 = arith.constant 0 : index
    %88 = vector.load %arg6[%c0_35, %c0_36] : memref<48x32xbf16, #tpu.memory_space<vmem>>, vector<48x32xbf16>
    %c0_37 = arith.constant 0 : index
    %c0_38 = arith.constant 0 : index
    %89 = vector.load %arg7[%c0_37, %c0_38] : memref<1x32xf32, #tpu.memory_space<vmem>>, vector<1x32xf32>
    %c0_39 = arith.constant 0 : index
    %c0_40 = arith.constant 0 : index
    %90 = vector.load %arg8[%c0_39, %c0_40] : memref<1x32xf32, #tpu.memory_space<vmem>>, vector<1x32xf32>
    %91 = tpu.concatenate %51, %63, %75 in 2 : vector<2x30x16xf32>, vector<2x30x16xf32>, vector<2x30x16xf32> -> vector<2x30x48xf32>
    %92 = arith.truncf %91 : vector<2x30x48xf32> to vector<2x30x48xbf16>
    %93 = vector.shape_cast %88 : vector<48x32xbf16> to vector<1x48x32xbf16>
    %94 = vector.broadcast %93 : vector<1x48x32xbf16> to vector<2x48x32xbf16>
    %cst_41 = arith.constant dense<0.000000e+00> : vector<2x30x32xf32>
    %95 = tpu.matmul %92, %94, %cst_41 {dimension_numbers = #tpu.dot_dimension_numbers<[2], [1], [1], [2], [0, 0, 0, 1, 1, 2], [0], [0]>} : vector<2x30x48xbf16>, vector<2x48x32xbf16>, vector<2x30x32xf32> -> vector<2x30x32xf32>
    %96 = vector.shape_cast %89 : vector<1x32xf32> to vector<1x1x32xf32>
    %97 = vector.broadcast %96 : vector<1x1x32xf32> to vector<2x30x32xf32>
    %98 = arith.mulf %95, %97 : vector<2x30x32xf32>
    %99 = vector.shape_cast %90 : vector<1x32xf32> to vector<1x1x32xf32>
    %100 = vector.broadcast %99 : vector<1x1x32xf32> to vector<2x30x32xf32>
    %101 = arith.addf %98, %100 : vector<2x30x32xf32>
    %cst_42 = arith.constant -5.000000e-01 : f32
    %cst_43 = arith.constant 5.000000e-01 : f32
    %102 = vector.broadcast %cst_42 : f32 to vector<2x30x32xf32>
    %103 = arith.maximumf %102, %101 : vector<2x30x32xf32>
    %104 = vector.broadcast %cst_43 : f32 to vector<2x30x32xf32>
    %105 = arith.minimumf %104, %103 : vector<2x30x32xf32>
    %106 = arith.subf %101, %105 : vector<2x30x32xf32>
    %107 = tpu.concatenate %63, %75, %87 in 2 : vector<2x30x16xf32>, vector<2x30x16xf32>, vector<2x30x16xf32> -> vector<2x30x48xf32>
    %108 = arith.truncf %107 : vector<2x30x48xf32> to vector<2x30x48xbf16>
    %109 = vector.shape_cast %88 : vector<48x32xbf16> to vector<1x48x32xbf16>
    %110 = vector.broadcast %109 : vector<1x48x32xbf16> to vector<2x48x32xbf16>
    %cst_44 = arith.constant dense<0.000000e+00> : vector<2x30x32xf32>
    %111 = tpu.matmul %108, %110, %cst_44 {dimension_numbers = #tpu.dot_dimension_numbers<[2], [1], [1], [2], [0, 0, 0, 1, 1, 2], [0], [0]>} : vector<2x30x48xbf16>, vector<2x48x32xbf16>, vector<2x30x32xf32> -> vector<2x30x32xf32>
    %112 = vector.shape_cast %89 : vector<1x32xf32> to vector<1x1x32xf32>
    %113 = vector.broadcast %112 : vector<1x1x32xf32> to vector<2x30x32xf32>
    %114 = arith.mulf %111, %113 : vector<2x30x32xf32>
    %115 = vector.shape_cast %90 : vector<1x32xf32> to vector<1x1x32xf32>
    %116 = vector.broadcast %115 : vector<1x1x32xf32> to vector<2x30x32xf32>
    %117 = arith.addf %114, %116 : vector<2x30x32xf32>
    %cst_45 = arith.constant -5.000000e-01 : f32
    %cst_46 = arith.constant 5.000000e-01 : f32
    %118 = vector.broadcast %cst_45 : f32 to vector<2x30x32xf32>
    %119 = arith.maximumf %118, %117 : vector<2x30x32xf32>
    %120 = vector.broadcast %cst_46 : f32 to vector<2x30x32xf32>
    %121 = arith.minimumf %120, %119 : vector<2x30x32xf32>
    %122 = arith.subf %117, %121 : vector<2x30x32xf32>
    %123 = arith.maximumf %106, %122 : vector<2x30x32xf32>
    %124 = arith.truncf %123 : vector<2x30x32xf32> to vector<2x30x32xbf16>
    %125 = tpu.iota {dimensions = array<i32: 0>} : vector<15x30xi32>
    %126 = tpu.iota {dimensions = array<i32: 1>} : vector<15x30xi32>
    %c2_i32_47 = arith.constant 2 : i32
    %127 = vector.broadcast %c2_i32_47 : i32 to vector<15x30xi32>
    %128 = arith.muli %127, %125 : vector<15x30xi32>
    %c-1_i32_48 = arith.constant -1 : i32
    %129 = vector.broadcast %c-1_i32_48 : i32 to vector<15x30xi32>
    %130 = arith.addi %128, %129 : vector<15x30xi32>
    %131 = arith.cmpi eq, %126, %130 : vector<15x30xi32>
    %cst_49 = arith.constant 1.000000e+00 : f32
    %cst_50 = arith.constant 0.000000e+00 : f32
    %132 = vector.broadcast %cst_49 : f32 to vector<15x30xf32>
    %133 = vector.broadcast %cst_50 : f32 to vector<15x30xf32>
    %134 = arith.select %131, %132, %133 : vector<15x30xi1>, vector<15x30xf32>
    %135 = arith.truncf %134 : vector<15x30xf32> to vector<15x30xbf16>
    %136 = vector.shape_cast %135 : vector<15x30xbf16> to vector<1x15x30xbf16>
    %137 = vector.broadcast %136 : vector<1x15x30xbf16> to vector<2x15x30xbf16>
    %cst_51 = arith.constant dense<0.000000e+00> : vector<2x15x32xf32>
    %138 = tpu.matmul %137, %124, %cst_51 {dimension_numbers = #tpu.dot_dimension_numbers<[2], [1], [1], [2], [0, 0, 0, 1, 1, 2], [0], [0]>} : vector<2x15x30xbf16>, vector<2x30x32xbf16>, vector<2x15x32xf32> -> vector<2x15x32xf32>
    %c2_i32_52 = arith.constant 2 : i32
    %139 = vector.broadcast %c2_i32_52 : i32 to vector<15x30xi32>
    %140 = arith.muli %139, %125 : vector<15x30xi32>
    %c0_i32_53 = arith.constant 0 : i32
    %141 = vector.broadcast %c0_i32_53 : i32 to vector<15x30xi32>
    %142 = arith.addi %140, %141 : vector<15x30xi32>
    %143 = arith.cmpi eq, %126, %142 : vector<15x30xi32>
    %cst_54 = arith.constant 1.000000e+00 : f32
    %cst_55 = arith.constant 0.000000e+00 : f32
    %144 = vector.broadcast %cst_54 : f32 to vector<15x30xf32>
    %145 = vector.broadcast %cst_55 : f32 to vector<15x30xf32>
    %146 = arith.select %143, %144, %145 : vector<15x30xi1>, vector<15x30xf32>
    %147 = arith.truncf %146 : vector<15x30xf32> to vector<15x30xbf16>
    %148 = vector.shape_cast %147 : vector<15x30xbf16> to vector<1x15x30xbf16>
    %149 = vector.broadcast %148 : vector<1x15x30xbf16> to vector<2x15x30xbf16>
    %cst_56 = arith.constant dense<0.000000e+00> : vector<2x15x32xf32>
    %150 = tpu.matmul %149, %124, %cst_56 {dimension_numbers = #tpu.dot_dimension_numbers<[2], [1], [1], [2], [0, 0, 0, 1, 1, 2], [0], [0]>} : vector<2x15x30xbf16>, vector<2x30x32xbf16>, vector<2x15x32xf32> -> vector<2x15x32xf32>
    %c2_i32_57 = arith.constant 2 : i32
    %151 = vector.broadcast %c2_i32_57 : i32 to vector<15x30xi32>
    %152 = arith.muli %151, %125 : vector<15x30xi32>
    %c1_i32_58 = arith.constant 1 : i32
    %153 = vector.broadcast %c1_i32_58 : i32 to vector<15x30xi32>
    %154 = arith.addi %152, %153 : vector<15x30xi32>
    %155 = arith.cmpi eq, %126, %154 : vector<15x30xi32>
    %cst_59 = arith.constant 1.000000e+00 : f32
    %cst_60 = arith.constant 0.000000e+00 : f32
    %156 = vector.broadcast %cst_59 : f32 to vector<15x30xf32>
    %157 = vector.broadcast %cst_60 : f32 to vector<15x30xf32>
    %158 = arith.select %155, %156, %157 : vector<15x30xi1>, vector<15x30xf32>
    %159 = arith.truncf %158 : vector<15x30xf32> to vector<15x30xbf16>
    %160 = vector.shape_cast %159 : vector<15x30xbf16> to vector<1x15x30xbf16>
    %161 = vector.broadcast %160 : vector<1x15x30xbf16> to vector<2x15x30xbf16>
    %cst_61 = arith.constant dense<0.000000e+00> : vector<2x15x32xf32>
    %162 = tpu.matmul %161, %124, %cst_61 {dimension_numbers = #tpu.dot_dimension_numbers<[2], [1], [1], [2], [0, 0, 0, 1, 1, 2], [0], [0]>} : vector<2x15x30xbf16>, vector<2x30x32xbf16>, vector<2x15x32xf32> -> vector<2x15x32xf32>
    %c2_i32_62 = arith.constant 2 : i32
    %163 = vector.broadcast %c2_i32_62 : i32 to vector<15x30xi32>
    %164 = arith.muli %163, %125 : vector<15x30xi32>
    %c2_i32_63 = arith.constant 2 : i32
    %165 = vector.broadcast %c2_i32_63 : i32 to vector<15x30xi32>
    %166 = arith.addi %164, %165 : vector<15x30xi32>
    %167 = arith.cmpi eq, %126, %166 : vector<15x30xi32>
    %cst_64 = arith.constant 1.000000e+00 : f32
    %cst_65 = arith.constant 0.000000e+00 : f32
    %168 = vector.broadcast %cst_64 : f32 to vector<15x30xf32>
    %169 = vector.broadcast %cst_65 : f32 to vector<15x30xf32>
    %170 = arith.select %167, %168, %169 : vector<15x30xi1>, vector<15x30xf32>
    %171 = arith.truncf %170 : vector<15x30xf32> to vector<15x30xbf16>
    %172 = vector.shape_cast %171 : vector<15x30xbf16> to vector<1x15x30xbf16>
    %173 = vector.broadcast %172 : vector<1x15x30xbf16> to vector<2x15x30xbf16>
    %cst_66 = arith.constant dense<0.000000e+00> : vector<2x15x32xf32>
    %174 = tpu.matmul %173, %124, %cst_66 {dimension_numbers = #tpu.dot_dimension_numbers<[2], [1], [1], [2], [0, 0, 0, 1, 1, 2], [0], [0]>} : vector<2x15x30xbf16>, vector<2x30x32xbf16>, vector<2x15x32xf32> -> vector<2x15x32xf32>
    %c0_67 = arith.constant 0 : index
    %c0_68 = arith.constant 0 : index
    %175 = vector.load %arg9[%c0_67, %c0_68] : memref<96x64xbf16, #tpu.memory_space<vmem>>, vector<96x64xbf16>
    %c0_69 = arith.constant 0 : index
    %c0_70 = arith.constant 0 : index
    %176 = vector.load %arg10[%c0_69, %c0_70] : memref<1x64xf32, #tpu.memory_space<vmem>>, vector<1x64xf32>
    %c0_71 = arith.constant 0 : index
    %c0_72 = arith.constant 0 : index
    %177 = vector.load %arg11[%c0_71, %c0_72] : memref<1x64xf32, #tpu.memory_space<vmem>>, vector<1x64xf32>
    %178 = tpu.concatenate %138, %150, %162 in 2 : vector<2x15x32xf32>, vector<2x15x32xf32>, vector<2x15x32xf32> -> vector<2x15x96xf32>
    %179 = arith.truncf %178 : vector<2x15x96xf32> to vector<2x15x96xbf16>
    %180 = vector.shape_cast %175 : vector<96x64xbf16> to vector<1x96x64xbf16>
    %181 = vector.broadcast %180 : vector<1x96x64xbf16> to vector<2x96x64xbf16>
    %cst_73 = arith.constant dense<0.000000e+00> : vector<2x15x64xf32>
    %182 = tpu.matmul %179, %181, %cst_73 {dimension_numbers = #tpu.dot_dimension_numbers<[2], [1], [1], [2], [0, 0, 0, 1, 1, 2], [0], [0]>} : vector<2x15x96xbf16>, vector<2x96x64xbf16>, vector<2x15x64xf32> -> vector<2x15x64xf32>
    %183 = vector.shape_cast %176 : vector<1x64xf32> to vector<1x1x64xf32>
    %184 = vector.broadcast %183 : vector<1x1x64xf32> to vector<2x15x64xf32>
    %185 = arith.mulf %182, %184 : vector<2x15x64xf32>
    %186 = vector.shape_cast %177 : vector<1x64xf32> to vector<1x1x64xf32>
    %187 = vector.broadcast %186 : vector<1x1x64xf32> to vector<2x15x64xf32>
    %188 = arith.addf %185, %187 : vector<2x15x64xf32>
    %cst_74 = arith.constant -5.000000e-01 : f32
    %cst_75 = arith.constant 5.000000e-01 : f32
    %189 = vector.broadcast %cst_74 : f32 to vector<2x15x64xf32>
    %190 = arith.maximumf %189, %188 : vector<2x15x64xf32>
    %191 = vector.broadcast %cst_75 : f32 to vector<2x15x64xf32>
    %192 = arith.minimumf %191, %190 : vector<2x15x64xf32>
    %193 = arith.subf %188, %192 : vector<2x15x64xf32>
    %194 = tpu.concatenate %150, %162, %174 in 2 : vector<2x15x32xf32>, vector<2x15x32xf32>, vector<2x15x32xf32> -> vector<2x15x96xf32>
    %195 = arith.truncf %194 : vector<2x15x96xf32> to vector<2x15x96xbf16>
    %196 = vector.shape_cast %175 : vector<96x64xbf16> to vector<1x96x64xbf16>
    %197 = vector.broadcast %196 : vector<1x96x64xbf16> to vector<2x96x64xbf16>
    %cst_76 = arith.constant dense<0.000000e+00> : vector<2x15x64xf32>
    %198 = tpu.matmul %195, %197, %cst_76 {dimension_numbers = #tpu.dot_dimension_numbers<[2], [1], [1], [2], [0, 0, 0, 1, 1, 2], [0], [0]>} : vector<2x15x96xbf16>, vector<2x96x64xbf16>, vector<2x15x64xf32> -> vector<2x15x64xf32>
    %199 = vector.shape_cast %176 : vector<1x64xf32> to vector<1x1x64xf32>
    %200 = vector.broadcast %199 : vector<1x1x64xf32> to vector<2x15x64xf32>
    %201 = arith.mulf %198, %200 : vector<2x15x64xf32>
    %202 = vector.shape_cast %177 : vector<1x64xf32> to vector<1x1x64xf32>
    %203 = vector.broadcast %202 : vector<1x1x64xf32> to vector<2x15x64xf32>
    %204 = arith.addf %201, %203 : vector<2x15x64xf32>
    %cst_77 = arith.constant -5.000000e-01 : f32
    %cst_78 = arith.constant 5.000000e-01 : f32
    %205 = vector.broadcast %cst_77 : f32 to vector<2x15x64xf32>
    %206 = arith.maximumf %205, %204 : vector<2x15x64xf32>
    %207 = vector.broadcast %cst_78 : f32 to vector<2x15x64xf32>
    %208 = arith.minimumf %207, %206 : vector<2x15x64xf32>
    %209 = arith.subf %204, %208 : vector<2x15x64xf32>
    %210 = arith.maximumf %193, %209 : vector<2x15x64xf32>
    %211 = arith.truncf %210 : vector<2x15x64xf32> to vector<2x15x64xbf16>
    %212 = tpu.iota {dimensions = array<i32: 0>} : vector<7x15xi32>
    %213 = tpu.iota {dimensions = array<i32: 1>} : vector<7x15xi32>
    %c2_i32_79 = arith.constant 2 : i32
    %214 = vector.broadcast %c2_i32_79 : i32 to vector<7x15xi32>
    %215 = arith.muli %214, %212 : vector<7x15xi32>
    %c-1_i32_80 = arith.constant -1 : i32
    %216 = vector.broadcast %c-1_i32_80 : i32 to vector<7x15xi32>
    %217 = arith.addi %215, %216 : vector<7x15xi32>
    %218 = arith.cmpi eq, %213, %217 : vector<7x15xi32>
    %cst_81 = arith.constant 1.000000e+00 : f32
    %cst_82 = arith.constant 0.000000e+00 : f32
    %219 = vector.broadcast %cst_81 : f32 to vector<7x15xf32>
    %220 = vector.broadcast %cst_82 : f32 to vector<7x15xf32>
    %221 = arith.select %218, %219, %220 : vector<7x15xi1>, vector<7x15xf32>
    %222 = arith.truncf %221 : vector<7x15xf32> to vector<7x15xbf16>
    %223 = vector.shape_cast %222 : vector<7x15xbf16> to vector<1x7x15xbf16>
    %224 = vector.broadcast %223 : vector<1x7x15xbf16> to vector<2x7x15xbf16>
    %cst_83 = arith.constant dense<0.000000e+00> : vector<2x7x64xf32>
    %225 = tpu.matmul %224, %211, %cst_83 {dimension_numbers = #tpu.dot_dimension_numbers<[2], [1], [1], [2], [0, 0, 0, 1, 1, 2], [0], [0]>} : vector<2x7x15xbf16>, vector<2x15x64xbf16>, vector<2x7x64xf32> -> vector<2x7x64xf32>
    %c2_i32_84 = arith.constant 2 : i32
    %226 = vector.broadcast %c2_i32_84 : i32 to vector<7x15xi32>
    %227 = arith.muli %226, %212 : vector<7x15xi32>
    %c0_i32_85 = arith.constant 0 : i32
    %228 = vector.broadcast %c0_i32_85 : i32 to vector<7x15xi32>
    %229 = arith.addi %227, %228 : vector<7x15xi32>
    %230 = arith.cmpi eq, %213, %229 : vector<7x15xi32>
    %cst_86 = arith.constant 1.000000e+00 : f32
    %cst_87 = arith.constant 0.000000e+00 : f32
    %231 = vector.broadcast %cst_86 : f32 to vector<7x15xf32>
    %232 = vector.broadcast %cst_87 : f32 to vector<7x15xf32>
    %233 = arith.select %230, %231, %232 : vector<7x15xi1>, vector<7x15xf32>
    %234 = arith.truncf %233 : vector<7x15xf32> to vector<7x15xbf16>
    %235 = vector.shape_cast %234 : vector<7x15xbf16> to vector<1x7x15xbf16>
    %236 = vector.broadcast %235 : vector<1x7x15xbf16> to vector<2x7x15xbf16>
    %cst_88 = arith.constant dense<0.000000e+00> : vector<2x7x64xf32>
    %237 = tpu.matmul %236, %211, %cst_88 {dimension_numbers = #tpu.dot_dimension_numbers<[2], [1], [1], [2], [0, 0, 0, 1, 1, 2], [0], [0]>} : vector<2x7x15xbf16>, vector<2x15x64xbf16>, vector<2x7x64xf32> -> vector<2x7x64xf32>
    %c2_i32_89 = arith.constant 2 : i32
    %238 = vector.broadcast %c2_i32_89 : i32 to vector<7x15xi32>
    %239 = arith.muli %238, %212 : vector<7x15xi32>
    %c1_i32_90 = arith.constant 1 : i32
    %240 = vector.broadcast %c1_i32_90 : i32 to vector<7x15xi32>
    %241 = arith.addi %239, %240 : vector<7x15xi32>
    %242 = arith.cmpi eq, %213, %241 : vector<7x15xi32>
    %cst_91 = arith.constant 1.000000e+00 : f32
    %cst_92 = arith.constant 0.000000e+00 : f32
    %243 = vector.broadcast %cst_91 : f32 to vector<7x15xf32>
    %244 = vector.broadcast %cst_92 : f32 to vector<7x15xf32>
    %245 = arith.select %242, %243, %244 : vector<7x15xi1>, vector<7x15xf32>
    %246 = arith.truncf %245 : vector<7x15xf32> to vector<7x15xbf16>
    %247 = vector.shape_cast %246 : vector<7x15xbf16> to vector<1x7x15xbf16>
    %248 = vector.broadcast %247 : vector<1x7x15xbf16> to vector<2x7x15xbf16>
    %cst_93 = arith.constant dense<0.000000e+00> : vector<2x7x64xf32>
    %249 = tpu.matmul %248, %211, %cst_93 {dimension_numbers = #tpu.dot_dimension_numbers<[2], [1], [1], [2], [0, 0, 0, 1, 1, 2], [0], [0]>} : vector<2x7x15xbf16>, vector<2x15x64xbf16>, vector<2x7x64xf32> -> vector<2x7x64xf32>
    %c2_i32_94 = arith.constant 2 : i32
    %250 = vector.broadcast %c2_i32_94 : i32 to vector<7x15xi32>
    %251 = arith.muli %250, %212 : vector<7x15xi32>
    %c2_i32_95 = arith.constant 2 : i32
    %252 = vector.broadcast %c2_i32_95 : i32 to vector<7x15xi32>
    %253 = arith.addi %251, %252 : vector<7x15xi32>
    %254 = arith.cmpi eq, %213, %253 : vector<7x15xi32>
    %cst_96 = arith.constant 1.000000e+00 : f32
    %cst_97 = arith.constant 0.000000e+00 : f32
    %255 = vector.broadcast %cst_96 : f32 to vector<7x15xf32>
    %256 = vector.broadcast %cst_97 : f32 to vector<7x15xf32>
    %257 = arith.select %254, %255, %256 : vector<7x15xi1>, vector<7x15xf32>
    %258 = arith.truncf %257 : vector<7x15xf32> to vector<7x15xbf16>
    %259 = vector.shape_cast %258 : vector<7x15xbf16> to vector<1x7x15xbf16>
    %260 = vector.broadcast %259 : vector<1x7x15xbf16> to vector<2x7x15xbf16>
    %cst_98 = arith.constant dense<0.000000e+00> : vector<2x7x64xf32>
    %261 = tpu.matmul %260, %211, %cst_98 {dimension_numbers = #tpu.dot_dimension_numbers<[2], [1], [1], [2], [0, 0, 0, 1, 1, 2], [0], [0]>} : vector<2x7x15xbf16>, vector<2x15x64xbf16>, vector<2x7x64xf32> -> vector<2x7x64xf32>
    %c0_99 = arith.constant 0 : index
    %c0_100 = arith.constant 0 : index
    %262 = vector.load %arg12[%c0_99, %c0_100] : memref<192x128xbf16, #tpu.memory_space<vmem>>, vector<192x128xbf16>
    %c0_101 = arith.constant 0 : index
    %c0_102 = arith.constant 0 : index
    %263 = vector.load %arg13[%c0_101, %c0_102] : memref<1x128xf32, #tpu.memory_space<vmem>>, vector<1x128xf32>
    %c0_103 = arith.constant 0 : index
    %c0_104 = arith.constant 0 : index
    %264 = vector.load %arg14[%c0_103, %c0_104] : memref<1x128xf32, #tpu.memory_space<vmem>>, vector<1x128xf32>
    %265 = tpu.concatenate %225, %237, %249 in 2 : vector<2x7x64xf32>, vector<2x7x64xf32>, vector<2x7x64xf32> -> vector<2x7x192xf32>
    %266 = arith.truncf %265 : vector<2x7x192xf32> to vector<2x7x192xbf16>
    %267 = vector.shape_cast %262 : vector<192x128xbf16> to vector<1x192x128xbf16>
    %268 = vector.broadcast %267 : vector<1x192x128xbf16> to vector<2x192x128xbf16>
    %cst_105 = arith.constant dense<0.000000e+00> : vector<2x7x128xf32>
    %269 = tpu.matmul %266, %268, %cst_105 {dimension_numbers = #tpu.dot_dimension_numbers<[2], [1], [1], [2], [0, 0, 0, 1, 1, 2], [0], [0]>} : vector<2x7x192xbf16>, vector<2x192x128xbf16>, vector<2x7x128xf32> -> vector<2x7x128xf32>
    %270 = vector.shape_cast %263 : vector<1x128xf32> to vector<1x1x128xf32>
    %271 = vector.broadcast %270 : vector<1x1x128xf32> to vector<2x7x128xf32>
    %272 = arith.mulf %269, %271 : vector<2x7x128xf32>
    %273 = vector.shape_cast %264 : vector<1x128xf32> to vector<1x1x128xf32>
    %274 = vector.broadcast %273 : vector<1x1x128xf32> to vector<2x7x128xf32>
    %275 = arith.addf %272, %274 : vector<2x7x128xf32>
    %cst_106 = arith.constant -5.000000e-01 : f32
    %cst_107 = arith.constant 5.000000e-01 : f32
    %276 = vector.broadcast %cst_106 : f32 to vector<2x7x128xf32>
    %277 = arith.maximumf %276, %275 : vector<2x7x128xf32>
    %278 = vector.broadcast %cst_107 : f32 to vector<2x7x128xf32>
    %279 = arith.minimumf %278, %277 : vector<2x7x128xf32>
    %280 = arith.subf %275, %279 : vector<2x7x128xf32>
    %281 = tpu.concatenate %237, %249, %261 in 2 : vector<2x7x64xf32>, vector<2x7x64xf32>, vector<2x7x64xf32> -> vector<2x7x192xf32>
    %282 = arith.truncf %281 : vector<2x7x192xf32> to vector<2x7x192xbf16>
    %283 = vector.shape_cast %262 : vector<192x128xbf16> to vector<1x192x128xbf16>
    %284 = vector.broadcast %283 : vector<1x192x128xbf16> to vector<2x192x128xbf16>
    %cst_108 = arith.constant dense<0.000000e+00> : vector<2x7x128xf32>
    %285 = tpu.matmul %282, %284, %cst_108 {dimension_numbers = #tpu.dot_dimension_numbers<[2], [1], [1], [2], [0, 0, 0, 1, 1, 2], [0], [0]>} : vector<2x7x192xbf16>, vector<2x192x128xbf16>, vector<2x7x128xf32> -> vector<2x7x128xf32>
    %286 = vector.shape_cast %263 : vector<1x128xf32> to vector<1x1x128xf32>
    %287 = vector.broadcast %286 : vector<1x1x128xf32> to vector<2x7x128xf32>
    %288 = arith.mulf %285, %287 : vector<2x7x128xf32>
    %289 = vector.shape_cast %264 : vector<1x128xf32> to vector<1x1x128xf32>
    %290 = vector.broadcast %289 : vector<1x1x128xf32> to vector<2x7x128xf32>
    %291 = arith.addf %288, %290 : vector<2x7x128xf32>
    %cst_109 = arith.constant -5.000000e-01 : f32
    %cst_110 = arith.constant 5.000000e-01 : f32
    %292 = vector.broadcast %cst_109 : f32 to vector<2x7x128xf32>
    %293 = arith.maximumf %292, %291 : vector<2x7x128xf32>
    %294 = vector.broadcast %cst_110 : f32 to vector<2x7x128xf32>
    %295 = arith.minimumf %294, %293 : vector<2x7x128xf32>
    %296 = arith.subf %291, %295 : vector<2x7x128xf32>
    %297 = arith.maximumf %280, %296 : vector<2x7x128xf32>
    %298 = vector.extract_strided_slice %297 {offsets = [0, 0, 0], sizes = [2, 1, 128], strides = [1, 1, 1]} : vector<2x7x128xf32> to vector<2x1x128xf32>
    %299 = vector.extract_strided_slice %297 {offsets = [0, 1, 0], sizes = [2, 1, 128], strides = [1, 1, 1]} : vector<2x7x128xf32> to vector<2x1x128xf32>
    %300 = arith.maximumf %298, %299 : vector<2x1x128xf32>
    %301 = vector.extract_strided_slice %297 {offsets = [0, 2, 0], sizes = [2, 1, 128], strides = [1, 1, 1]} : vector<2x7x128xf32> to vector<2x1x128xf32>
    %302 = arith.maximumf %300, %301 : vector<2x1x128xf32>
    %303 = vector.extract_strided_slice %297 {offsets = [0, 3, 0], sizes = [2, 1, 128], strides = [1, 1, 1]} : vector<2x7x128xf32> to vector<2x1x128xf32>
    %304 = arith.maximumf %302, %303 : vector<2x1x128xf32>
    %305 = vector.extract_strided_slice %297 {offsets = [0, 4, 0], sizes = [2, 1, 128], strides = [1, 1, 1]} : vector<2x7x128xf32> to vector<2x1x128xf32>
    %306 = arith.maximumf %304, %305 : vector<2x1x128xf32>
    %307 = vector.extract_strided_slice %297 {offsets = [0, 5, 0], sizes = [2, 1, 128], strides = [1, 1, 1]} : vector<2x7x128xf32> to vector<2x1x128xf32>
    %308 = arith.maximumf %306, %307 : vector<2x1x128xf32>
    %309 = vector.extract_strided_slice %297 {offsets = [0, 6, 0], sizes = [2, 1, 128], strides = [1, 1, 1]} : vector<2x7x128xf32> to vector<2x1x128xf32>
    %310 = arith.maximumf %308, %309 : vector<2x1x128xf32>
    %311 = arith.truncf %310 : vector<2x1x128xf32> to vector<2x1x128xbf16>
    %c0_111 = arith.constant 0 : index
    %c0_112 = arith.constant 0 : index
    %312 = vector.load %arg15[%c0_111, %c0_112] : memref<128x128xbf16, #tpu.memory_space<vmem>>, vector<128x128xbf16>
    %313 = vector.shape_cast %312 : vector<128x128xbf16> to vector<1x128x128xbf16>
    %314 = vector.broadcast %313 : vector<1x128x128xbf16> to vector<2x128x128xbf16>
    %cst_113 = arith.constant dense<0.000000e+00> : vector<2x1x128xf32>
    %315 = tpu.matmul %311, %314, %cst_113 {dimension_numbers = #tpu.dot_dimension_numbers<[2], [1], [1], [2], [0, 0, 0, 1, 1, 2], [0], [0]>} : vector<2x1x128xbf16>, vector<2x128x128xbf16>, vector<2x1x128xf32> -> vector<2x1x128xf32>
    %c0_114 = arith.constant 0 : index
    %c0_115 = arith.constant 0 : index
    %316 = vector.load %arg16[%c0_114, %c0_115] : memref<1x128xf32, #tpu.memory_space<vmem>>, vector<1x128xf32>
    %317 = vector.shape_cast %316 : vector<1x128xf32> to vector<1x1x128xf32>
    %318 = vector.broadcast %317 : vector<1x1x128xf32> to vector<2x1x128xf32>
    %319 = arith.addf %315, %318 : vector<2x1x128xf32>
    %c0_116 = arith.constant 0 : index
    %c0_117 = arith.constant 0 : index
    %c0_118 = arith.constant 0 : index
    %c0_119 = arith.constant 0 : index
    %320 = vector.load %arg19[%c0_116, %c0_117, %c0_118, %c0_119] : memref<1x2x1x128xf32, #tpu.memory_space<vmem>>, vector<1x2x1x128xf32>
    %321 = vector.shape_cast %320 : vector<1x2x1x128xf32> to vector<2x1x128xf32>
    %322 = vector.shape_cast %319 : vector<2x1x128xf32> to vector<1x2x1x128xf32>
    tpu.vector_store %arg19[%c0_116, %c0_117, %c0_118, %c0_119], %322 {strides = array<i32>} : memref<1x2x1x128xf32, #tpu.memory_space<vmem>>, vector<1x2x1x128xf32>,
    %323 = arith.truncf %319 : vector<2x1x128xf32> to vector<2x1x128xbf16>
    %c0_120 = arith.constant 0 : index
    %c0_121 = arith.constant 0 : index
    %324 = vector.load %arg17[%c0_120, %c0_121] : memref<128x128xbf16, #tpu.memory_space<vmem>>, vector<128x128xbf16>
    %325 = vector.shape_cast %324 : vector<128x128xbf16> to vector<1x128x128xbf16>
    %326 = vector.broadcast %325 : vector<1x128x128xbf16> to vector<2x128x128xbf16>
    %cst_122 = arith.constant dense<0.000000e+00> : vector<2x1x128xf32>
    %327 = tpu.matmul %323, %326, %cst_122 {dimension_numbers = #tpu.dot_dimension_numbers<[2], [1], [1], [2], [0, 0, 0, 1, 1, 2], [0], [0]>} : vector<2x1x128xbf16>, vector<2x128x128xbf16>, vector<2x1x128xf32> -> vector<2x1x128xf32>
    %c0_123 = arith.constant 0 : index
    %c0_124 = arith.constant 0 : index
    %328 = vector.load %arg18[%c0_123, %c0_124] : memref<1x128xf32, #tpu.memory_space<vmem>>, vector<1x128xf32>
    %329 = vector.shape_cast %328 : vector<1x128xf32> to vector<1x1x128xf32>
    %330 = vector.broadcast %329 : vector<1x1x128xf32> to vector<2x1x128xf32>
    %331 = arith.addf %327, %330 : vector<2x1x128xf32>
    %c0_125 = arith.constant 0 : index
    %c0_126 = arith.constant 0 : index
    %c0_127 = arith.constant 0 : index
    %c0_128 = arith.constant 0 : index
    %332 = vector.load %arg20[%c0_125, %c0_126, %c0_127, %c0_128] : memref<1x2x1x128xf32, #tpu.memory_space<vmem>>, vector<1x2x1x128xf32>
    %333 = vector.shape_cast %332 : vector<1x2x1x128xf32> to vector<2x1x128xf32>
    %334 = vector.shape_cast %331 : vector<2x1x128xf32> to vector<1x2x1x128xf32>
    tpu.vector_store %arg20[%c0_125, %c0_126, %c0_127, %c0_128], %334 {strides = array<i32>} : memref<1x2x1x128xf32, #tpu.memory_space<vmem>>, vector<1x2x1x128xf32>,
    return
  }
  func.func @transform_0(%arg0: i32) -> (i32, i32, i32) {
    %c0_i32 = arith.constant 0 : i32
    %c0_i32_0 = arith.constant 0 : i32
    %c0_i32_1 = arith.constant 0 : i32
    return %arg0, %c0_i32, %c0_i32_0 : i32, i32, i32
  }
  func.func @transform_1(%arg0: i32) -> (i32, i32, i32) {
    %c0_i32 = arith.constant 0 : i32
    %c0_i32_0 = arith.constant 0 : i32
    %c0_i32_1 = arith.constant 0 : i32
    return %arg0, %c0_i32, %c0_i32_0 : i32, i32, i32
  }
  func.func @transform_2(%arg0: i32) -> (i32, i32, i32) {
    %c0_i32 = arith.constant 0 : i32
    %c0_i32_0 = arith.constant 0 : i32
    %c0_i32_1 = arith.constant 0 : i32
    return %arg0, %c0_i32, %c0_i32_0 : i32, i32, i32
  }
  func.func @transform_3(%arg0: i32) -> (i32, i32, i32) {
    %c0_i32 = arith.constant 0 : i32
    %c0_i32_0 = arith.constant 0 : i32
    %c0_i32_1 = arith.constant 0 : i32
    return %arg0, %c0_i32, %c0_i32_0 : i32, i32, i32
  }
  func.func @transform_4(%arg0: i32) -> (i32, i32, i32) {
    %c0_i32 = arith.constant 0 : i32
    %c0_i32_0 = arith.constant 0 : i32
    %c0_i32_1 = arith.constant 0 : i32
    return %arg0, %c0_i32, %c0_i32_0 : i32, i32, i32
  }
  func.func @transform_5(%arg0: i32) -> (i32, i32) {
    %c0_i32 = arith.constant 0 : i32
    %c0_i32_0 = arith.constant 0 : i32
    %c0_i32_1 = arith.constant 0 : i32
    return %c0_i32, %c0_i32_0 : i32, i32
  }
  func.func @transform_6(%arg0: i32) -> (i32, i32) {
    %c0_i32 = arith.constant 0 : i32
    %c0_i32_0 = arith.constant 0 : i32
    %c0_i32_1 = arith.constant 0 : i32
    return %c0_i32, %c0_i32_0 : i32, i32
  }
  func.func @transform_7(%arg0: i32) -> (i32, i32) {
    %c0_i32 = arith.constant 0 : i32
    %c0_i32_0 = arith.constant 0 : i32
    %c0_i32_1 = arith.constant 0 : i32
    return %c0_i32, %c0_i32_0 : i32, i32
  }
  func.func @transform_8(%arg0: i32) -> (i32, i32) {
    %c0_i32 = arith.constant 0 : i32
    %c0_i32_0 = arith.constant 0 : i32
    %c0_i32_1 = arith.constant 0 : i32
    return %c0_i32, %c0_i32_0 : i32, i32
  }
  func.func @transform_9(%arg0: i32) -> (i32, i32) {
    %c0_i32 = arith.constant 0 : i32
    %c0_i32_0 = arith.constant 0 : i32
    %c0_i32_1 = arith.constant 0 : i32
    return %c0_i32, %c0_i32_0 : i32, i32
  }
  func.func @transform_10(%arg0: i32) -> (i32, i32) {
    %c0_i32 = arith.constant 0 : i32
    %c0_i32_0 = arith.constant 0 : i32
    %c0_i32_1 = arith.constant 0 : i32
    return %c0_i32, %c0_i32_0 : i32, i32
  }
  func.func @transform_11(%arg0: i32) -> (i32, i32) {
    %c0_i32 = arith.constant 0 : i32
    %c0_i32_0 = arith.constant 0 : i32
    %c0_i32_1 = arith.constant 0 : i32
    return %c0_i32, %c0_i32_0 : i32, i32
  }
  func.func @transform_12(%arg0: i32) -> (i32, i32) {
    %c0_i32 = arith.constant 0 : i32
    %c0_i32_0 = arith.constant 0 : i32
    %c0_i32_1 = arith.constant 0 : i32
    return %c0_i32, %c0_i32_0 : i32, i32
  }
  func.func @transform_13(%arg0: i32) -> (i32, i32) {
    %c0_i32 = arith.constant 0 : i32
    %c0_i32_0 = arith.constant 0 : i32
    %c0_i32_1 = arith.constant 0 : i32
    return %c0_i32, %c0_i32_0 : i32, i32
  }
  func.func @transform_14(%arg0: i32) -> (i32, i32) {
    %c0_i32 = arith.constant 0 : i32
    %c0_i32_0 = arith.constant 0 : i32
    %c0_i32_1 = arith.constant 0 : i32
    return %c0_i32, %c0_i32_0 : i32, i32
  }
  func.func @transform_15(%arg0: i32) -> (i32, i32) {
    %c0_i32 = arith.constant 0 : i32
    %c0_i32_0 = arith.constant 0 : i32
    %c0_i32_1 = arith.constant 0 : i32
    return %c0_i32, %c0_i32_0 : i32, i32
  }
  func.func @transform_16(%arg0: i32) -> (i32, i32) {
    %c0_i32 = arith.constant 0 : i32
    %c0_i32_0 = arith.constant 0 : i32
    %c0_i32_1 = arith.constant 0 : i32
    return %c0_i32, %c0_i32_0 : i32, i32
  }
  func.func @transform_17(%arg0: i32) -> (i32, i32) {
    %c0_i32 = arith.constant 0 : i32
    %c0_i32_0 = arith.constant 0 : i32
    %c0_i32_1 = arith.constant 0 : i32
    return %c0_i32, %c0_i32_0 : i32, i32
  }
  func.func @transform_18(%arg0: i32) -> (i32, i32, i32, i32) {
    %c0_i32 = arith.constant 0 : i32
    %c0_i32_0 = arith.constant 0 : i32
    %c0_i32_1 = arith.constant 0 : i32
    %c0_i32_2 = arith.constant 0 : i32
    return %arg0, %c0_i32, %c0_i32_0, %c0_i32_1 : i32, i32, i32, i32
  }
  func.func @transform_19(%arg0: i32) -> (i32, i32, i32, i32) {
    %c0_i32 = arith.constant 0 : i32
    %c0_i32_0 = arith.constant 0 : i32
    %c0_i32_1 = arith.constant 0 : i32
    %c0_i32_2 = arith.constant 0 : i32
    return %arg0, %c0_i32, %c0_i32_0, %c0_i32_1 : i32, i32, i32, i32
  }
}

</mosaic_0001>

<llo_original>
// kernel: ticnn_forward.1
$region0: #{ticnn_forward.1}
  #allocation0 [shape = 'u32[]', space=smem, size = 0x4, offset = 0x4, fixed_abs, tag = 'smem constant byte address 0x4 - core index']
  #allocation1 [shape = 'u32[72,128]{1,0:T(1,128)}', space=vmem, size = 0x9000, scoped, tag = 'internal scratch']
  %s0 = inlined_call_operand.vmem [shape: bf16[4,60,64], index: 0, kind: input, shape index: {}]
  %s1 = inlined_call_operand.vmem [shape: bf16[4,60,64], index: 1, kind: input, shape index: {}]
  %s2 = inlined_call_operand.vmem [shape: bf16[2,64,16], index: 2, kind: input, shape index: {}]
  %s3 = inlined_call_operand.vmem [shape: f32[2,1,16], index: 3, kind: input, shape index: {}]
  %s4 = inlined_call_operand.vmem [shape: f32[2,1,16], index: 4, kind: input, shape index: {}]
  %s5 = inlined_call_operand.vmem [shape: bf16[48,32], index: 5, kind: input, shape index: {}]
  %s6 = inlined_call_operand.vmem [shape: f32[1,32], index: 6, kind: input, shape index: {}]
  %s7 = inlined_call_operand.vmem [shape: f32[1,32], index: 7, kind: input, shape index: {}]
  %s8 = inlined_call_operand.vmem [shape: bf16[96,64], index: 8, kind: input, shape index: {}]
  %s9 = inlined_call_operand.vmem [shape: f32[1,64], index: 9, kind: input, shape index: {}]
  %s10 = inlined_call_operand.vmem [shape: f32[1,64], index: 10, kind: input, shape index: {}]
  %s11 = inlined_call_operand.vmem [shape: bf16[192,128], index: 11, kind: input, shape index: {}]
  %s12 = inlined_call_operand.vmem [shape: f32[1,128], index: 12, kind: input, shape index: {}]
  %s13 = inlined_call_operand.vmem [shape: f32[1,128], index: 13, kind: input, shape index: {}]
  %s14 = inlined_call_operand.vmem [shape: bf16[128,128], index: 14, kind: input, shape index: {}]
  %s15 = inlined_call_operand.vmem [shape: f32[1,128], index: 15, kind: input, shape index: {}]
  %s16 = inlined_call_operand.vmem [shape: bf16[128,128], index: 16, kind: input, shape index: {}]
  %s17 = inlined_call_operand.vmem [shape: f32[1,128], index: 17, kind: input, shape index: {}]
  %s18 = inlined_call_operand.vmem [shape: f32[2,2,1,128], index: 18, kind: output, shape index: {0}]
  %s19 = inlined_call_operand.vmem [shape: f32[2,2,1,128], index: 19, kind: output, shape index: {1}]
  %20 = xla_tuple %s18, %s19
  %s21 = sld [smem:[#allocation0]]
  $region113: #{ticnn_forward.1} parent=0
    _
  %s23 = ssub.s32 1, %s21
  %s24 = scalar_select 0, %s23, %s21
  loop: start=0, step=1, limit=4
  $region2: #{ticnn_forward.1} parent=0 // loop_pre_header
    _
  $region3: #{ticnn_forward.1} parent=0 // loop_header
    %s26 = sphi 0, %s30
    %p27 = scmp.ge.s32.totalorder %s26, 4
    %s36 = sphi 0, %s38
    %s39 = sphi 0, %s36
    %s40 = sphi 0, %s39
    %s56 = sphi 0, %s40
    %s62 = sphi 0, %s64
    %s65 = sphi 0, %s62
    %s66 = sphi 0, %s65
    %s82 = sphi 0, %s66
    %s88 = sphi 0, %s90
    %s91 = sphi 0, %s88
    %s92 = sphi 0, %s91
    %s108 = sphi 0, %s92
    %s114 = sphi 0, %s116
    %s117 = sphi 0, %s114
    %s118 = sphi 0, %s117
    %s134 = sphi 0, %s118
    %s140 = sphi 0, %s142
    %s143 = sphi 0, %s140
    %s144 = sphi 0, %s143
    %s160 = sphi 0, %s144
    %s164 = sphi 0, %s164
    %s166 = sphi 0, %s164
    %s167 = sphi 0, %s166
    %s181 = sphi 0, %s167
    %s185 = sphi 0, %s185
    %s187 = sphi 0, %s185
    %s188 = sphi 0, %s187
    %s202 = sphi 0, %s188
    %s206 = sphi 0, %s206
    %s208 = sphi 0, %s206
    %s209 = sphi 0, %s208
    %s223 = sphi 0, %s209
    %s227 = sphi 0, %s227
    %s229 = sphi 0, %s227
    %s230 = sphi 0, %s229
    %s244 = sphi 0, %s230
    %s248 = sphi 0, %s248
    %s250 = sphi 0, %s248
    %s251 = sphi 0, %s250
    %s265 = sphi 0, %s251
    %s269 = sphi 0, %s269
    %s271 = sphi 0, %s269
    %s272 = sphi 0, %s271
    %s286 = sphi 0, %s272
    %s290 = sphi 0, %s290
    %s292 = sphi 0, %s290
    %s293 = sphi 0, %s292
    %s307 = sphi 0, %s293
    %s311 = sphi 0, %s311
    %s313 = sphi 0, %s311
    %s314 = sphi 0, %s313
    %s328 = sphi 0, %s314
    %s332 = sphi 0, %s332
    %s334 = sphi 0, %s332
    %s335 = sphi 0, %s334
    %s349 = sphi 0, %s335
    %s353 = sphi 0, %s353
    %s355 = sphi 0, %s353
    %s356 = sphi 0, %s355
    %s370 = sphi 0, %s356
    %s374 = sphi 0, %s374
    %s376 = sphi 0, %s374
    %s377 = sphi 0, %s376
    %s391 = sphi 0, %s377
    %s395 = sphi 0, %s395
    %s397 = sphi 0, %s395
    %s398 = sphi 0, %s397
    %s412 = sphi 0, %s398
    %s416 = sphi 0, %s416
    %s418 = sphi 0, %s416
    %s419 = sphi 0, %s418
    %s433 = sphi 0, %s419
    %s439 = sphi 0, %s441
    %s442 = sphi 0, %s439
    %s443 = sphi 0, %s442
    %s459 = sphi 0, %s443
    %s465 = sphi 0, %s467
    %s468 = sphi 0, %s465
    %s469 = sphi 0, %s468
    %s485 = sphi 0, %s469
  $region4: #{ticnn_forward.1} parent=0 // loop_header_branch
    %29 = sbr.rel (%p27) target = $region8
  $region5: #{ticnn_forward.1} parent=0 // loop_body
    %s31 = ssub.s32 %s26, 1
    %s32 = ssub.s32 %s26, 2
    %s33 = sadd.s32 %s26, 1
    %s34 = ssub.s32 %s26, %s33
    %p35 = scmp.eq.s32.totalorder %s34, 0
    %s37 = sadd.s32 %s36, 1
    %s38 = scalar_select %p35, %s36, %s37
    %p41 = pneg %p35
    %p42 = scmp.eq.s32.totalorder %s26, 1
    %p43 = por %p41, %p42
    %p44 = scmp.ne.s32.totalorder %s36, %s39
    %p45 = scmp.eq.s32.totalorder %s26, 0
    %p46 = por %p44, %p45
    %p47 = scmp.ne.s32.totalorder %s36, %s39
    %p48 = scmp.eq.s32.totalorder %s31, 1
    %p49 = por %p47, %p48
    %p50 = scmp.ne.s32.totalorder %s39, %s40
    %p51 = scmp.eq.s32.totalorder %s31, 0
    %p52 = por %p50, %p51
    %p53 = scmp.ne.s32.totalorder %s39, %s40
    %p54 = scmp.eq.s32.totalorder %s32, 1
    %p55 = por %p53, %p54
    %p57 = scmp.ne.s32.totalorder %s40, %s56
    %p58 = scmp.eq.s32.totalorder %s32, 0
    %p59 = por %p57, %p58
    %s60 = ssub.s32 %s26, %s33
    %p61 = scmp.eq.s32.totalorder %s60, 0
    %s63 = sadd.s32 %s62, 1
    %s64 = scalar_select %p61, %s62, %s63
    %p67 = pneg %p61
    %p68 = scmp.eq.s32.totalorder %s26, 1
    %p69 = por %p67, %p68
    %p70 = scmp.ne.s32.totalorder %s62, %s65
    %p71 = scmp.eq.s32.totalorder %s26, 0
    %p72 = por %p70, %p71
    %p73 = scmp.ne.s32.totalorder %s62, %s65
    %p74 = scmp.eq.s32.totalorder %s31, 1
    %p75 = por %p73, %p74
    %p76 = scmp.ne.s32.totalorder %s65, %s66
    %p77 = scmp.eq.s32.totalorder %s31, 0
    %p78 = por %p76, %p77
    %p79 = scmp.ne.s32.totalorder %s65, %s66
    %p80 = scmp.eq.s32.totalorder %s32, 1
    %p81 = por %p79, %p80
    %p83 = scmp.ne.s32.totalorder %s66, %s82
    %p84 = scmp.eq.s32.totalorder %s32, 0
    %p85 = por %p83, %p84
    %s86 = ssub.s32 %s26, %s33
    %p87 = scmp.eq.s32.totalorder %s86, 0
    %s89 = sadd.s32 %s88, 1
    %s90 = scalar_select %p87, %s88, %s89
    %p93 = pneg %p87
    %p94 = scmp.eq.s32.totalorder %s26, 1
    %p95 = por %p93, %p94
    %p96 = scmp.ne.s32.totalorder %s88, %s91
    %p97 = scmp.eq.s32.totalorder %s26, 0
    %p98 = por %p96, %p97
    %p99 = scmp.ne.s32.totalorder %s88, %s91
    %p100 = scmp.eq.s32.totalorder %s31, 1
    %p101 = por %p99, %p100
    %p102 = scmp.ne.s32.totalorder %s91, %s92
    %p103 = scmp.eq.s32.totalorder %s31, 0
    %p104 = por %p102, %p103
    %p105 = scmp.ne.s32.totalorder %s91, %s92
    %p106 = scmp.eq.s32.totalorder %s32, 1
    %p107 = por %p105, %p106
    %p109 = scmp.ne.s32.totalorder %s92, %s108
    %p110 = scmp.eq.s32.totalorder %s32, 0
    %p111 = por %p109, %p110
    %s112 = ssub.s32 %s26, %s33
    %p113 = scmp.eq.s32.totalorder %s112, 0
    %s115 = sadd.s32 %s114, 1
    %s116 = scalar_select %p113, %s114, %s115
    %p119 = pneg %p113
    %p120 = scmp.eq.s32.totalorder %s26, 1
    %p121 = por %p119, %p120
    %p122 = scmp.ne.s32.totalorder %s114, %s117
    %p123 = scmp.eq.s32.totalorder %s26, 0
    %p124 = por %p122, %p123
    %p125 = scmp.ne.s32.totalorder %s114, %s117
    %p126 = scmp.eq.s32.totalorder %s31, 1
    %p127 = por %p125, %p126
    %p128 = scmp.ne.s32.totalorder %s117, %s118
    %p129 = scmp.eq.s32.totalorder %s31, 0
    %p130 = por %p128, %p129
    %p131 = scmp.ne.s32.totalorder %s117, %s118
    %p132 = scmp.eq.s32.totalorder %s32, 1
    %p133 = por %p131, %p132
    %p135 = scmp.ne.s32.totalorder %s118, %s134
    %p136 = scmp.eq.s32.totalorder %s32, 0
    %p137 = por %p135, %p136
    %s138 = ssub.s32 %s26, %s33
    %p139 = scmp.eq.s32.totalorder %s138, 0
    %s141 = sadd.s32 %s140, 1
    %s142 = scalar_select %p139, %s140, %s141
    %p145 = pneg %p139
    %p146 = scmp.eq.s32.totalorder %s26, 1
    %p147 = por %p145, %p146
    %p148 = scmp.ne.s32.totalorder %s140, %s143
    %p149 = scmp.eq.s32.totalorder %s26, 0
    %p150 = por %p148, %p149
    %p151 = scmp.ne.s32.totalorder %s140, %s143
    %p152 = scmp.eq.s32.totalorder %s31, 1
    %p153 = por %p151, %p152
    %p154 = scmp.ne.s32.totalorder %s143, %s144
    %p155 = scmp.eq.s32.totalorder %s31, 0
    %p156 = por %p154, %p155
    %p157 = scmp.ne.s32.totalorder %s143, %s144
    %p158 = scmp.eq.s32.totalorder %s32, 1
    %p159 = por %p157, %p158
    %p161 = scmp.ne.s32.totalorder %s144, %s160
    %p162 = scmp.eq.s32.totalorder %s32, 0
    %p163 = por %p161, %p162
    %s165 = sadd.s32 %s164, 1
    %p168 = scmp.eq.s32.totalorder %s26, 1
    %p169 = scmp.ne.s32.totalorder %s164, %s166
    %p170 = scmp.eq.s32.totalorder %s26, 0
    %p171 = por %p169, %p170
    %p172 = scmp.ne.s32.totalorder %s164, %s166
    %p173 = scmp.eq.s32.totalorder %s31, 1
    %p174 = por %p172, %p173
    %p175 = scmp.ne.s32.totalorder %s166, %s167
    %p176 = scmp.eq.s32.totalorder %s31, 0
    %p177 = por %p175, %p176
    %p178 = scmp.ne.s32.totalorder %s166, %s167
    %p179 = scmp.eq.s32.totalorder %s32, 1
    %p180 = por %p178, %p179
    %p182 = scmp.ne.s32.totalorder %s167, %s181
    %p183 = scmp.eq.s32.totalorder %s32, 0
    %p184 = por %p182, %p183
    %s186 = sadd.s32 %s185, 1
    %p189 = scmp.eq.s32.totalorder %s26, 1
    %p190 = scmp.ne.s32.totalorder %s185, %s187
    %p191 = scmp.eq.s32.totalorder %s26, 0
    %p192 = por %p190, %p191
    %p193 = scmp.ne.s32.totalorder %s185, %s187
    %p194 = scmp.eq.s32.totalorder %s31, 1
    %p195 = por %p193, %p194
    %p196 = scmp.ne.s32.totalorder %s187, %s188
    %p197 = scmp.eq.s32.totalorder %s31, 0
    %p198 = por %p196, %p197
    %p199 = scmp.ne.s32.totalorder %s187, %s188
    %p200 = scmp.eq.s32.totalorder %s32, 1
    %p201 = por %p199, %p200
    %p203 = scmp.ne.s32.totalorder %s188, %s202
    %p204 = scmp.eq.s32.totalorder %s32, 0
    %p205 = por %p203, %p204
    %s207 = sadd.s32 %s206, 1
    %p210 = scmp.eq.s32.totalorder %s26, 1
    %p211 = scmp.ne.s32.totalorder %s206, %s208
    %p212 = scmp.eq.s32.totalorder %s26, 0
    %p213 = por %p211, %p212
    %p214 = scmp.ne.s32.totalorder %s206, %s208
    %p215 = scmp.eq.s32.totalorder %s31, 1
    %p216 = por %p214, %p215
    %p217 = scmp.ne.s32.totalorder %s208, %s209
    %p218 = scmp.eq.s32.totalorder %s31, 0
    %p219 = por %p217, %p218
    %p220 = scmp.ne.s32.totalorder %s208, %s209
    %p221 = scmp.eq.s32.totalorder %s32, 1
    %p222 = por %p220, %p221
    %p224 = scmp.ne.s32.totalorder %s209, %s223
    %p225 = scmp.eq.s32.totalorder %s32, 0
    %p226 = por %p224, %p225
    %s228 = sadd.s32 %s227, 1
    %p231 = scmp.eq.s32.totalorder %s26, 1
    %p232 = scmp.ne.s32.totalorder %s227, %s229
    %p233 = scmp.eq.s32.totalorder %s26, 0
    %p234 = por %p232, %p233
    %p235 = scmp.ne.s32.totalorder %s227, %s229
    %p236 = scmp.eq.s32.totalorder %s31, 1
    %p237 = por %p235, %p236
    %p238 = scmp.ne.s32.totalorder %s229, %s230
    %p239 = scmp.eq.s32.totalorder %s31, 0
    %p240 = por %p238, %p239
    %p241 = scmp.ne.s32.totalorder %s229, %s230
    %p242 = scmp.eq.s32.totalorder %s32, 1
    %p243 = por %p241, %p242
    %p245 = scmp.ne.s32.totalorder %s230, %s244
    %p246 = scmp.eq.s32.totalorder %s32, 0
    %p247 = por %p245, %p246
    %s249 = sadd.s32 %s248, 1
    %p252 = scmp.eq.s32.totalorder %s26, 1
    %p253 = scmp.ne.s32.totalorder %s248, %s250
    %p254 = scmp.eq.s32.totalorder %s26, 0
    %p255 = por %p253, %p254
    %p256 = scmp.ne.s32.totalorder %s248, %s250
    %p257 = scmp.eq.s32.totalorder %s31, 1
    %p258 = por %p256, %p257
    %p259 = scmp.ne.s32.totalorder %s250, %s251
    %p260 = scmp.eq.s32.totalorder %s31, 0
    %p261 = por %p259, %p260
    %p262 = scmp.ne.s32.totalorder %s250, %s251
    %p263 = scmp.eq.s32.totalorder %s32, 1
    %p264 = por %p262, %p263
    %p266 = scmp.ne.s32.totalorder %s251, %s265
    %p267 = scmp.eq.s32.totalorder %s32, 0
    %p268 = por %p266, %p267
    %s270 = sadd.s32 %s269, 1
    %p273 = scmp.eq.s32.totalorder %s26, 1
    %p274 = scmp.ne.s32.totalorder %s269, %s271
    %p275 = scmp.eq.s32.totalorder %s26, 0
    %p276 = por %p274, %p275
    %p277 = scmp.ne.s32.totalorder %s269, %s271
    %p278 = scmp.eq.s32.totalorder %s31, 1
    %p279 = por %p277, %p278
    %p280 = scmp.ne.s32.totalorder %s271, %s272
    %p281 = scmp.eq.s32.totalorder %s31, 0
    %p282 = por %p280, %p281
    %p283 = scmp.ne.s32.totalorder %s271, %s272
    %p284 = scmp.eq.s32.totalorder %s32, 1
    %p285 = por %p283, %p284
    %p287 = scmp.ne.s32.totalorder %s272, %s286
    %p288 = scmp.eq.s32.totalorder %s32, 0
    %p289 = por %p287, %p288
    %s291 = sadd.s32 %s290, 1
    %p294 = scmp.eq.s32.totalorder %s26, 1
    %p295 = scmp.ne.s32.totalorder %s290, %s292
    %p296 = scmp.eq.s32.totalorder %s26, 0
    %p297 = por %p295, %p296
    %p298 = scmp.ne.s32.totalorder %s290, %s292
    %p299 = scmp.eq.s32.totalorder %s31, 1
    %p300 = por %p298, %p299
    %p301 = scmp.ne.s32.totalorder %s292, %s293
    %p302 = scmp.eq.s32.totalorder %s31, 0
    %p303 = por %p301, %p302
    %p304 = scmp.ne.s32.totalorder %s292, %s293
    %p305 = scmp.eq.s32.totalorder %s32, 1
    %p306 = por %p304, %p305
    %p308 = scmp.ne.s32.totalorder %s293, %s307
    %p309 = scmp.eq.s32.totalorder %s32, 0
    %p310 = por %p308, %p309
    %s312 = sadd.s32 %s311, 1
    %p315 = scmp.eq.s32.totalorder %s26, 1
    %p316 = scmp.ne.s32.totalorder %s311, %s313
    %p317 = scmp.eq.s32.totalorder %s26, 0
    %p318 = por %p316, %p317
    %p319 = scmp.ne.s32.totalorder %s311, %s313
    %p320 = scmp.eq.s32.totalorder %s31, 1
    %p321 = por %p319, %p320
    %p322 = scmp.ne.s32.totalorder %s313, %s314
    %p323 = scmp.eq.s32.totalorder %s31, 0
    %p324 = por %p322, %p323
    %p325 = scmp.ne.s32.totalorder %s313, %s314
    %p326 = scmp.eq.s32.totalorder %s32, 1
    %p327 = por %p325, %p326
    %p329 = scmp.ne.s32.totalorder %s314, %s328
    %p330 = scmp.eq.s32.totalorder %s32, 0
    %p331 = por %p329, %p330
    %s333 = sadd.s32 %s332, 1
    %p336 = scmp.eq.s32.totalorder %s26, 1
    %p337 = scmp.ne.s32.totalorder %s332, %s334
    %p338 = scmp.eq.s32.totalorder %s26, 0
    %p339 = por %p337, %p338
    %p340 = scmp.ne.s32.totalorder %s332, %s334
    %p341 = scmp.eq.s32.totalorder %s31, 1
    %p342 = por %p340, %p341
    %p343 = scmp.ne.s32.totalorder %s334, %s335
    %p344 = scmp.eq.s32.totalorder %s31, 0
    %p345 = por %p343, %p344
    %p346 = scmp.ne.s32.totalorder %s334, %s335
    %p347 = scmp.eq.s32.totalorder %s32, 1
    %p348 = por %p346, %p347
    %p350 = scmp.ne.s32.totalorder %s335, %s349
    %p351 = scmp.eq.s32.totalorder %s32, 0
    %p352 = por %p350, %p351
    %s354 = sadd.s32 %s353, 1
    %p357 = scmp.eq.s32.totalorder %s26, 1
    %p358 = scmp.ne.s32.totalorder %s353, %s355
    %p359 = scmp.eq.s32.totalorder %s26, 0
    %p360 = por %p358, %p359
    %p361 = scmp.ne.s32.totalorder %s353, %s355
    %p362 = scmp.eq.s32.totalorder %s31, 1
    %p363 = por %p361, %p362
    %p364 = scmp.ne.s32.totalorder %s355, %s356
    %p365 = scmp.eq.s32.totalorder %s31, 0
    %p366 = por %p364, %p365
    %p367 = scmp.ne.s32.totalorder %s355, %s356
    %p368 = scmp.eq.s32.totalorder %s32, 1
    %p369 = por %p367, %p368
    %p371 = scmp.ne.s32.totalorder %s356, %s370
    %p372 = scmp.eq.s32.totalorder %s32, 0
    %p373 = por %p371, %p372
    %s375 = sadd.s32 %s374, 1
    %p378 = scmp.eq.s32.totalorder %s26, 1
    %p379 = scmp.ne.s32.totalorder %s374, %s376
    %p380 = scmp.eq.s32.totalorder %s26, 0
    %p381 = por %p379, %p380
    %p382 = scmp.ne.s32.totalorder %s374, %s376
    %p383 = scmp.eq.s32.totalorder %s31, 1
    %p384 = por %p382, %p383
    %p385 = scmp.ne.s32.totalorder %s376, %s377
    %p386 = scmp.eq.s32.totalorder %s31, 0
    %p387 = por %p385, %p386
    %p388 = scmp.ne.s32.totalorder %s376, %s377
    %p389 = scmp.eq.s32.totalorder %s32, 1
    %p390 = por %p388, %p389
    %p392 = scmp.ne.s32.totalorder %s377, %s391
    %p393 = scmp.eq.s32.totalorder %s32, 0
    %p394 = por %p392, %p393
    %s396 = sadd.s32 %s395, 1
    %p399 = scmp.eq.s32.totalorder %s26, 1
    %p400 = scmp.ne.s32.totalorder %s395, %s397
    %p401 = scmp.eq.s32.totalorder %s26, 0
    %p402 = por %p400, %p401
    %p403 = scmp.ne.s32.totalorder %s395, %s397
    %p404 = scmp.eq.s32.totalorder %s31, 1
    %p405 = por %p403, %p404
    %p406 = scmp.ne.s32.totalorder %s397, %s398
    %p407 = scmp.eq.s32.totalorder %s31, 0
    %p408 = por %p406, %p407
    %p409 = scmp.ne.s32.totalorder %s397, %s398
    %p410 = scmp.eq.s32.totalorder %s32, 1
    %p411 = por %p409, %p410
    %p413 = scmp.ne.s32.totalorder %s398, %s412
    %p414 = scmp.eq.s32.totalorder %s32, 0
    %p415 = por %p413, %p414
    %s417 = sadd.s32 %s416, 1
    %p420 = scmp.eq.s32.totalorder %s26, 1
    %p421 = scmp.ne.s32.totalorder %s416, %s418
    %p422 = scmp.eq.s32.totalorder %s26, 0
    %p423 = por %p421, %p422
    %p424 = scmp.ne.s32.totalorder %s416, %s418
    %p425 = scmp.eq.s32.totalorder %s31, 1
    %p426 = por %p424, %p425
    %p427 = scmp.ne.s32.totalorder %s418, %s419
    %p428 = scmp.eq.s32.totalorder %s31, 0
    %p429 = por %p427, %p428
    %p430 = scmp.ne.s32.totalorder %s418, %s419
    %p431 = scmp.eq.s32.totalorder %s32, 1
    %p432 = por %p430, %p431
    %p434 = scmp.ne.s32.totalorder %s419, %s433
    %p435 = scmp.eq.s32.totalorder %s32, 0
    %p436 = por %p434, %p435
    %s437 = ssub.s32 %s26, %s33
    %p438 = scmp.eq.s32.totalorder %s437, 0
    %s440 = sadd.s32 %s439, 1
    %s441 = scalar_select %p438, %s439, %s440
    %p444 = pneg %p438
    %p445 = scmp.eq.s32.totalorder %s26, 1
    %p446 = por %p444, %p445
    %p447 = scmp.ne.s32.totalorder %s439, %s442
    %p448 = scmp.eq.s32.totalorder %s26, 0
    %p449 = por %p447, %p448
    %p450 = scmp.ne.s32.totalorder %s439, %s442
    %p451 = scmp.eq.s32.totalorder %s31, 1
    %p452 = por %p450, %p451
    %p453 = scmp.ne.s32.totalorder %s442, %s443
    %p454 = scmp.eq.s32.totalorder %s31, 0
    %p455 = por %p453, %p454
    %p456 = scmp.ne.s32.totalorder %s442, %s443
    %p457 = scmp.eq.s32.totalorder %s32, 1
    %p458 = por %p456, %p457
    %p460 = scmp.ne.s32.totalorder %s443, %s459
    %p461 = scmp.eq.s32.totalorder %s32, 0
    %p462 = por %p460, %p461
    %s463 = ssub.s32 %s26, %s33
    %p464 = scmp.eq.s32.totalorder %s463, 0
    %s466 = sadd.s32 %s465, 1
    %s467 = scalar_select %p464, %s465, %s466
    %p470 = pneg %p464
    %p471 = scmp.eq.s32.totalorder %s26, 1
    %p472 = por %p470, %p471
    %p473 = scmp.ne.s32.totalorder %s465, %s468
    %p474 = scmp.eq.s32.totalorder %s26, 0
    %p475 = por %p473, %p474
    %p476 = scmp.ne.s32.totalorder %s465, %s468
    %p477 = scmp.eq.s32.totalorder %s31, 1
    %p478 = por %p476, %p477
    %p479 = scmp.ne.s32.totalorder %s468, %s469
    %p480 = scmp.eq.s32.totalorder %s31, 0
    %p481 = por %p479, %p480
    %p482 = scmp.ne.s32.totalorder %s468, %s469
    %p483 = scmp.eq.s32.totalorder %s32, 1
    %p484 = por %p482, %p483
    %p486 = scmp.ne.s32.totalorder %s469, %s485
    %p487 = scmp.eq.s32.totalorder %s32, 0
    %p488 = por %p486, %p487
    %p489 = scmp.le.s32.totalorder 1, %s26
    %p490 = scmp.lt.s32.totalorder %s26, 3
    %p491 = pnand %p489, %p490
    %p492 = pneg %p491
    // Predicated region
    $region9: #{ticnn_forward.1} parent=5 // pred_check
      _
    $region10: #{ticnn_forward.1} parent=5 // pred_check_branch
      %494 = sbr.rel (%p491) target = $region12
    $region11: #{ticnn_forward.1} parent=5 // pred_region
      %s495 = ssub.s32 %s26, 1
      // Predicated region
      $region13: #{ticnn_forward.1} parent=11 // pred_check
        %p496 = pneg %p177
      $region14: #{ticnn_forward.1} parent=11 // pred_check_branch
        %498 = sbr.rel (%p496) target = $region16
      $region15: #{ticnn_forward.1} parent=11 // pred_region
        _
      $region16: #{ticnn_forward.1} parent=11 // pred_fallthru
        _
      // Predicated region
      $region17: #{ticnn_forward.1} parent=11 // pred_check
        %p499 = pneg %p198
      $region18: #{ticnn_forward.1} parent=11 // pred_check_branch
        %501 = sbr.rel (%p499) target = $region20
      $region19: #{ticnn_forward.1} parent=11 // pred_region
        _
      $region20: #{ticnn_forward.1} parent=11 // pred_fallthru
        _
      // Predicated region
      $region21: #{ticnn_forward.1} parent=11 // pred_check
        %p502 = pneg %p219
      $region22: #{ticnn_forward.1} parent=11 // pred_check_branch
        %504 = sbr.rel (%p502) target = $region24
      $region23: #{ticnn_forward.1} parent=11 // pred_region
        _
      $region24: #{ticnn_forward.1} parent=11 // pred_fallthru
        _
      // Predicated region
      $region25: #{ticnn_forward.1} parent=11 // pred_check
        %p505 = pneg %p240
      $region26: #{ticnn_forward.1} parent=11 // pred_check_branch
        %507 = sbr.rel (%p505) target = $region28
      $region27: #{ticnn_forward.1} parent=11 // pred_region
        _
      $region28: #{ticnn_forward.1} parent=11 // pred_fallthru
        _
      // Predicated region
      $region29: #{ticnn_forward.1} parent=11 // pred_check
        %p508 = pneg %p261
      $region30: #{ticnn_forward.1} parent=11 // pred_check_branch
        %510 = sbr.rel (%p508) target = $region32
      $region31: #{ticnn_forward.1} parent=11 // pred_region
        _
      $region32: #{ticnn_forward.1} parent=11 // pred_fallthru
        _
      // Predicated region
      $region33: #{ticnn_forward.1} parent=11 // pred_check
        %p511 = pneg %p282
      $region34: #{ticnn_forward.1} parent=11 // pred_check_branch
        %513 = sbr.rel (%p511) target = $region36
      $region35: #{ticnn_forward.1} parent=11 // pred_region
        _
      $region36: #{ticnn_forward.1} parent=11 // pred_fallthru
        _
      // Predicated region
      $region37: #{ticnn_forward.1} parent=11 // pred_check
        %p514 = pneg %p303
      $region38: #{ticnn_forward.1} parent=11 // pred_check_branch
        %516 = sbr.rel (%p514) target = $region40
      $region39: #{ticnn_forward.1} parent=11 // pred_region
        _
      $region40: #{ticnn_forward.1} parent=11 // pred_fallthru
        _
      // Predicated region
      $region41: #{ticnn_forward.1} parent=11 // pred_check
        %p517 = pneg %p324
      $region42: #{ticnn_forward.1} parent=11 // pred_check_branch
        %519 = sbr.rel (%p517) target = $region44
      $region43: #{ticnn_forward.1} parent=11 // pred_region
        _
      $region44: #{ticnn_forward.1} parent=11 // pred_fallthru
        _
      // Predicated region
      $region45: #{ticnn_forward.1} parent=11 // pred_check
        %p520 = pneg %p345
      $region46: #{ticnn_forward.1} parent=11 // pred_check_branch
        %522 = sbr.rel (%p520) target = $region48
      $region47: #{ticnn_forward.1} parent=11 // pred_region
        _
      $region48: #{ticnn_forward.1} parent=11 // pred_fallthru
        _
      // Predicated region
      $region49: #{ticnn_forward.1} parent=11 // pred_check
        %p523 = pneg %p366
      $region50: #{ticnn_forward.1} parent=11 // pred_check_branch
        %525 = sbr.rel (%p523) target = $region52
      $region51: #{ticnn_forward.1} parent=11 // pred_region
        _
      $region52: #{ticnn_forward.1} parent=11 // pred_fallthru
        _
      // Predicated region
      $region53: #{ticnn_forward.1} parent=11 // pred_check
        %p526 = pneg %p387
      $region54: #{ticnn_forward.1} parent=11 // pred_check_branch
        %528 = sbr.rel (%p526) target = $region56
      $region55: #{ticnn_forward.1} parent=11 // pred_region
        _
      $region56: #{ticnn_forward.1} parent=11 // pred_fallthru
        _
      // Predicated region
      $region57: #{ticnn_forward.1} parent=11 // pred_check
        %p529 = pneg %p408
      $region58: #{ticnn_forward.1} parent=11 // pred_check_branch
        %531 = sbr.rel (%p529) target = $region60
      $region59: #{ticnn_forward.1} parent=11 // pred_region
        _
      $region60: #{ticnn_forward.1} parent=11 // pred_fallthru
        _
      // Predicated region
      $region61: #{ticnn_forward.1} parent=11 // pred_check
        %p532 = pneg %p429
      $region62: #{ticnn_forward.1} parent=11 // pred_check_branch
        %534 = sbr.rel (%p532) target = $region64
      $region63: #{ticnn_forward.1} parent=11 // pred_region
        _
      $region64: #{ticnn_forward.1} parent=11 // pred_fallthru
        _
    $region12: #{ticnn_forward.1} parent=5 // pred_fallthru
      _
    %p535 = scmp.lt.s32.totalorder %s26, 2
    // Predicated region
    $region65: #{ticnn_forward.1} parent=5 // pred_check
      %p536 = pneg %p535
    $region66: #{ticnn_forward.1} parent=5 // pred_check_branch
      %538 = sbr.rel (%p536) target = $region68
    $region67: #{ticnn_forward.1} parent=5 // pred_region
      // Predicated region
      $region69: #{ticnn_forward.1} parent=67 // pred_check
        %p539 = pneg %p46
      $region70: #{ticnn_forward.1} parent=67 // pred_check_branch
        %541 = sbr.rel (%p539) target = $region72
      $region71: #{ticnn_forward.1} parent=67 // pred_region
        %s542 = smul.u32 2, %s26
        %p543 = scmp.lt.s32.totalorder %s542, 3
        %s544 = scalar_select %p543, %s542, 3
        %s545 = smul.addr %s544, 8
        %s546 = smul.addr %s545, 4
        %s547 = scalar_lea.vmem %s0, %s546
        %s548 = smul.u32 2, %s26
      $region72: #{ticnn_forward.1} parent=67 // pred_fallthru
        _
      // Predicated region
      $region73: #{ticnn_forward.1} parent=67 // pred_check
        %p549 = pneg %p72
      $region74: #{ticnn_forward.1} parent=67 // pred_check_branch
        %551 = sbr.rel (%p549) target = $region76
      $region75: #{ticnn_forward.1} parent=67 // pred_region
        %s552 = smul.u32 2, %s26
        %p553 = scmp.lt.s32.totalorder %s552, 3
        %s554 = scalar_select %p553, %s552, 3
        %s555 = smul.addr %s554, 8
        %s556 = smul.addr %s555, 4
        %s557 = scalar_lea.vmem %s1, %s556
        %s558 = smul.u32 2, %s26
      $region76: #{ticnn_forward.1} parent=67 // pred_fallthru
        _
      // Predicated region
      $region77: #{ticnn_forward.1} parent=67 // pred_check
        %p559 = pneg %p98
      $region78: #{ticnn_forward.1} parent=67 // pred_check_branch
        %561 = sbr.rel (%p559) target = $region80
      $region79: #{ticnn_forward.1} parent=67 // pred_region
        %p562 = scmp.lt.s32.totalorder %s26, 1
        %s563 = scalar_select %p562, %s26, 1
        %s564 = smul.addr %s563, 8
        %s565 = smul.addr %s564, 4
        %s566 = scalar_lea.vmem %s2, %s565
      $region80: #{ticnn_forward.1} parent=67 // pred_fallthru
        _
      // Predicated region
      $region81: #{ticnn_forward.1} parent=67 // pred_check
        %p567 = pneg %p124
      $region82: #{ticnn_forward.1} parent=67 // pred_check_branch
        %569 = sbr.rel (%p567) target = $region84
      $region83: #{ticnn_forward.1} parent=67 // pred_region
        %p570 = scmp.lt.s32.totalorder %s26, 1
        %s571 = scalar_select %p570, %s26, 1
        %s572 = scalar_lea.vmem %s3, %s571
      $region84: #{ticnn_forward.1} parent=67 // pred_fallthru
        _
      // Predicated region
      $region85: #{ticnn_forward.1} parent=67 // pred_check
        %p573 = pneg %p150
      $region86: #{ticnn_forward.1} parent=67 // pred_check_branch
        %575 = sbr.rel (%p573) target = $region88
      $region87: #{ticnn_forward.1} parent=67 // pred_region
        %p576 = scmp.lt.s32.totalorder %s26, 1
        %s577 = scalar_select %p576, %s26, 1
        %s578 = scalar_lea.vmem %s4, %s577
      $region88: #{ticnn_forward.1} parent=67 // pred_fallthru
        _
    $region68: #{ticnn_forward.1} parent=5 // pred_fallthru
      _
    %p579 = scmp.le.s32.totalorder 1, %s26
    %p580 = scmp.lt.s32.totalorder %s26, 3
    %p581 = pnand %p579, %p580
    %p582 = pneg %p581
    // Predicated region
    $region89: #{ticnn_forward.1} parent=5 // pred_check
      _
    $region90: #{ticnn_forward.1} parent=5 // pred_check_branch
      %584 = sbr.rel (%p581) target = $region92
    $region91: #{ticnn_forward.1} parent=5 // pred_region
      %s585 = ssub.s32 %s26, 1
      %s586 = smul.u32 2, %s31
      %p587 = scmp.lt.s32.totalorder %s586, 3
      %s588 = scalar_select %p587, %s586, 3
      %s589 = smul.addr %s588, 8
      %s590 = smul.addr %s589, 4
      %s591 = scalar_lea.vmem %s0, %s590
      %p592 = pneg %p52
      %p593 = pneg %p49
      %s594 = smul.u32 2, %s31
      %p595 = scmp.lt.s32.totalorder %s594, 3
      %s596 = scalar_select %p595, %s594, 3
      %s597 = smul.addr %s596, 8
      %s598 = smul.addr %s597, 4
      %s599 = scalar_lea.vmem %s1, %s598
      %p600 = pneg %p78
      %p601 = pneg %p75
      %p602 = scmp.lt.s32.totalorder %s31, 1
      %s603 = scalar_select %p602, %s31, 1
      %s604 = smul.addr %s603, 8
      %s605 = smul.addr %s604, 4
      %s606 = scalar_lea.vmem %s2, %s605
      %p607 = pneg %p104
      %p608 = pneg %p101
      %p609 = scmp.lt.s32.totalorder %s31, 1
      %s610 = scalar_select %p609, %s31, 1
      %s611 = scalar_lea.vmem %s3, %s610
      %p612 = pneg %p130
      %p613 = pneg %p127
      %p614 = scmp.lt.s32.totalorder %s31, 1
      %s615 = scalar_select %p614, %s31, 1
      %s616 = scalar_lea.vmem %s4, %s615
      %p617 = pneg %p156
      %p618 = pneg %p153
      %p619 = pneg %p177
      %p620 = pneg %p174
      %p621 = pneg %p198
      %p622 = pneg %p195
      %p623 = pneg %p219
      %p624 = pneg %p216
      %p625 = pneg %p240
      %p626 = pneg %p237
      %p627 = pneg %p261
      %p628 = pneg %p258
      %p629 = pneg %p282
      %p630 = pneg %p279
      %p631 = pneg %p303
      %p632 = pneg %p300
      %p633 = pneg %p324
      %p634 = pneg %p321
      %p635 = pneg %p345
      %p636 = pneg %p342
      %p637 = pneg %p366
      %p638 = pneg %p363
      %p639 = pneg %p387
      %p640 = pneg %p384
      %p641 = pneg %p408
      %p642 = pneg %p405
      %p643 = pneg %p429
      %p644 = pneg %p426
      %p645 = pneg %p455
      %p646 = pneg %p452
      %p647 = scmp.lt.s32.totalorder %s31, 1
      %s648 = scalar_select %p647, %s31, 1
      %s649 = smul.addr %s648, 2
      %s650 = scalar_lea.vmem %s18, %s649
      %p651 = pneg %p481
      %p652 = pneg %p478
      %p653 = scmp.lt.s32.totalorder %s31, 1
      %s654 = scalar_select %p653, %s31, 1
      %s655 = smul.addr %s654, 2
      %s656 = scalar_lea.vmem %s19, %s655
      %s657 = smul.u32 2, %s31
      %p658 = scmp.lt.s32.totalorder %s657, 3
      %s659 = scalar_select %p658, %s657, 3
      %s660 = smul.addr %s659, 8
      %s661 = smul.addr %s660, 4
      %s662 = scalar_lea.vmem %s0, %s661
      %s663 = smul.u32 2, %s31
      %s664 = smul.u32 2, %s31
      %p665 = scmp.lt.s32.totalorder %s664, 3
      %s666 = scalar_select %p665, %s664, 3
      %s667 = smul.addr %s666, 8
      %s668 = smul.addr %s667, 4
      %s669 = scalar_lea.vmem %s1, %s668
      %s670 = smul.u32 2, %s31
      %p671 = scmp.lt.s32.totalorder %s31, 1
      %s672 = scalar_select %p671, %s31, 1
      %s673 = smul.addr %s672, 8
      %s674 = smul.addr %s673, 4
      %s675 = scalar_lea.vmem %s2, %s674
      %p676 = scmp.lt.s32.totalorder %s31, 1
      %s677 = scalar_select %p676, %s31, 1
      %s678 = scalar_lea.vmem %s3, %s677
      %p679 = scmp.lt.s32.totalorder %s31, 1
      %s680 = scalar_select %p679, %s31, 1
      %s681 = scalar_lea.vmem %s4, %s680
      %p682 = scmp.lt.s32.totalorder %s31, 1
      %s683 = scalar_select %p682, %s31, 1
      %s684 = smul.addr %s683, 2
      %s685 = scalar_lea.vmem %s18, %s684
      %p686 = scmp.lt.s32.totalorder %s31, 1
      %s687 = scalar_select %p686, %s31, 1
      %s688 = smul.addr %s687, 2
      %s689 = scalar_lea.vmem %s19, %s688
      %v691 = vld [vmem:[%s675] sm:$0xf]
      %v692 = vld [vmem:[%s675 + $0x4] sm:$0xf]
      %v693 = vld [vmem:[%s675 + $0x8] sm:$0xf]
      %v694 = vld [vmem:[%s675 + $0xc] sm:$0xf]
      %v695 = vld [vmem:[%s675 + $0x10] sm:$0xf]
      %v696 = vld [vmem:[%s675 + $0x14] sm:$0xf]
      %v697 = vld [vmem:[%s675 + $0x18] sm:$0xf]
      %v698 = vld [vmem:[%s675 + $0x1c] sm:$0xf]
      %v699 = vld [vmem:[%s678] sm:$0x1]
      %v700 = vld [vmem:[%s681] sm:$0x1]
      %v701 = vld [vmem:[%s662] sm:$0xf]
      %v702 = vld [vmem:[%s662 + $0x4] sm:$0xf]
      %v703 = vld [vmem:[%s662 + $0x8] sm:$0xf]
      %v704 = vld [vmem:[%s662 + $0xc] sm:$0xf]
      %v705 = vld [vmem:[%s662 + $0x10] sm:$0xf]
      %v706 = vld [vmem:[%s662 + $0x14] sm:$0xf]
      %v707 = vld [vmem:[%s662 + $0x18] sm:$0xf]
      %v708 = vld [vmem:[%s662 + $0x1c] sm:$0x3]
      %v709 = vld [vmem:[%s662 + $0x20] sm:$0xf]
      %v710 = vld [vmem:[%s662 + $0x24] sm:$0xf]
      %v711 = vld [vmem:[%s662 + $0x28] sm:$0xf]
      %v712 = vld [vmem:[%s662 + $0x2c] sm:$0xf]
      %v713 = vld [vmem:[%s662 + $0x30] sm:$0xf]
      %v714 = vld [vmem:[%s662 + $0x34] sm:$0xf]
      %v715 = vld [vmem:[%s662 + $0x38] sm:$0xf]
      %v716 = vld [vmem:[%s662 + $0x3c] sm:$0x3]
      %v725 = vunpack.c.l.b16 %v701
      %v726 = vunpack.c.l.b16 %v702
      %v727 = vunpack.c.l.b16 %v703
      %v728 = vunpack.c.l.b16 %v704
      %v729 = vunpack.c.l.b16 %v705
      %v730 = vunpack.c.l.b16 %v706
      %v731 = vunpack.c.l.b16 %v707
      %v732 = vunpack.c.l.b16 %v708
      %v733 = vpack.c.b16 %v726, %v725
      %v734 = vpack.c.b16 %v728, %v727
      %v735 = vpack.c.b16 %v730, %v729
      %v736 = vpack.c.b16 %v732, %v731
      %v745 = vunpack.c.l.b16 %v691
      %v746 = vunpack.c.l.b16 %v692
      %v747 = vunpack.c.l.b16 %v693
      %v748 = vunpack.c.l.b16 %v694
      %v749 = vunpack.c.l.b16 %v695
      %v750 = vunpack.c.l.b16 %v696
      %v751 = vunpack.c.l.b16 %v697
      %v752 = vunpack.c.l.b16 %v698
      %v753 = vpack.c.b16 %v746, %v745
      %v754 = vpack.c.b16 %v748, %v747
      %v755 = vpack.c.b16 %v750, %v749
      %v756 = vpack.c.b16 %v752, %v751
      %vm761 = vcmask 523264
      %v763 = vsel %vm761, %v733, 0
      %v766 = vsel %vm761, %v734, 0
      %v769 = vsel %vm761, %v735, 0
      %v772 = vsel %vm761, %v736, 0
      %774 = vmatpush.bf16.msra.mxu0 0
      %775 = vmatpush.bf16.msra.mxu0 0
      %776 = vmatpush.bf16.msra.mxu0 0
      %777 = vmatpush.bf16.msra.mxu0 0
      %778 = vmatpush.bf16.msra.mxu0 %v756
      %779 = vmatpush.bf16.msra.mxu0 %v755
      %780 = vmatpush.bf16.msra.mxu0 %v754
      %781 = vmatpush.bf16.msra.mxu0 %v753
      %782 = vmatmul.bf16.gmra.mxu0 %v763
      %v783 = vpop.f32.mrf.mxu0
      %v784 = vadd.f32 0.0, %v783
      %v785 = vpop.f32.mrf.mxu0
      %v786 = vadd.f32 0.0, %v785
      %787 = vmatmul.bf16.gmra.mxu0 %v766
      %v788 = vpop.f32.mrf.mxu0
      %v789 = vadd.f32 0.0, %v788
      %v790 = vpop.f32.mrf.mxu0
      %v791 = vadd.f32 0.0, %v790
      %792 = vmatmul.bf16.gmra.mxu0 %v769
      %v793 = vpop.f32.mrf.mxu0
      %v794 = vadd.f32 0.0, %v793
      %v795 = vpop.f32.mrf.mxu0
      %v796 = vadd.f32 0.0, %v795
      %797 = vmatmul.bf16.gmra.mxu0 %v772
      %v798 = vpop.f32.mrf.mxu0
      %v799 = vadd.f32 0.0, %v798
      %v800 = vpop.f32.mrf.mxu0
      %v801 = vadd.f32 0.0, %v800
      %802 = vdwg.mxu0
      %v811 = vunpack.c.l.b16 %v709
      %v812 = vunpack.c.l.b16 %v710
      %v813 = vunpack.c.l.b16 %v711
      %v814 = vunpack.c.l.b16 %v712
      %v815 = vunpack.c.l.b16 %v713
      %v816 = vunpack.c.l.b16 %v714
      %v817 = vunpack.c.l.b16 %v715
      %v818 = vunpack.c.l.b16 %v716
      %v819 = vpack.c.b16 %v812, %v811
      %v820 = vpack.c.b16 %v814, %v813
      %v821 = vpack.c.b16 %v816, %v815
      %v822 = vpack.c.b16 %v818, %v817
      %v824 = vsel %vm761, %v819, 0
      %v827 = vsel %vm761, %v820, 0
      %v830 = vsel %vm761, %v821, 0
      %v833 = vsel %vm761, %v822, 0
      %835 = vmatpush.bf16.msra.mxu0 0
      %836 = vmatpush.bf16.msra.mxu0 0
      %837 = vmatpush.bf16.msra.mxu0 0
      %838 = vmatpush.bf16.msra.mxu0 0
      %839 = vmatpush.bf16.msra.mxu0 %v756
      %840 = vmatpush.bf16.msra.mxu0 %v755
      %841 = vmatpush.bf16.msra.mxu0 %v754
      %842 = vmatpush.bf16.msra.mxu0 %v753
      %843 = vmatmul.bf16.gmra.mxu0 %v824
      %v844 = vpop.f32.mrf.mxu0
      %v845 = vadd.f32 0.0, %v844
      %v846 = vpop.f32.mrf.mxu0
      %v847 = vadd.f32 0.0, %v846
      %848 = vmatmul.bf16.gmra.mxu0 %v827
      %v849 = vpop.f32.mrf.mxu0
      %v850 = vadd.f32 0.0, %v849
      %v851 = vpop.f32.mrf.mxu0
      %v852 = vadd.f32 0.0, %v851
      %853 = vmatmul.bf16.gmra.mxu0 %v830
      %v854 = vpop.f32.mrf.mxu0
      %v855 = vadd.f32 0.0, %v854
      %v856 = vpop.f32.mrf.mxu0
      %v857 = vadd.f32 0.0, %v856
      %858 = vmatmul.bf16.gmra.mxu0 %v833
      %v859 = vpop.f32.mrf.mxu0
      %v860 = vadd.f32 0.0, %v859
      %v861 = vpop.f32.mrf.mxu0
      %v862 = vadd.f32 0.0, %v861
      %863 = vdwg.mxu0
      %v865 = vperm.slane %v699, 0
      %v867 = vmul.f32 %v784, %v865
      %v868 = vmul.f32 %v786, %v865
      %v869 = vmul.f32 %v789, %v865
      %v870 = vmul.f32 %v791, %v865
      %v871 = vmul.f32 %v794, %v865
      %v872 = vmul.f32 %v796, %v865
      %v873 = vmul.f32 %v799, %v865
      %v874 = vmul.f32 %v801, %v865
      %v875 = vmul.f32 %v845, %v865
      %v876 = vmul.f32 %v847, %v865
      %v877 = vmul.f32 %v850, %v865
      %v878 = vmul.f32 %v852, %v865
      %v879 = vmul.f32 %v855, %v865
      %v880 = vmul.f32 %v857, %v865
      %v881 = vmul.f32 %v860, %v865
      %v882 = vmul.f32 %v862, %v865
      %v884 = vperm.slane %v700, 0
      %v886 = vadd.f32 %v867, %v884
      %v887 = vadd.f32 %v868, %v884
      %v888 = vadd.f32 %v869, %v884
      %v889 = vadd.f32 %v870, %v884
      %v890 = vadd.f32 %v871, %v884
      %v891 = vadd.f32 %v872, %v884
      %v892 = vadd.f32 %v873, %v884
      %v893 = vadd.f32 %v874, %v884
      %v894 = vadd.f32 %v875, %v884
      %v895 = vadd.f32 %v876, %v884
      %v896 = vadd.f32 %v877, %v884
      %v897 = vadd.f32 %v878, %v884
      %v898 = vadd.f32 %v879, %v884
      %v899 = vadd.f32 %v880, %v884
      %v900 = vadd.f32 %v881, %v884
      %v901 = vadd.f32 %v882, %v884
      %v902 = vmax.f32 %v886, -0.5
      %v903 = vmax.f32 %v887, -0.5
      %v904 = vmax.f32 %v888, -0.5
      %v905 = vmax.f32 %v889, -0.5
      %v906 = vmax.f32 %v890, -0.5
      %v907 = vmax.f32 %v891, -0.5
      %v908 = vmax.f32 %v892, -0.5
      %v909 = vmax.f32 %v893, -0.5
      %v910 = vmax.f32 %v894, -0.5
      %v911 = vmax.f32 %v895, -0.5
      %v912 = vmax.f32 %v896, -0.5
      %v913 = vmax.f32 %v897, -0.5
      %v914 = vmax.f32 %v898, -0.5
      %v915 = vmax.f32 %v899, -0.5
      %v916 = vmax.f32 %v900, -0.5
      %v917 = vmax.f32 %v901, -0.5
      %v918 = vmin.f32 %v902, 0.5
      %v919 = vmin.f32 %v903, 0.5
      %v920 = vmin.f32 %v904, 0.5
      %v921 = vmin.f32 %v905, 0.5
      %v922 = vmin.f32 %v906, 0.5
      %v923 = vmin.f32 %v907, 0.5
      %v924 = vmin.f32 %v908, 0.5
      %v925 = vmin.f32 %v909, 0.5
      %v926 = vmin.f32 %v910, 0.5
      %v927 = vmin.f32 %v911, 0.5
      %v928 = vmin.f32 %v912, 0.5
      %v929 = vmin.f32 %v913, 0.5
      %v930 = vmin.f32 %v914, 0.5
      %v931 = vmin.f32 %v915, 0.5
      %v932 = vmin.f32 %v916, 0.5
      %v933 = vmin.f32 %v917, 0.5
      %v934 = vsub.f32 %v886, %v918
      %v935 = vsub.f32 %v887, %v919
      %v936 = vsub.f32 %v888, %v920
      %v937 = vsub.f32 %v889, %v921
      %v938 = vsub.f32 %v890, %v922
      %v939 = vsub.f32 %v891, %v923
      %v940 = vsub.f32 %v892, %v924
      %v941 = vsub.f32 %v893, %v925
      %v942 = vsub.f32 %v894, %v926
      %v943 = vsub.f32 %v895, %v927
      %v944 = vsub.f32 %v896, %v928
      %v945 = vsub.f32 %v897, %v929
      %v946 = vsub.f32 %v898, %v930
      %v947 = vsub.f32 %v899, %v931
      %v948 = vsub.f32 %v900, %v932
      %v949 = vsub.f32 %v901, %v933
      %v950 = vld [vmem:[%s669] sm:$0xf]
      %v951 = vld [vmem:[%s669 + $0x4] sm:$0xf]
      %v952 = vld [vmem:[%s669 + $0x8] sm:$0xf]
      %v953 = vld [vmem:[%s669 + $0xc] sm:$0xf]
      %v954 = vld [vmem:[%s669 + $0x10] sm:$0xf]
      %v955 = vld [vmem:[%s669 + $0x14] sm:$0xf]
      %v956 = vld [vmem:[%s669 + $0x18] sm:$0xf]
      %v957 = vld [vmem:[%s669 + $0x1c] sm:$0x3]
      %v958 = vld [vmem:[%s669 + $0x20] sm:$0xf]
      %v959 = vld [vmem:[%s669 + $0x24] sm:$0xf]
      %v960 = vld [vmem:[%s669 + $0x28] sm:$0xf]
      %v961 = vld [vmem:[%s669 + $0x2c] sm:$0xf]
      %v962 = vld [vmem:[%s669 + $0x30] sm:$0xf]
      %v963 = vld [vmem:[%s669 + $0x34] sm:$0xf]
      %v964 = vld [vmem:[%s669 + $0x38] sm:$0xf]
      %v965 = vld [vmem:[%s669 + $0x3c] sm:$0x3]
      %v974 = vunpack.c.l.b16 %v950
      %v975 = vunpack.c.l.b16 %v951
      %v976 = vunpack.c.l.b16 %v952
      %v977 = vunpack.c.l.b16 %v953
      %v978 = vunpack.c.l.b16 %v954
      %v979 = vunpack.c.l.b16 %v955
      %v980 = vunpack.c.l.b16 %v956
      %v981 = vunpack.c.l.b16 %v957
      %v982 = vpack.c.b16 %v975, %v974
      %v983 = vpack.c.b16 %v977, %v976
      %v984 = vpack.c.b16 %v979, %v978
      %v985 = vpack.c.b16 %v981, %v980
      %v987 = vsel %vm761, %v982, 0
      %v990 = vsel %vm761, %v983, 0
      %v993 = vsel %vm761, %v984, 0
      %v996 = vsel %vm761, %v985, 0
      %998 = vmatpush.bf16.msra.mxu0 0
      %999 = vmatpush.bf16.msra.mxu0 0
      %1000 = vmatpush.bf16.msra.mxu0 0
      %1001 = vmatpush.bf16.msra.mxu0 0
      %1002 = vmatpush.bf16.msra.mxu0 %v756
      %1003 = vmatpush.bf16.msra.mxu0 %v755
      %1004 = vmatpush.bf16.msra.mxu0 %v754
      %1005 = vmatpush.bf16.msra.mxu0 %v753
      %1006 = vmatmul.bf16.gmra.mxu0 %v987
      %v1007 = vpop.f32.mrf.mxu0
      %v1008 = vadd.f32 0.0, %v1007
      %v1009 = vpop.f32.mrf.mxu0
      %v1010 = vadd.f32 0.0, %v1009
      %1011 = vmatmul.bf16.gmra.mxu0 %v990
      %v1012 = vpop.f32.mrf.mxu0
      %v1013 = vadd.f32 0.0, %v1012
      %v1014 = vpop.f32.mrf.mxu0
      %v1015 = vadd.f32 0.0, %v1014
      %1016 = vmatmul.bf16.gmra.mxu0 %v993
      %v1017 = vpop.f32.mrf.mxu0
      %v1018 = vadd.f32 0.0, %v1017
      %v1019 = vpop.f32.mrf.mxu0
      %v1020 = vadd.f32 0.0, %v1019
      %1021 = vmatmul.bf16.gmra.mxu0 %v996
      %v1022 = vpop.f32.mrf.mxu0
      %v1023 = vadd.f32 0.0, %v1022
      %v1024 = vpop.f32.mrf.mxu0
      %v1025 = vadd.f32 0.0, %v1024
      %1026 = vdwg.mxu0
      %v1035 = vunpack.c.l.b16 %v958
      %v1036 = vunpack.c.l.b16 %v959
      %v1037 = vunpack.c.l.b16 %v960
      %v1038 = vunpack.c.l.b16 %v961
      %v1039 = vunpack.c.l.b16 %v962
      %v1040 = vunpack.c.l.b16 %v963
      %v1041 = vunpack.c.l.b16 %v964
      %v1042 = vunpack.c.l.b16 %v965
      %v1043 = vpack.c.b16 %v1036, %v1035
      %v1044 = vpack.c.b16 %v1038, %v1037
      %v1045 = vpack.c.b16 %v1040, %v1039
      %v1046 = vpack.c.b16 %v1042, %v1041
      %v1048 = vsel %vm761, %v1043, 0
      %v1051 = vsel %vm761, %v1044, 0
      %v1054 = vsel %vm761, %v1045, 0
      %v1057 = vsel %vm761, %v1046, 0
      %1059 = vmatpush.bf16.msra.mxu0 0
      %1060 = vmatpush.bf16.msra.mxu0 0
      %1061 = vmatpush.bf16.msra.mxu0 0
      %1062 = vmatpush.bf16.msra.mxu0 0
      %1063 = vmatpush.bf16.msra.mxu0 %v756
      %1064 = vmatpush.bf16.msra.mxu0 %v755
      %1065 = vmatpush.bf16.msra.mxu0 %v754
      %1066 = vmatpush.bf16.msra.mxu0 %v753
      %1067 = vmatmul.bf16.gmra.mxu0 %v1048
      %v1068 = vpop.f32.mrf.mxu0
      %v1069 = vadd.f32 0.0, %v1068
      %v1070 = vpop.f32.mrf.mxu0
      %v1071 = vadd.f32 0.0, %v1070
      %1072 = vmatmul.bf16.gmra.mxu0 %v1051
      %v1073 = vpop.f32.mrf.mxu0
      %v1074 = vadd.f32 0.0, %v1073
      %v1075 = vpop.f32.mrf.mxu0
      %v1076 = vadd.f32 0.0, %v1075
      %1077 = vmatmul.bf16.gmra.mxu0 %v1054
      %v1078 = vpop.f32.mrf.mxu0
      %v1079 = vadd.f32 0.0, %v1078
      %v1080 = vpop.f32.mrf.mxu0
      %v1081 = vadd.f32 0.0, %v1080
      %1082 = vmatmul.bf16.gmra.mxu0 %v1057
      %v1083 = vpop.f32.mrf.mxu0
      %v1084 = vadd.f32 0.0, %v1083
      %v1085 = vpop.f32.mrf.mxu0
      %v1086 = vadd.f32 0.0, %v1085
      %1087 = vdwg.mxu0
      %v1088 = vmul.f32 %v1008, %v865
      %v1089 = vmul.f32 %v1010, %v865
      %v1090 = vmul.f32 %v1013, %v865
      %v1091 = vmul.f32 %v1015, %v865
      %v1092 = vmul.f32 %v1018, %v865
      %v1093 = vmul.f32 %v1020, %v865
      %v1094 = vmul.f32 %v1023, %v865
      %v1095 = vmul.f32 %v1025, %v865
      %v1096 = vmul.f32 %v1069, %v865
      %v1097 = vmul.f32 %v1071, %v865
      %v1098 = vmul.f32 %v1074, %v865
      %v1099 = vmul.f32 %v1076, %v865
      %v1100 = vmul.f32 %v1079, %v865
      %v1101 = vmul.f32 %v1081, %v865
      %v1102 = vmul.f32 %v1084, %v865
      %v1103 = vmul.f32 %v1086, %v865
      %v1104 = vadd.f32 %v1088, %v884
      %v1105 = vadd.f32 %v1089, %v884
      %v1106 = vadd.f32 %v1090, %v884
      %v1107 = vadd.f32 %v1091, %v884
      %v1108 = vadd.f32 %v1092, %v884
      %v1109 = vadd.f32 %v1093, %v884
      %v1110 = vadd.f32 %v1094, %v884
      %v1111 = vadd.f32 %v1095, %v884
      %v1112 = vadd.f32 %v1096, %v884
      %v1113 = vadd.f32 %v1097, %v884
      %v1114 = vadd.f32 %v1098, %v884
      %v1115 = vadd.f32 %v1099, %v884
      %v1116 = vadd.f32 %v1100, %v884
      %v1117 = vadd.f32 %v1101, %v884
      %v1118 = vadd.f32 %v1102, %v884
      %v1119 = vadd.f32 %v1103, %v884
      %v1120 = vmax.f32 %v1104, -0.5
      %v1121 = vmax.f32 %v1105, -0.5
      %v1122 = vmax.f32 %v1106, -0.5
      %v1123 = vmax.f32 %v1107, -0.5
      %v1124 = vmax.f32 %v1108, -0.5
      %v1125 = vmax.f32 %v1109, -0.5
      %v1126 = vmax.f32 %v1110, -0.5
      %v1127 = vmax.f32 %v1111, -0.5
      %v1128 = vmax.f32 %v1112, -0.5
      %v1129 = vmax.f32 %v1113, -0.5
      %v1130 = vmax.f32 %v1114, -0.5
      %v1131 = vmax.f32 %v1115, -0.5
      %v1132 = vmax.f32 %v1116, -0.5
      %v1133 = vmax.f32 %v1117, -0.5
      %v1134 = vmax.f32 %v1118, -0.5
      %v1135 = vmax.f32 %v1119, -0.5
      %v1136 = vmin.f32 %v1120, 0.5
      %v1137 = vmin.f32 %v1121, 0.5
      %v1138 = vmin.f32 %v1122, 0.5
      %v1139 = vmin.f32 %v1123, 0.5
      %v1140 = vmin.f32 %v1124, 0.5
      %v1141 = vmin.f32 %v1125, 0.5
      %v1142 = vmin.f32 %v1126, 0.5
      %v1143 = vmin.f32 %v1127, 0.5
      %v1144 = vmin.f32 %v1128, 0.5
      %v1145 = vmin.f32 %v1129, 0.5
      %v1146 = vmin.f32 %v1130, 0.5
      %v1147 = vmin.f32 %v1131, 0.5
      %v1148 = vmin.f32 %v1132, 0.5
      %v1149 = vmin.f32 %v1133, 0.5
      %v1150 = vmin.f32 %v1134, 0.5
      %v1151 = vmin.f32 %v1135, 0.5
      %v1152 = vsub.f32 %v1104, %v1136
      %v1153 = vsub.f32 %v1105, %v1137
      %v1154 = vsub.f32 %v1106, %v1138
      %v1155 = vsub.f32 %v1107, %v1139
      %v1156 = vsub.f32 %v1108, %v1140
      %v1157 = vsub.f32 %v1109, %v1141
      %v1158 = vsub.f32 %v1110, %v1142
      %v1159 = vsub.f32 %v1111, %v1143
      %v1160 = vsub.f32 %v1112, %v1144
      %v1161 = vsub.f32 %v1113, %v1145
      %v1162 = vsub.f32 %v1114, %v1146
      %v1163 = vsub.f32 %v1115, %v1147
      %v1164 = vsub.f32 %v1116, %v1148
      %v1165 = vsub.f32 %v1117, %v1149
      %v1166 = vsub.f32 %v1118, %v1150
      %v1167 = vsub.f32 %v1119, %v1151
      %v1168 = vmax.f32 %v934, %v1152
      %v1169 = vmax.f32 %v935, %v1153
      %v1170 = vmax.f32 %v936, %v1154
      %v1171 = vmax.f32 %v937, %v1155
      %v1172 = vmax.f32 %v938, %v1156
      %v1173 = vmax.f32 %v939, %v1157
      %v1174 = vmax.f32 %v940, %v1158
      %v1175 = vmax.f32 %v941, %v1159
      %v1176 = vmax.f32 %v942, %v1160
      %v1177 = vmax.f32 %v943, %v1161
      %v1178 = vmax.f32 %v944, %v1162
      %v1179 = vmax.f32 %v945, %v1163
      %v1180 = vmax.f32 %v946, %v1164
      %v1181 = vmax.f32 %v947, %v1165
      %v1182 = vmax.f32 %v948, %v1166
      %v1183 = vmax.f32 %v949, %v1167
      %v1184 = vpack.c.bf16 %v1168, %v1168
      %v1185 = vpack.c.bf16 %v1169, %v1169
      %v1186 = vpack.c.bf16 %v1170, %v1170
      %v1187 = vpack.c.bf16 %v1171, %v1171
      %v1188 = vpack.c.bf16 %v1172, %v1172
      %v1189 = vpack.c.bf16 %v1173, %v1173
      %v1190 = vpack.c.bf16 %v1174, %v1174
      %v1191 = vpack.c.bf16 %v1175, %v1175
      %v1192 = vpack.c.bf16 %v1176, %v1176
      %v1193 = vpack.c.bf16 %v1177, %v1177
      %v1194 = vpack.c.bf16 %v1178, %v1178
      %v1195 = vpack.c.bf16 %v1179, %v1179
      %v1196 = vpack.c.bf16 %v1180, %v1180
      %v1197 = vpack.c.bf16 %v1181, %v1181
      %v1198 = vpack.c.bf16 %v1182, %v1182
      %v1199 = vpack.c.bf16 %v1183, %v1183
      %v1200 = vlaneseq
      %v1201 = vshrl.u32 %v1200, 7
      %v1202 = vadd.s32 %v1201, 8
      %v1203 = vadd.s32 %v1201, 16
      %v1204 = vadd.s32 %v1201, 24
      %v1205 = vlaneseq
      %v1206 = vand.u32 %v1205, 127
      %v1207 = vmul.u32 %v1201, 2
      %v1208 = vmul.u32 %v1202, 2
      %v1209 = vmul.u32 %v1203, 2
      %v1210 = vmul.u32 %v1204, 2
      %v1211 = vadd.s32 %v1207, 4294967295
      %v1212 = vadd.s32 %v1208, 4294967295
      %v1213 = vadd.s32 %v1209, 4294967295
      %v1214 = vadd.s32 %v1210, 4294967295
      %vm1215 = vcmp.eq.s32.totalorder %v1206, %v1211
      %vm1216 = vcmp.eq.s32.totalorder %v1206, %v1212
      %vm1217 = vcmp.eq.s32.totalorder %v1206, %v1213
      %vm1218 = vcmp.eq.s32.totalorder %v1206, %v1214
      %v1219 = vsel %vm1215, 1.0, 0.0
      %v1220 = vsel %vm1216, 1.0, 0.0
      %v1221 = vsel %vm1217, 1.0, 0.0
      %v1222 = vsel %vm1218, 1.0, 0.0
      %v1223 = vpack.c.bf16 %v1219, %v1219
      %v1224 = vpack.c.bf16 %v1220, %v1220
      %v1225 = vpack.c.bf16 %v1221, %v1221
      %v1226 = vpack.c.bf16 %v1222, %v1222
      %v1231 = vunpack.c.l.b16 %v1223
      %v1232 = vunpack.c.l.b16 %v1224
      %v1233 = vunpack.c.l.b16 %v1225
      %v1234 = vunpack.c.l.b16 %v1226
      %v1235 = vpack.c.b16 %v1232, %v1231
      %v1236 = vpack.c.b16 %v1234, %v1233
      %v1245 = vunpack.c.l.b16 %v1184
      %v1246 = vunpack.c.l.b16 %v1185
      %v1247 = vunpack.c.l.b16 %v1186
      %v1248 = vunpack.c.l.b16 %v1187
      %v1249 = vunpack.c.l.b16 %v1188
      %v1250 = vunpack.c.l.b16 %v1189
      %v1251 = vunpack.c.l.b16 %v1190
      %v1252 = vunpack.c.l.b16 %v1191
      %v1253 = vpack.c.b16 %v1246, %v1245
      %v1254 = vpack.c.b16 %v1248, %v1247
      %v1255 = vpack.c.b16 %v1250, %v1249
      %v1256 = vpack.c.b16 %v1252, %v1251
      %vm1260 = vcmask 490496
      %v1262 = vsel %vm1260, %v1235, 0
      %v1265 = vsel %vm1260, %v1236, 0
      %vm1267 = vcmask 1045504
      %v1269 = vsel %vm1267, %v1256, 0
      %1271 = vmatpush.bf16.msra.mxu0 0
      %1272 = vmatpush.bf16.msra.mxu0 0
      %1273 = vmatpush.bf16.msra.mxu0 0
      %1274 = vmatpush.bf16.msra.mxu0 0
      %1275 = vmatpush.bf16.msra.mxu0 %v1269
      %1276 = vmatpush.bf16.msra.mxu0 %v1255
      %1277 = vmatpush.bf16.msra.mxu0 %v1254
      %1278 = vmatpush.bf16.msra.mxu0 %v1253
      %1279 = vmatmul.bf16.gmra.mxu0 %v1262
      %v1280 = vpop.f32.mrf.mxu0
      %v1281 = vadd.f32 0.0, %v1280
      %v1282 = vpop.f32.mrf.mxu0
      %v1283 = vadd.f32 0.0, %v1282
      %1284 = vmatmul.bf16.gmra.mxu0 %v1265
      %v1285 = vpop.f32.mrf.mxu0
      %v1286 = vadd.f32 0.0, %v1285
      %v1287 = vpop.f32.mrf.mxu0
      %v1288 = vadd.f32 0.0, %v1287
      %1289 = vdwg.mxu0
      %v1298 = vunpack.c.l.b16 %v1192
      %v1299 = vunpack.c.l.b16 %v1193
      %v1300 = vunpack.c.l.b16 %v1194
      %v1301 = vunpack.c.l.b16 %v1195
      %v1302 = vunpack.c.l.b16 %v1196
      %v1303 = vunpack.c.l.b16 %v1197
      %v1304 = vunpack.c.l.b16 %v1198
      %v1305 = vunpack.c.l.b16 %v1199
      %v1306 = vpack.c.b16 %v1299, %v1298
      %v1307 = vpack.c.b16 %v1301, %v1300
      %v1308 = vpack.c.b16 %v1303, %v1302
      %v1309 = vpack.c.b16 %v1305, %v1304
      %v1314 = vsel %vm1267, %v1309, 0
      %1316 = vmatpush.bf16.msra.mxu0 0
      %1317 = vmatpush.bf16.msra.mxu0 0
      %1318 = vmatpush.bf16.msra.mxu0 0
      %1319 = vmatpush.bf16.msra.mxu0 0
      %1320 = vmatpush.bf16.msra.mxu0 %v1314
      %1321 = vmatpush.bf16.msra.mxu0 %v1308
      %1322 = vmatpush.bf16.msra.mxu0 %v1307
      %1323 = vmatpush.bf16.msra.mxu0 %v1306
      %1324 = vmatmul.bf16.gmra.mxu0 %v1262
      %v1325 = vpop.f32.mrf.mxu0
      %v1326 = vadd.f32 0.0, %v1325
      %v1327 = vpop.f32.mrf.mxu0
      %v1328 = vadd.f32 0.0, %v1327
      %1329 = vmatmul.bf16.gmra.mxu0 %v1265
      %v1330 = vpop.f32.mrf.mxu0
      %v1331 = vadd.f32 0.0, %v1330
      %v1332 = vpop.f32.mrf.mxu0
      %v1333 = vadd.f32 0.0, %v1332
      %1334 = vdwg.mxu0
      %vm1335 = vcmp.eq.s32.totalorder %v1206, %v1207
      %vm1336 = vcmp.eq.s32.totalorder %v1206, %v1208
      %vm1337 = vcmp.eq.s32.totalorder %v1206, %v1209
      %vm1338 = vcmp.eq.s32.totalorder %v1206, %v1210
      %v1339 = vsel %vm1335, 1.0, 0.0
      %v1340 = vsel %vm1336, 1.0, 0.0
      %v1341 = vsel %vm1337, 1.0, 0.0
      %v1342 = vsel %vm1338, 1.0, 0.0
      %v1343 = vpack.c.bf16 %v1339, %v1339
      %v1344 = vpack.c.bf16 %v1340, %v1340
      %v1345 = vpack.c.bf16 %v1341, %v1341
      %v1346 = vpack.c.bf16 %v1342, %v1342
      %v1351 = vunpack.c.l.b16 %v1343
      %v1352 = vunpack.c.l.b16 %v1344
      %v1353 = vunpack.c.l.b16 %v1345
      %v1354 = vunpack.c.l.b16 %v1346
      %v1355 = vpack.c.b16 %v1352, %v1351
      %v1356 = vpack.c.b16 %v1354, %v1353
      %v1358 = vsel %vm1260, %v1355, 0
      %v1361 = vsel %vm1260, %v1356, 0
      %1363 = vmatpush.bf16.msra.mxu0 0
      %1364 = vmatpush.bf16.msra.mxu0 0
      %1365 = vmatpush.bf16.msra.mxu0 0
      %1366 = vmatpush.bf16.msra.mxu0 0
      %1367 = vmatpush.bf16.msra.mxu0 %v1269
      %1368 = vmatpush.bf16.msra.mxu0 %v1255
      %1369 = vmatpush.bf16.msra.mxu0 %v1254
      %1370 = vmatpush.bf16.msra.mxu0 %v1253
      %1371 = vmatmul.bf16.gmra.mxu0 %v1358
      %v1372 = vpop.f32.mrf.mxu0
      %v1373 = vadd.f32 0.0, %v1372
      %v1374 = vpop.f32.mrf.mxu0
      %v1375 = vadd.f32 0.0, %v1374
      %1376 = vmatmul.bf16.gmra.mxu0 %v1361
      %v1377 = vpop.f32.mrf.mxu0
      %v1378 = vadd.f32 0.0, %v1377
      %v1379 = vpop.f32.mrf.mxu0
      %v1380 = vadd.f32 0.0, %v1379
      %1381 = vdwg.mxu0
      %1382 = vmatpush.bf16.msra.mxu0 0
      %1383 = vmatpush.bf16.msra.mxu0 0
      %1384 = vmatpush.bf16.msra.mxu0 0
      %1385 = vmatpush.bf16.msra.mxu0 0
      %1386 = vmatpush.bf16.msra.mxu0 %v1314
      %1387 = vmatpush.bf16.msra.mxu0 %v1308
      %1388 = vmatpush.bf16.msra.mxu0 %v1307
      %1389 = vmatpush.bf16.msra.mxu0 %v1306
      %1390 = vmatmul.bf16.gmra.mxu0 %v1358
      %v1391 = vpop.f32.mrf.mxu0
      %v1392 = vadd.f32 0.0, %v1391
      %v1393 = vpop.f32.mrf.mxu0
      %v1394 = vadd.f32 0.0, %v1393
      %1395 = vmatmul.bf16.gmra.mxu0 %v1361
      %v1396 = vpop.f32.mrf.mxu0
      %v1397 = vadd.f32 0.0, %v1396
      %v1398 = vpop.f32.mrf.mxu0
      %v1399 = vadd.f32 0.0, %v1398
      %1400 = vdwg.mxu0
      %v1401 = vadd.s32 %v1207, 1
      %v1402 = vadd.s32 %v1208, 1
      %v1403 = vadd.s32 %v1209, 1
      %v1404 = vadd.s32 %v1210, 1
      %vm1405 = vcmp.eq.s32.totalorder %v1206, %v1401
      %vm1406 = vcmp.eq.s32.totalorder %v1206, %v1402
      %vm1407 = vcmp.eq.s32.totalorder %v1206, %v1403
      %vm1408 = vcmp.eq.s32.totalorder %v1206, %v1404
      %v1409 = vsel %vm1405, 1.0, 0.0
      %v1410 = vsel %vm1406, 1.0, 0.0
      %v1411 = vsel %vm1407, 1.0, 0.0
      %v1412 = vsel %vm1408, 1.0, 0.0
      %v1413 = vpack.c.bf16 %v1409, %v1409
      %v1414 = vpack.c.bf16 %v1410, %v1410
      %v1415 = vpack.c.bf16 %v1411, %v1411
      %v1416 = vpack.c.bf16 %v1412, %v1412
      %v1421 = vunpack.c.l.b16 %v1413
      %v1422 = vunpack.c.l.b16 %v1414
      %v1423 = vunpack.c.l.b16 %v1415
      %v1424 = vunpack.c.l.b16 %v1416
      %v1425 = vpack.c.b16 %v1422, %v1421
      %v1426 = vpack.c.b16 %v1424, %v1423
      %v1428 = vsel %vm1260, %v1425, 0
      %v1431 = vsel %vm1260, %v1426, 0
      %1433 = vmatpush.bf16.msra.mxu0 0
      %1434 = vmatpush.bf16.msra.mxu0 0
      %1435 = vmatpush.bf16.msra.mxu0 0
      %1436 = vmatpush.bf16.msra.mxu0 0
      %1437 = vmatpush.bf16.msra.mxu0 %v1269
      %1438 = vmatpush.bf16.msra.mxu0 %v1255
      %1439 = vmatpush.bf16.msra.mxu0 %v1254
      %1440 = vmatpush.bf16.msra.mxu0 %v1253
      %1441 = vmatmul.bf16.gmra.mxu0 %v1428
      %v1442 = vpop.f32.mrf.mxu0
      %v1443 = vadd.f32 0.0, %v1442
      %v1444 = vpop.f32.mrf.mxu0
      %v1445 = vadd.f32 0.0, %v1444
      %1446 = vmatmul.bf16.gmra.mxu0 %v1431
      %v1447 = vpop.f32.mrf.mxu0
      %v1448 = vadd.f32 0.0, %v1447
      %v1449 = vpop.f32.mrf.mxu0
      %v1450 = vadd.f32 0.0, %v1449
      %1451 = vdwg.mxu0
      %1452 = vmatpush.bf16.msra.mxu0 0
      %1453 = vmatpush.bf16.msra.mxu0 0
      %1454 = vmatpush.bf16.msra.mxu0 0
      %1455 = vmatpush.bf16.msra.mxu0 0
      %1456 = vmatpush.bf16.msra.mxu0 %v1314
      %1457 = vmatpush.bf16.msra.mxu0 %v1308
      %1458 = vmatpush.bf16.msra.mxu0 %v1307
      %1459 = vmatpush.bf16.msra.mxu0 %v1306
      %1460 = vmatmul.bf16.gmra.mxu0 %v1428
      %v1461 = vpop.f32.mrf.mxu0
      %v1462 = vadd.f32 0.0, %v1461
      %v1463 = vpop.f32.mrf.mxu0
      %v1464 = vadd.f32 0.0, %v1463
      %1465 = vmatmul.bf16.gmra.mxu0 %v1431
      %v1466 = vpop.f32.mrf.mxu0
      %v1467 = vadd.f32 0.0, %v1466
      %v1468 = vpop.f32.mrf.mxu0
      %v1469 = vadd.f32 0.0, %v1468
      %1470 = vdwg.mxu0
      %v1471 = vadd.s32 %v1207, 2
      %v1472 = vadd.s32 %v1208, 2
      %v1473 = vadd.s32 %v1209, 2
      %v1474 = vadd.s32 %v1210, 2
      %vm1475 = vcmp.eq.s32.totalorder %v1206, %v1471
      %vm1476 = vcmp.eq.s32.totalorder %v1206, %v1472
      %vm1477 = vcmp.eq.s32.totalorder %v1206, %v1473
      %vm1478 = vcmp.eq.s32.totalorder %v1206, %v1474
      %v1479 = vsel %vm1475, 1.0, 0.0
      %v1480 = vsel %vm1476, 1.0, 0.0
      %v1481 = vsel %vm1477, 1.0, 0.0
      %v1482 = vsel %vm1478, 1.0, 0.0
      %v1483 = vpack.c.bf16 %v1479, %v1479
      %v1484 = vpack.c.bf16 %v1480, %v1480
      %v1485 = vpack.c.bf16 %v1481, %v1481
      %v1486 = vpack.c.bf16 %v1482, %v1482
      %v1491 = vunpack.c.l.b16 %v1483
      %v1492 = vunpack.c.l.b16 %v1484
      %v1493 = vunpack.c.l.b16 %v1485
      %v1494 = vunpack.c.l.b16 %v1486
      %v1495 = vpack.c.b16 %v1492, %v1491
      %v1496 = vpack.c.b16 %v1494, %v1493
      %v1498 = vsel %vm1260, %v1495, 0
      %v1501 = vsel %vm1260, %v1496, 0
      %1503 = vmatpush.bf16.msra.mxu0 0
      %1504 = vmatpush.bf16.msra.mxu0 0
      %1505 = vmatpush.bf16.msra.mxu0 0
      %1506 = vmatpush.bf16.msra.mxu0 0
      %1507 = vmatpush.bf16.msra.mxu0 %v1269
      %1508 = vmatpush.bf16.msra.mxu0 %v1255
      %1509 = vmatpush.bf16.msra.mxu0 %v1254
      %1510 = vmatpush.bf16.msra.mxu0 %v1253
      %1511 = vmatmul.bf16.gmra.mxu0 %v1498
      %v1512 = vpop.f32.mrf.mxu0
      %v1513 = vadd.f32 0.0, %v1512
      %v1514 = vpop.f32.mrf.mxu0
      %v1515 = vadd.f32 0.0, %v1514
      %1516 = vmatmul.bf16.gmra.mxu0 %v1501
      %v1517 = vpop.f32.mrf.mxu0
      %v1518 = vadd.f32 0.0, %v1517
      %v1519 = vpop.f32.mrf.mxu0
      %v1520 = vadd.f32 0.0, %v1519
      %1521 = vdwg.mxu0
      %1522 = vmatpush.bf16.msra.mxu0 0
      %1523 = vmatpush.bf16.msra.mxu0 0
      %1524 = vmatpush.bf16.msra.mxu0 0
      %1525 = vmatpush.bf16.msra.mxu0 0
      %1526 = vmatpush.bf16.msra.mxu0 %v1314
      %1527 = vmatpush.bf16.msra.mxu0 %v1308
      %1528 = vmatpush.bf16.msra.mxu0 %v1307
      %1529 = vmatpush.bf16.msra.mxu0 %v1306
      %1530 = vmatmul.bf16.gmra.mxu0 %v1498
      %v1531 = vpop.f32.mrf.mxu0
      %v1532 = vadd.f32 0.0, %v1531
      %v1533 = vpop.f32.mrf.mxu0
      %v1534 = vadd.f32 0.0, %v1533
      %1535 = vmatmul.bf16.gmra.mxu0 %v1501
      %v1536 = vpop.f32.mrf.mxu0
      %v1537 = vadd.f32 0.0, %v1536
      %v1538 = vpop.f32.mrf.mxu0
      %v1539 = vadd.f32 0.0, %v1538
      %1540 = vdwg.mxu0
      %v1541 = vld [vmem:[%s5] sm:$0xf]
      %v1542 = vld [vmem:[%s5 + $0x4] sm:$0xf]
      %v1543 = vld [vmem:[%s5 + $0x8] sm:$0xf]
      %v1544 = vld [vmem:[%s5 + $0xc] sm:$0xf]
      %v1545 = vld [vmem:[%s5 + $0x10] sm:$0xf]
      %v1546 = vld [vmem:[%s5 + $0x14] sm:$0xf]
      %v1547 = vld [vmem:[%s6] sm:$0x1]
      %v1548 = vld [vmem:[%s7] sm:$0x1]
      %1557 = vrot.lane.b32.xlu0 %v1373, 16
      %v1558 = vpop.permute.xlu0 %1557
      %1559 = vrot.lane.b32.xlu0 %v1375, 16
      %v1560 = vpop.permute.xlu0 %1559
      %1561 = vrot.lane.b32.xlu0 %v1378, 16
      %v1562 = vpop.permute.xlu0 %1561
      %1563 = vrot.lane.b32.xlu0 %v1380, 16
      %v1564 = vpop.permute.xlu0 %1563
      %1565 = vrot.lane.b32.xlu0 %v1392, 16
      %v1566 = vpop.permute.xlu0 %1565
      %1567 = vrot.lane.b32.xlu0 %v1394, 16
      %v1568 = vpop.permute.xlu0 %1567
      %1569 = vrot.lane.b32.xlu0 %v1397, 16
      %v1570 = vpop.permute.xlu0 %1569
      %1571 = vrot.lane.b32.xlu0 %v1399, 16
      %v1572 = vpop.permute.xlu0 %1571
      %1589 = vrot.lane.b32.xlu0 %v1443, 32
      %v1590 = vpop.permute.xlu0 %1589
      %1591 = vrot.lane.b32.xlu0 %v1445, 32
      %v1592 = vpop.permute.xlu0 %1591
      %1593 = vrot.lane.b32.xlu0 %v1448, 32
      %v1594 = vpop.permute.xlu0 %1593
      %1595 = vrot.lane.b32.xlu0 %v1450, 32
      %v1596 = vpop.permute.xlu0 %1595
      %1597 = vrot.lane.b32.xlu0 %v1462, 32
      %v1598 = vpop.permute.xlu0 %1597
      %1599 = vrot.lane.b32.xlu0 %v1464, 32
      %v1600 = vpop.permute.xlu0 %1599
      %1601 = vrot.lane.b32.xlu0 %v1467, 32
      %v1602 = vpop.permute.xlu0 %1601
      %1603 = vrot.lane.b32.xlu0 %v1469, 32
      %v1604 = vpop.permute.xlu0 %1603
      %vm1613 = vcmask 130048
      %v1614 = vsel %vm1613, %v1281, %v1558
      %v1615 = vsel %vm1613, %v1283, %v1560
      %v1616 = vsel %vm1613, %v1286, %v1562
      %v1617 = vsel %vm1613, %v1288, %v1564
      %v1618 = vsel %vm1613, %v1326, %v1566
      %v1619 = vsel %vm1613, %v1328, %v1568
      %v1620 = vsel %vm1613, %v1331, %v1570
      %v1621 = vsel %vm1613, %v1333, %v1572
      %vm1622 = vcmask 261120
      %v1623 = vsel %vm1622, %v1614, %v1590
      %v1624 = vsel %vm1622, %v1615, %v1592
      %v1625 = vsel %vm1622, %v1616, %v1594
      %v1626 = vsel %vm1622, %v1617, %v1596
      %v1627 = vsel %vm1622, %v1618, %v1598
      %v1628 = vsel %vm1622, %v1619, %v1600
      %v1629 = vsel %vm1622, %v1620, %v1602
      %v1630 = vsel %vm1622, %v1621, %v1604
      %v1631 = vpack.c.bf16 %v1623, %v1623
      %v1632 = vpack.c.bf16 %v1624, %v1624
      %v1633 = vpack.c.bf16 %v1625, %v1625
      %v1634 = vpack.c.bf16 %v1626, %v1626
      %v1635 = vpack.c.bf16 %v1627, %v1627
      %v1636 = vpack.c.bf16 %v1628, %v1628
      %v1637 = vpack.c.bf16 %v1629, %v1629
      %v1638 = vpack.c.bf16 %v1630, %v1630
      %v1643 = vunpack.c.l.b16 %v1631
      %v1644 = vunpack.c.l.b16 %v1632
      %v1645 = vunpack.c.l.b16 %v1633
      %v1646 = vunpack.c.l.b16 %v1634
      %v1647 = vpack.c.b16 %v1644, %v1643
      %v1648 = vpack.c.b16 %v1646, %v1645
      %v1655 = vunpack.c.l.b16 %v1541
      %v1656 = vunpack.c.l.b16 %v1542
      %v1657 = vunpack.c.l.b16 %v1543
      %v1658 = vunpack.c.l.b16 %v1544
      %v1659 = vunpack.c.l.b16 %v1545
      %v1660 = vunpack.c.l.b16 %v1546
      %v1661 = vpack.c.b16 %v1656, %v1655
      %v1662 = vpack.c.b16 %v1658, %v1657
      %v1663 = vpack.c.b16 %v1660, %v1659
      %vm1667 = vcmask 392192
      %v1669 = vsel %vm1667, %v1647, 0
      %v1672 = vsel %vm1667, %v1648, 0
      %1674 = vmatpush.bf16.msra.mxu0 0
      %1675 = vmatpush.bf16.msra.mxu0 0
      %1676 = vmatpush.bf16.msra.mxu0 0
      %1677 = vmatpush.bf16.msra.mxu0 0
      %1678 = vmatpush.bf16.msra.mxu0 0
      %1679 = vmatpush.bf16.msra.mxu0 %v1663
      %1680 = vmatpush.bf16.msra.mxu0 %v1662
      %1681 = vmatpush.bf16.msra.mxu0 %v1661
      %1682 = vmatmul.bf16.gmra.mxu0 %v1669
      %v1683 = vpop.f32.mrf.mxu0
      %v1684 = vadd.f32 0.0, %v1683
      %v1685 = vpop.f32.mrf.mxu0
      %v1686 = vadd.f32 0.0, %v1685
      %1687 = vmatmul.bf16.gmra.mxu0 %v1672
      %v1688 = vpop.f32.mrf.mxu0
      %v1689 = vadd.f32 0.0, %v1688
      %v1690 = vpop.f32.mrf.mxu0
      %v1691 = vadd.f32 0.0, %v1690
      %1692 = vdwg.mxu0
      %v1697 = vunpack.c.l.b16 %v1635
      %v1698 = vunpack.c.l.b16 %v1636
      %v1699 = vunpack.c.l.b16 %v1637
      %v1700 = vunpack.c.l.b16 %v1638
      %v1701 = vpack.c.b16 %v1698, %v1697
      %v1702 = vpack.c.b16 %v1700, %v1699
      %v1704 = vsel %vm1667, %v1701, 0
      %v1707 = vsel %vm1667, %v1702, 0
      %1709 = vmatpush.bf16.msra.mxu0 0
      %1710 = vmatpush.bf16.msra.mxu0 0
      %1711 = vmatpush.bf16.msra.mxu0 0
      %1712 = vmatpush.bf16.msra.mxu0 0
      %1713 = vmatpush.bf16.msra.mxu0 0
      %1714 = vmatpush.bf16.msra.mxu0 %v1663
      %1715 = vmatpush.bf16.msra.mxu0 %v1662
      %1716 = vmatpush.bf16.msra.mxu0 %v1661
      %1717 = vmatmul.bf16.gmra.mxu0 %v1704
      %v1718 = vpop.f32.mrf.mxu0
      %v1719 = vadd.f32 0.0, %v1718
      %v1720 = vpop.f32.mrf.mxu0
      %v1721 = vadd.f32 0.0, %v1720
      %1722 = vmatmul.bf16.gmra.mxu0 %v1707
      %v1723 = vpop.f32.mrf.mxu0
      %v1724 = vadd.f32 0.0, %v1723
      %v1725 = vpop.f32.mrf.mxu0
      %v1726 = vadd.f32 0.0, %v1725
      %1727 = vdwg.mxu0
      %v1729 = vperm.slane %v1547, 0
      %v1731 = vmul.f32 %v1684, %v1729
      %v1732 = vmul.f32 %v1686, %v1729
      %v1733 = vmul.f32 %v1689, %v1729
      %v1734 = vmul.f32 %v1691, %v1729
      %v1735 = vmul.f32 %v1719, %v1729
      %v1736 = vmul.f32 %v1721, %v1729
      %v1737 = vmul.f32 %v1724, %v1729
      %v1738 = vmul.f32 %v1726, %v1729
      %v1740 = vperm.slane %v1548, 0
      %v1742 = vadd.f32 %v1731, %v1740
      %v1743 = vadd.f32 %v1732, %v1740
      %v1744 = vadd.f32 %v1733, %v1740
      %v1745 = vadd.f32 %v1734, %v1740
      %v1746 = vadd.f32 %v1735, %v1740
      %v1747 = vadd.f32 %v1736, %v1740
      %v1748 = vadd.f32 %v1737, %v1740
      %v1749 = vadd.f32 %v1738, %v1740
      %v1750 = vmax.f32 %v1742, -0.5
      %v1751 = vmax.f32 %v1743, -0.5
      %v1752 = vmax.f32 %v1744, -0.5
      %v1753 = vmax.f32 %v1745, -0.5
      %v1754 = vmax.f32 %v1746, -0.5
      %v1755 = vmax.f32 %v1747, -0.5
      %v1756 = vmax.f32 %v1748, -0.5
      %v1757 = vmax.f32 %v1749, -0.5
      %v1758 = vmin.f32 %v1750, 0.5
      %v1759 = vmin.f32 %v1751, 0.5
      %v1760 = vmin.f32 %v1752, 0.5
      %v1761 = vmin.f32 %v1753, 0.5
      %v1762 = vmin.f32 %v1754, 0.5
      %v1763 = vmin.f32 %v1755, 0.5
      %v1764 = vmin.f32 %v1756, 0.5
      %v1765 = vmin.f32 %v1757, 0.5
      %v1766 = vsub.f32 %v1742, %v1758
      %v1767 = vsub.f32 %v1743, %v1759
      %v1768 = vsub.f32 %v1744, %v1760
      %v1769 = vsub.f32 %v1745, %v1761
      %v1770 = vsub.f32 %v1746, %v1762
      %v1771 = vsub.f32 %v1747, %v1763
      %v1772 = vsub.f32 %v1748, %v1764
      %v1773 = vsub.f32 %v1749, %v1765
      %1774 = vrot.lane.b32.xlu0 %v1443, 16
      %v1775 = vpop.permute.xlu0 %1774
      %1776 = vrot.lane.b32.xlu0 %v1445, 16
      %v1777 = vpop.permute.xlu0 %1776
      %1778 = vrot.lane.b32.xlu0 %v1448, 16
      %v1779 = vpop.permute.xlu0 %1778
      %1780 = vrot.lane.b32.xlu0 %v1450, 16
      %v1781 = vpop.permute.xlu0 %1780
      %1782 = vrot.lane.b32.xlu0 %v1462, 16
      %v1783 = vpop.permute.xlu0 %1782
      %1784 = vrot.lane.b32.xlu0 %v1464, 16
      %v1785 = vpop.permute.xlu0 %1784
      %1786 = vrot.lane.b32.xlu0 %v1467, 16
      %v1787 = vpop.permute.xlu0 %1786
      %1788 = vrot.lane.b32.xlu0 %v1469, 16
      %v1789 = vpop.permute.xlu0 %1788
      %1806 = vrot.lane.b32.xlu0 %v1513, 32
      %v1807 = vpop.permute.xlu0 %1806
      %1808 = vrot.lane.b32.xlu0 %v1515, 32
      %v1809 = vpop.permute.xlu0 %1808
      %1810 = vrot.lane.b32.xlu0 %v1518, 32
      %v1811 = vpop.permute.xlu0 %1810
      %1812 = vrot.lane.b32.xlu0 %v1520, 32
      %v1813 = vpop.permute.xlu0 %1812
      %1814 = vrot.lane.b32.xlu0 %v1532, 32
      %v1815 = vpop.permute.xlu0 %1814
      %1816 = vrot.lane.b32.xlu0 %v1534, 32
      %v1817 = vpop.permute.xlu0 %1816
      %1818 = vrot.lane.b32.xlu0 %v1537, 32
      %v1819 = vpop.permute.xlu0 %1818
      %1820 = vrot.lane.b32.xlu0 %v1539, 32
      %v1821 = vpop.permute.xlu0 %1820
      %v1830 = vsel %vm1613, %v1373, %v1775
      %v1831 = vsel %vm1613, %v1375, %v1777
      %v1832 = vsel %vm1613, %v1378, %v1779
      %v1833 = vsel %vm1613, %v1380, %v1781
      %v1834 = vsel %vm1613, %v1392, %v1783
      %v1835 = vsel %vm1613, %v1394, %v1785
      %v1836 = vsel %vm1613, %v1397, %v1787
      %v1837 = vsel %vm1613, %v1399, %v1789
      %v1838 = vsel %vm1622, %v1830, %v1807
      %v1839 = vsel %vm1622, %v1831, %v1809
      %v1840 = vsel %vm1622, %v1832, %v1811
      %v1841 = vsel %vm1622, %v1833, %v1813
      %v1842 = vsel %vm1622, %v1834, %v1815
      %v1843 = vsel %vm1622, %v1835, %v1817
      %v1844 = vsel %vm1622, %v1836, %v1819
      %v1845 = vsel %vm1622, %v1837, %v1821
      %v1846 = vpack.c.bf16 %v1838, %v1838
      %v1847 = vpack.c.bf16 %v1839, %v1839
      %v1848 = vpack.c.bf16 %v1840, %v1840
      %v1849 = vpack.c.bf16 %v1841, %v1841
      %v1850 = vpack.c.bf16 %v1842, %v1842
      %v1851 = vpack.c.bf16 %v1843, %v1843
      %v1852 = vpack.c.bf16 %v1844, %v1844
      %v1853 = vpack.c.bf16 %v1845, %v1845
      %v1858 = vunpack.c.l.b16 %v1846
      %v1859 = vunpack.c.l.b16 %v1847
      %v1860 = vunpack.c.l.b16 %v1848
      %v1861 = vunpack.c.l.b16 %v1849
      %v1862 = vpack.c.b16 %v1859, %v1858
      %v1863 = vpack.c.b16 %v1861, %v1860
      %v1865 = vsel %vm1667, %v1862, 0
      %v1868 = vsel %vm1667, %v1863, 0
      %1870 = vmatpush.bf16.msra.mxu0 0
      %1871 = vmatpush.bf16.msra.mxu0 0
      %1872 = vmatpush.bf16.msra.mxu0 0
      %1873 = vmatpush.bf16.msra.mxu0 0
      %1874 = vmatpush.bf16.msra.mxu0 0
      %1875 = vmatpush.bf16.msra.mxu0 %v1663
      %1876 = vmatpush.bf16.msra.mxu0 %v1662
      %1877 = vmatpush.bf16.msra.mxu0 %v1661
      %1878 = vmatmul.bf16.gmra.mxu0 %v1865
      %v1879 = vpop.f32.mrf.mxu0
      %v1880 = vadd.f32 0.0, %v1879
      %v1881 = vpop.f32.mrf.mxu0
      %v1882 = vadd.f32 0.0, %v1881
      %1883 = vmatmul.bf16.gmra.mxu0 %v1868
      %v1884 = vpop.f32.mrf.mxu0
      %v1885 = vadd.f32 0.0, %v1884
      %v1886 = vpop.f32.mrf.mxu0
      %v1887 = vadd.f32 0.0, %v1886
      %1888 = vdwg.mxu0
      %v1893 = vunpack.c.l.b16 %v1850
      %v1894 = vunpack.c.l.b16 %v1851
      %v1895 = vunpack.c.l.b16 %v1852
      %v1896 = vunpack.c.l.b16 %v1853
      %v1897 = vpack.c.b16 %v1894, %v1893
      %v1898 = vpack.c.b16 %v1896, %v1895
      %v1900 = vsel %vm1667, %v1897, 0
      %v1903 = vsel %vm1667, %v1898, 0
      %1905 = vmatpush.bf16.msra.mxu0 0
      %1906 = vmatpush.bf16.msra.mxu0 0
      %1907 = vmatpush.bf16.msra.mxu0 0
      %1908 = vmatpush.bf16.msra.mxu0 0
      %1909 = vmatpush.bf16.msra.mxu0 0
      %1910 = vmatpush.bf16.msra.mxu0 %v1663
      %1911 = vmatpush.bf16.msra.mxu0 %v1662
      %1912 = vmatpush.bf16.msra.mxu0 %v1661
      %1913 = vmatmul.bf16.gmra.mxu0 %v1900
      %v1914 = vpop.f32.mrf.mxu0
      %v1915 = vadd.f32 0.0, %v1914
      %v1916 = vpop.f32.mrf.mxu0
      %v1917 = vadd.f32 0.0, %v1916
      %1918 = vmatmul.bf16.gmra.mxu0 %v1903
      %v1919 = vpop.f32.mrf.mxu0
      %v1920 = vadd.f32 0.0, %v1919
      %v1921 = vpop.f32.mrf.mxu0
      %v1922 = vadd.f32 0.0, %v1921
      %1923 = vdwg.mxu0
      %v1924 = vmul.f32 %v1880, %v1729
      %v1925 = vmul.f32 %v1882, %v1729
      %v1926 = vmul.f32 %v1885, %v1729
      %v1927 = vmul.f32 %v1887, %v1729
      %v1928 = vmul.f32 %v1915, %v1729
      %v1929 = vmul.f32 %v1917, %v1729
      %v1930 = vmul.f32 %v1920, %v1729
      %v1931 = vmul.f32 %v1922, %v1729
      %v1932 = vadd.f32 %v1924, %v1740
      %v1933 = vadd.f32 %v1925, %v1740
      %v1934 = vadd.f32 %v1926, %v1740
      %v1935 = vadd.f32 %v1927, %v1740
      %v1936 = vadd.f32 %v1928, %v1740
      %v1937 = vadd.f32 %v1929, %v1740
      %v1938 = vadd.f32 %v1930, %v1740
      %v1939 = vadd.f32 %v1931, %v1740
      %v1940 = vmax.f32 %v1932, -0.5
      %v1941 = vmax.f32 %v1933, -0.5
      %v1942 = vmax.f32 %v1934, -0.5
      %v1943 = vmax.f32 %v1935, -0.5
      %v1944 = vmax.f32 %v1936, -0.5
      %v1945 = vmax.f32 %v1937, -0.5
      %v1946 = vmax.f32 %v1938, -0.5
      %v1947 = vmax.f32 %v1939, -0.5
      %v1948 = vmin.f32 %v1940, 0.5
      %v1949 = vmin.f32 %v1941, 0.5
      %v1950 = vmin.f32 %v1942, 0.5
      %v1951 = vmin.f32 %v1943, 0.5
      %v1952 = vmin.f32 %v1944, 0.5
      %v1953 = vmin.f32 %v1945, 0.5
      %v1954 = vmin.f32 %v1946, 0.5
      %v1955 = vmin.f32 %v1947, 0.5
      %v1956 = vsub.f32 %v1932, %v1948
      %v1957 = vsub.f32 %v1933, %v1949
      %v1958 = vsub.f32 %v1934, %v1950
      %v1959 = vsub.f32 %v1935, %v1951
      %v1960 = vsub.f32 %v1936, %v1952
      %v1961 = vsub.f32 %v1937, %v1953
      %v1962 = vsub.f32 %v1938, %v1954
      %v1963 = vsub.f32 %v1939, %v1955
      %v1964 = vmax.f32 %v1766, %v1956
      %v1965 = vmax.f32 %v1767, %v1957
      %v1966 = vmax.f32 %v1768, %v1958
      %v1967 = vmax.f32 %v1769, %v1959
      %v1968 = vmax.f32 %v1770, %v1960
      %v1969 = vmax.f32 %v1771, %v1961
      %v1970 = vmax.f32 %v1772, %v1962
      %v1971 = vmax.f32 %v1773, %v1963
      %v1972 = vpack.c.bf16 %v1964, %v1964
      %v1973 = vpack.c.bf16 %v1965, %v1965
      %v1974 = vpack.c.bf16 %v1966, %v1966
      %v1975 = vpack.c.bf16 %v1967, %v1967
      %v1976 = vpack.c.bf16 %v1968, %v1968
      %v1977 = vpack.c.bf16 %v1969, %v1969
      %v1978 = vpack.c.bf16 %v1970, %v1970
      %v1979 = vpack.c.bf16 %v1971, %v1971
      %v1984 = vunpack.c.l.b16 %v1972
      %v1985 = vunpack.c.l.b16 %v1973
      %v1986 = vunpack.c.l.b16 %v1974
      %v1987 = vunpack.c.l.b16 %v1975
      %v1988 = vpack.c.b16 %v1985, %v1984
      %v1989 = vpack.c.b16 %v1987, %v1986
      %vm1991 = vcmask 244736
      %v1992 = vsel %vm1991, %v1235, 0
      %vm1994 = vcmask 1046528
      %v1996 = vsel %vm1994, %v1989, 0
      %1998 = vmatpush.bf16.msra.mxu0 0
      %1999 = vmatpush.bf16.msra.mxu0 0
      %2000 = vmatpush.bf16.msra.mxu0 0
      %2001 = vmatpush.bf16.msra.mxu0 0
      %2002 = vmatpush.bf16.msra.mxu0 0
      %2003 = vmatpush.bf16.msra.mxu0 0
      %2004 = vmatpush.bf16.msra.mxu0 %v1996
      %2005 = vmatpush.bf16.msra.mxu0 %v1988
      %2006 = vmatmul.bf16.gmra.mxu0 %v1992
      %v2007 = vpop.f32.mrf.mxu0
      %v2008 = vadd.f32 0.0, %v2007
      %v2009 = vpop.f32.mrf.mxu0
      %v2010 = vadd.f32 0.0, %v2009
      %2011 = vdwg.mxu0
      %v2016 = vunpack.c.l.b16 %v1976
      %v2017 = vunpack.c.l.b16 %v1977
      %v2018 = vunpack.c.l.b16 %v1978
      %v2019 = vunpack.c.l.b16 %v1979
      %v2020 = vpack.c.b16 %v2017, %v2016
      %v2021 = vpack.c.b16 %v2019, %v2018
      %v2024 = vsel %vm1994, %v2021, 0
      %2026 = vmatpush.bf16.msra.mxu0 0
      %2027 = vmatpush.bf16.msra.mxu0 0
      %2028 = vmatpush.bf16.msra.mxu0 0
      %2029 = vmatpush.bf16.msra.mxu0 0
      %2030 = vmatpush.bf16.msra.mxu0 0
      %2031 = vmatpush.bf16.msra.mxu0 0
      %2032 = vmatpush.bf16.msra.mxu0 %v2024
      %2033 = vmatpush.bf16.msra.mxu0 %v2020
      %2034 = vmatmul.bf16.gmra.mxu0 %v1992
      %v2035 = vpop.f32.mrf.mxu0
      %v2036 = vadd.f32 0.0, %v2035
      %v2037 = vpop.f32.mrf.mxu0
      %v2038 = vadd.f32 0.0, %v2037
      %2039 = vdwg.mxu0
      %v2040 = vsel %vm1991, %v1355, 0
      %2042 = vmatpush.bf16.msra.mxu0 0
      %2043 = vmatpush.bf16.msra.mxu0 0
      %2044 = vmatpush.bf16.msra.mxu0 0
      %2045 = vmatpush.bf16.msra.mxu0 0
      %2046 = vmatpush.bf16.msra.mxu0 0
      %2047 = vmatpush.bf16.msra.mxu0 0
      %2048 = vmatpush.bf16.msra.mxu0 %v1996
      %2049 = vmatpush.bf16.msra.mxu0 %v1988
      %2050 = vmatmul.bf16.gmra.mxu0 %v2040
      %v2051 = vpop.f32.mrf.mxu0
      %v2052 = vadd.f32 0.0, %v2051
      %v2053 = vpop.f32.mrf.mxu0
      %v2054 = vadd.f32 0.0, %v2053
      %2055 = vdwg.mxu0
      %2056 = vmatpush.bf16.msra.mxu0 0
      %2057 = vmatpush.bf16.msra.mxu0 0
      %2058 = vmatpush.bf16.msra.mxu0 0
      %2059 = vmatpush.bf16.msra.mxu0 0
      %2060 = vmatpush.bf16.msra.mxu0 0
      %2061 = vmatpush.bf16.msra.mxu0 0
      %2062 = vmatpush.bf16.msra.mxu0 %v2024
      %2063 = vmatpush.bf16.msra.mxu0 %v2020
      %2064 = vmatmul.bf16.gmra.mxu0 %v2040
      %v2065 = vpop.f32.mrf.mxu0
      %v2066 = vadd.f32 0.0, %v2065
      %v2067 = vpop.f32.mrf.mxu0
      %v2068 = vadd.f32 0.0, %v2067
      %2069 = vdwg.mxu0
      %v2070 = vsel %vm1991, %v1425, 0
      %2072 = vmatpush.bf16.msra.mxu0 0
      %2073 = vmatpush.bf16.msra.mxu0 0
      %2074 = vmatpush.bf16.msra.mxu0 0
      %2075 = vmatpush.bf16.msra.mxu0 0
      %2076 = vmatpush.bf16.msra.mxu0 0
      %2077 = vmatpush.bf16.msra.mxu0 0
      %2078 = vmatpush.bf16.msra.mxu0 %v1996
      %2079 = vmatpush.bf16.msra.mxu0 %v1988
      %2080 = vmatmul.bf16.gmra.mxu0 %v2070
      %v2081 = vpop.f32.mrf.mxu0
      %v2082 = vadd.f32 0.0, %v2081
      %v2083 = vpop.f32.mrf.mxu0
      %v2084 = vadd.f32 0.0, %v2083
      %2085 = vdwg.mxu0
      %2086 = vmatpush.bf16.msra.mxu0 0
      %2087 = vmatpush.bf16.msra.mxu0 0
      %2088 = vmatpush.bf16.msra.mxu0 0
      %2089 = vmatpush.bf16.msra.mxu0 0
      %2090 = vmatpush.bf16.msra.mxu0 0
      %2091 = vmatpush.bf16.msra.mxu0 0
      %2092 = vmatpush.bf16.msra.mxu0 %v2024
      %2093 = vmatpush.bf16.msra.mxu0 %v2020
      %2094 = vmatmul.bf16.gmra.mxu0 %v2070
      %v2095 = vpop.f32.mrf.mxu0
      %v2096 = vadd.f32 0.0, %v2095
      %v2097 = vpop.f32.mrf.mxu0
      %v2098 = vadd.f32 0.0, %v2097
      %2099 = vdwg.mxu0
      %v2100 = vsel %vm1991, %v1495, 0
      %2102 = vmatpush.bf16.msra.mxu0 0
      %2103 = vmatpush.bf16.msra.mxu0 0
      %2104 = vmatpush.bf16.msra.mxu0 0
      %2105 = vmatpush.bf16.msra.mxu0 0
      %2106 = vmatpush.bf16.msra.mxu0 0
      %2107 = vmatpush.bf16.msra.mxu0 0
      %2108 = vmatpush.bf16.msra.mxu0 %v1996
      %2109 = vmatpush.bf16.msra.mxu0 %v1988
      %2110 = vmatmul.bf16.gmra.mxu0 %v2100
      %v2111 = vpop.f32.mrf.mxu0
      %v2112 = vadd.f32 0.0, %v2111
      %v2113 = vpop.f32.mrf.mxu0
      %v2114 = vadd.f32 0.0, %v2113
      %2115 = vdwg.mxu0
      %2116 = vmatpush.bf16.msra.mxu0 0
      %2117 = vmatpush.bf16.msra.mxu0 0
      %2118 = vmatpush.bf16.msra.mxu0 0
      %2119 = vmatpush.bf16.msra.mxu0 0
      %2120 = vmatpush.bf16.msra.mxu0 0
      %2121 = vmatpush.bf16.msra.mxu0 0
      %2122 = vmatpush.bf16.msra.mxu0 %v2024
      %2123 = vmatpush.bf16.msra.mxu0 %v2020
      %2124 = vmatmul.bf16.gmra.mxu0 %v2100
      %v2125 = vpop.f32.mrf.mxu0
      %v2126 = vadd.f32 0.0, %v2125
      %v2127 = vpop.f32.mrf.mxu0
      %v2128 = vadd.f32 0.0, %v2127
      %2129 = vdwg.mxu0
      %v2130 = vld [vmem:[%s8] sm:$0xf]
      %v2131 = vld [vmem:[%s8 + $0x4] sm:$0xf]
      %v2132 = vld [vmem:[%s8 + $0x8] sm:$0xf]
      %v2133 = vld [vmem:[%s8 + $0xc] sm:$0xf]
      %v2134 = vld [vmem:[%s8 + $0x10] sm:$0xf]
      %v2135 = vld [vmem:[%s8 + $0x14] sm:$0xf]
      %v2136 = vld [vmem:[%s8 + $0x18] sm:$0xf]
      %v2137 = vld [vmem:[%s8 + $0x1c] sm:$0xf]
      %v2138 = vld [vmem:[%s8 + $0x20] sm:$0xf]
      %v2139 = vld [vmem:[%s8 + $0x24] sm:$0xf]
      %v2140 = vld [vmem:[%s8 + $0x28] sm:$0xf]
      %v2141 = vld [vmem:[%s8 + $0x2c] sm:$0xf]
      %v2142 = vld [vmem:[%s9] sm:$0x1]
      %v2143 = vld [vmem:[%s10] sm:$0x1]
      %2148 = vrot.lane.b32.xlu0 %v2052, 32
      %v2149 = vpop.permute.xlu0 %2148
      %2150 = vrot.lane.b32.xlu0 %v2054, 32
      %v2151 = vpop.permute.xlu0 %2150
      %2152 = vrot.lane.b32.xlu0 %v2066, 32
      %v2153 = vpop.permute.xlu0 %2152
      %2154 = vrot.lane.b32.xlu0 %v2068, 32
      %v2155 = vpop.permute.xlu0 %2154
      %2164 = vrot.lane.b32.xlu0 %v2082, 64
      %v2165 = vpop.permute.xlu0 %2164
      %2166 = vrot.lane.b32.xlu0 %v2084, 64
      %v2167 = vpop.permute.xlu0 %2166
      %2168 = vrot.lane.b32.xlu0 %v2096, 64
      %v2169 = vpop.permute.xlu0 %2168
      %2170 = vrot.lane.b32.xlu0 %v2098, 64
      %v2171 = vpop.permute.xlu0 %2170
      %v2176 = vsel %vm1622, %v2008, %v2149
      %v2177 = vsel %vm1622, %v2010, %v2151
      %v2178 = vsel %vm1622, %v2036, %v2153
      %v2179 = vsel %vm1622, %v2038, %v2155
      %v2180 = vsel %vm761, %v2176, %v2165
      %v2181 = vsel %vm761, %v2177, %v2167
      %v2182 = vsel %vm761, %v2178, %v2169
      %v2183 = vsel %vm761, %v2179, %v2171
      %v2184 = vpack.c.bf16 %v2180, %v2180
      %v2185 = vpack.c.bf16 %v2181, %v2181
      %v2186 = vpack.c.bf16 %v2182, %v2182
      %v2187 = vpack.c.bf16 %v2183, %v2183
      %v2190 = vunpack.c.l.b16 %v2184
      %v2191 = vunpack.c.l.b16 %v2185
      %v2192 = vpack.c.b16 %v2191, %v2190
      %v2205 = vunpack.c.l.b16 %v2130
      %v2206 = vunpack.c.l.b16 %v2131
      %v2207 = vunpack.c.l.b16 %v2132
      %v2208 = vunpack.c.l.b16 %v2133
      %v2209 = vunpack.c.l.b16 %v2134
      %v2210 = vunpack.c.l.b16 %v2135
      %v2211 = vunpack.c.l.b16 %v2136
      %v2212 = vunpack.c.l.b16 %v2137
      %v2213 = vunpack.c.l.b16 %v2138
      %v2214 = vunpack.c.l.b16 %v2139
      %v2215 = vunpack.c.l.b16 %v2140
      %v2216 = vunpack.c.l.b16 %v2141
      %v2217 = vpack.c.b16 %v2206, %v2205
      %v2218 = vpack.c.b16 %v2208, %v2207
      %v2219 = vpack.c.b16 %v2210, %v2209
      %v2220 = vpack.c.b16 %v2212, %v2211
      %v2221 = vpack.c.b16 %v2214, %v2213
      %v2222 = vpack.c.b16 %v2216, %v2215
      %vm2229 = vcmask 785408
      %v2231 = vsel %vm2229, %v2192, 0
      %2233 = vmatpush.bf16.msra.mxu0 0
      %2234 = vmatpush.bf16.msra.mxu0 0
      %2235 = vmatpush.bf16.msra.mxu0 %v2222
      %2236 = vmatpush.bf16.msra.mxu0 %v2221
      %2237 = vmatpush.bf16.msra.mxu0 %v2220
      %2238 = vmatpush.bf16.msra.mxu0 %v2219
      %2239 = vmatpush.bf16.msra.mxu0 %v2218
      %2240 = vmatpush.bf16.msra.mxu0 %v2217
      %2241 = vmatmul.bf16.gmra.mxu0 %v2231
      %v2242 = vpop.f32.mrf.mxu0
      %v2243 = vadd.f32 0.0, %v2242
      %v2244 = vpop.f32.mrf.mxu0
      %v2245 = vadd.f32 0.0, %v2244
      %2246 = vdwg.mxu0
      %v2249 = vunpack.c.l.b16 %v2186
      %v2250 = vunpack.c.l.b16 %v2187
      %v2251 = vpack.c.b16 %v2250, %v2249
      %v2253 = vsel %vm2229, %v2251, 0
      %2255 = vmatpush.bf16.msra.mxu0 0
      %2256 = vmatpush.bf16.msra.mxu0 0
      %2257 = vmatpush.bf16.msra.mxu0 %v2222
      %2258 = vmatpush.bf16.msra.mxu0 %v2221
      %2259 = vmatpush.bf16.msra.mxu0 %v2220
      %2260 = vmatpush.bf16.msra.mxu0 %v2219
      %2261 = vmatpush.bf16.msra.mxu0 %v2218
      %2262 = vmatpush.bf16.msra.mxu0 %v2217
      %2263 = vmatmul.bf16.gmra.mxu0 %v2253
      %v2264 = vpop.f32.mrf.mxu0
      %v2265 = vadd.f32 0.0, %v2264
      %v2266 = vpop.f32.mrf.mxu0
      %v2267 = vadd.f32 0.0, %v2266
      %2268 = vdwg.mxu0
      %v2270 = vperm.slane %v2142, 0
      %v2272 = vmul.f32 %v2243, %v2270
      %v2273 = vmul.f32 %v2245, %v2270
      %v2274 = vmul.f32 %v2265, %v2270
      %v2275 = vmul.f32 %v2267, %v2270
      %v2277 = vperm.slane %v2143, 0
      %v2279 = vadd.f32 %v2272, %v2277
      %v2280 = vadd.f32 %v2273, %v2277
      %v2281 = vadd.f32 %v2274, %v2277
      %v2282 = vadd.f32 %v2275, %v2277
      %v2283 = vmax.f32 %v2279, -0.5
      %v2284 = vmax.f32 %v2280, -0.5
      %v2285 = vmax.f32 %v2281, -0.5
      %v2286 = vmax.f32 %v2282, -0.5
      %v2287 = vmin.f32 %v2283, 0.5
      %v2288 = vmin.f32 %v2284, 0.5
      %v2289 = vmin.f32 %v2285, 0.5
      %v2290 = vmin.f32 %v2286, 0.5
      %v2291 = vsub.f32 %v2279, %v2287
      %v2292 = vsub.f32 %v2280, %v2288
      %v2293 = vsub.f32 %v2281, %v2289
      %v2294 = vsub.f32 %v2282, %v2290
      %2295 = vrot.lane.b32.xlu0 %v2082, 32
      %v2296 = vpop.permute.xlu0 %2295
      %2297 = vrot.lane.b32.xlu0 %v2084, 32
      %v2298 = vpop.permute.xlu0 %2297
      %2299 = vrot.lane.b32.xlu0 %v2096, 32
      %v2300 = vpop.permute.xlu0 %2299
      %2301 = vrot.lane.b32.xlu0 %v2098, 32
      %v2302 = vpop.permute.xlu0 %2301
      %2311 = vrot.lane.b32.xlu0 %v2112, 64
      %v2312 = vpop.permute.xlu0 %2311
      %2313 = vrot.lane.b32.xlu0 %v2114, 64
      %v2314 = vpop.permute.xlu0 %2313
      %2315 = vrot.lane.b32.xlu0 %v2126, 64
      %v2316 = vpop.permute.xlu0 %2315
      %2317 = vrot.lane.b32.xlu0 %v2128, 64
      %v2318 = vpop.permute.xlu0 %2317
      %v2323 = vsel %vm1622, %v2052, %v2296
      %v2324 = vsel %vm1622, %v2054, %v2298
      %v2325 = vsel %vm1622, %v2066, %v2300
      %v2326 = vsel %vm1622, %v2068, %v2302
      %v2327 = vsel %vm761, %v2323, %v2312
      %v2328 = vsel %vm761, %v2324, %v2314
      %v2329 = vsel %vm761, %v2325, %v2316
      %v2330 = vsel %vm761, %v2326, %v2318
      %v2331 = vpack.c.bf16 %v2327, %v2327
      %v2332 = vpack.c.bf16 %v2328, %v2328
      %v2333 = vpack.c.bf16 %v2329, %v2329
      %v2334 = vpack.c.bf16 %v2330, %v2330
      %v2337 = vunpack.c.l.b16 %v2331
      %v2338 = vunpack.c.l.b16 %v2332
      %v2339 = vpack.c.b16 %v2338, %v2337
      %v2341 = vsel %vm2229, %v2339, 0
      %2343 = vmatpush.bf16.msra.mxu0 0
      %2344 = vmatpush.bf16.msra.mxu0 0
      %2345 = vmatpush.bf16.msra.mxu0 %v2222
      %2346 = vmatpush.bf16.msra.mxu0 %v2221
      %2347 = vmatpush.bf16.msra.mxu0 %v2220
      %2348 = vmatpush.bf16.msra.mxu0 %v2219
      %2349 = vmatpush.bf16.msra.mxu0 %v2218
      %2350 = vmatpush.bf16.msra.mxu0 %v2217
      %2351 = vmatmul.bf16.gmra.mxu0 %v2341
      %v2352 = vpop.f32.mrf.mxu0
      %v2353 = vadd.f32 0.0, %v2352
      %v2354 = vpop.f32.mrf.mxu0
      %v2355 = vadd.f32 0.0, %v2354
      %2356 = vdwg.mxu0
      %v2359 = vunpack.c.l.b16 %v2333
      %v2360 = vunpack.c.l.b16 %v2334
      %v2361 = vpack.c.b16 %v2360, %v2359
      %v2363 = vsel %vm2229, %v2361, 0
      %2365 = vmatpush.bf16.msra.mxu0 0
      %2366 = vmatpush.bf16.msra.mxu0 0
      %2367 = vmatpush.bf16.msra.mxu0 %v2222
      %2368 = vmatpush.bf16.msra.mxu0 %v2221
      %2369 = vmatpush.bf16.msra.mxu0 %v2220
      %2370 = vmatpush.bf16.msra.mxu0 %v2219
      %2371 = vmatpush.bf16.msra.mxu0 %v2218
      %2372 = vmatpush.bf16.msra.mxu0 %v2217
      %2373 = vmatmul.bf16.gmra.mxu0 %v2363
      %v2374 = vpop.f32.mrf.mxu0
      %v2375 = vadd.f32 0.0, %v2374
      %v2376 = vpop.f32.mrf.mxu0
      %v2377 = vadd.f32 0.0, %v2376
      %2378 = vdwg.mxu0
      %v2379 = vmul.f32 %v2353, %v2270
      %v2380 = vmul.f32 %v2355, %v2270
      %v2381 = vmul.f32 %v2375, %v2270
      %v2382 = vmul.f32 %v2377, %v2270
      %v2383 = vadd.f32 %v2379, %v2277
      %v2384 = vadd.f32 %v2380, %v2277
      %v2385 = vadd.f32 %v2381, %v2277
      %v2386 = vadd.f32 %v2382, %v2277
      %v2387 = vmax.f32 %v2383, -0.5
      %v2388 = vmax.f32 %v2384, -0.5
      %v2389 = vmax.f32 %v2385, -0.5
      %v2390 = vmax.f32 %v2386, -0.5
      %v2391 = vmin.f32 %v2387, 0.5
      %v2392 = vmin.f32 %v2388, 0.5
      %v2393 = vmin.f32 %v2389, 0.5
      %v2394 = vmin.f32 %v2390, 0.5
      %v2395 = vsub.f32 %v2383, %v2391
      %v2396 = vsub.f32 %v2384, %v2392
      %v2397 = vsub.f32 %v2385, %v2393
      %v2398 = vsub.f32 %v2386, %v2394
      %v2399 = vmax.f32 %v2291, %v2395
      %v2400 = vmax.f32 %v2292, %v2396
      %v2401 = vmax.f32 %v2293, %v2397
      %v2402 = vmax.f32 %v2294, %v2398
      %v2403 = vpack.c.bf16 %v2399, %v2399
      %v2404 = vpack.c.bf16 %v2400, %v2400
      %v2405 = vpack.c.bf16 %v2401, %v2401
      %v2406 = vpack.c.bf16 %v2402, %v2402
      %v2409 = vunpack.c.l.b16 %v2403
      %v2410 = vunpack.c.l.b16 %v2404
      %v2411 = vpack.c.b16 %v2410, %v2409
      %vm2412 = vcmask 121856
      %v2414 = vsel %vm2412, %v1223, 0
      %vm2416 = vcmask 1047552
      %v2417 = vsel %vm1994, 4294967295, 65535
      %v2418 = vsel %vm2416, %v2417, 0
      %v2420 = vand.u32 %v2411, %v2418
      %2422 = vmatpush.bf16.msra.mxu0 0
      %2423 = vmatpush.bf16.msra.mxu0 0
      %2424 = vmatpush.bf16.msra.mxu0 0
      %2425 = vmatpush.bf16.msra.mxu0 0
      %2426 = vmatpush.bf16.msra.mxu0 0
      %2427 = vmatpush.bf16.msra.mxu0 0
      %2428 = vmatpush.bf16.msra.mxu0 0
      %2429 = vmatpush.bf16.msra.mxu0 %v2420
      %2430 = vmatmul.bf16.gmra.mxu0 %v2414
      %v2431 = vpop.f32.mrf.mxu0
      %v2432 = vadd.f32 0.0, %v2431
      %v2433 = vpop.f32.mrf.mxu0
      %2434 = vdwg.mxu0
      %v2437 = vunpack.c.l.b16 %v2405
      %v2438 = vunpack.c.l.b16 %v2406
      %v2439 = vpack.c.b16 %v2438, %v2437
      %v2441 = vand.u32 %v2439, %v2418
      %2443 = vmatpush.bf16.msra.mxu0 0
      %2444 = vmatpush.bf16.msra.mxu0 0
      %2445 = vmatpush.bf16.msra.mxu0 0
      %2446 = vmatpush.bf16.msra.mxu0 0
      %2447 = vmatpush.bf16.msra.mxu0 0
      %2448 = vmatpush.bf16.msra.mxu0 0
      %2449 = vmatpush.bf16.msra.mxu0 0
      %2450 = vmatpush.bf16.msra.mxu0 %v2441
      %2451 = vmatmul.bf16.gmra.mxu0 %v2414
      %v2452 = vpop.f32.mrf.mxu0
      %v2453 = vadd.f32 0.0, %v2452
      %v2454 = vpop.f32.mrf.mxu0
      %2455 = vdwg.mxu0
      %v2457 = vsel %vm2412, %v1343, 0
      %2459 = vmatpush.bf16.msra.mxu0 0
      %2460 = vmatpush.bf16.msra.mxu0 0
      %2461 = vmatpush.bf16.msra.mxu0 0
      %2462 = vmatpush.bf16.msra.mxu0 0
      %2463 = vmatpush.bf16.msra.mxu0 0
      %2464 = vmatpush.bf16.msra.mxu0 0
      %2465 = vmatpush.bf16.msra.mxu0 0
      %2466 = vmatpush.bf16.msra.mxu0 %v2420
      %2467 = vmatmul.bf16.gmra.mxu0 %v2457
      %v2468 = vpop.f32.mrf.mxu0
      %v2469 = vadd.f32 0.0, %v2468
      %v2470 = vpop.f32.mrf.mxu0
      %2471 = vdwg.mxu0
      %2472 = vmatpush.bf16.msra.mxu0 0
      %2473 = vmatpush.bf16.msra.mxu0 0
      %2474 = vmatpush.bf16.msra.mxu0 0
      %2475 = vmatpush.bf16.msra.mxu0 0
      %2476 = vmatpush.bf16.msra.mxu0 0
      %2477 = vmatpush.bf16.msra.mxu0 0
      %2478 = vmatpush.bf16.msra.mxu0 0
      %2479 = vmatpush.bf16.msra.mxu0 %v2441
      %2480 = vmatmul.bf16.gmra.mxu0 %v2457
      %v2481 = vpop.f32.mrf.mxu0
      %v2482 = vadd.f32 0.0, %v2481
      %v2483 = vpop.f32.mrf.mxu0
      %2484 = vdwg.mxu0
      %v2486 = vsel %vm2412, %v1413, 0
      %2488 = vmatpush.bf16.msra.mxu0 0
      %2489 = vmatpush.bf16.msra.mxu0 0
      %2490 = vmatpush.bf16.msra.mxu0 0
      %2491 = vmatpush.bf16.msra.mxu0 0
      %2492 = vmatpush.bf16.msra.mxu0 0
      %2493 = vmatpush.bf16.msra.mxu0 0
      %2494 = vmatpush.bf16.msra.mxu0 0
      %2495 = vmatpush.bf16.msra.mxu0 %v2420
      %2496 = vmatmul.bf16.gmra.mxu0 %v2486
      %v2497 = vpop.f32.mrf.mxu0
      %v2498 = vadd.f32 0.0, %v2497
      %v2499 = vpop.f32.mrf.mxu0
      %2500 = vdwg.mxu0
      %2501 = vmatpush.bf16.msra.mxu0 0
      %2502 = vmatpush.bf16.msra.mxu0 0
      %2503 = vmatpush.bf16.msra.mxu0 0
      %2504 = vmatpush.bf16.msra.mxu0 0
      %2505 = vmatpush.bf16.msra.mxu0 0
      %2506 = vmatpush.bf16.msra.mxu0 0
      %2507 = vmatpush.bf16.msra.mxu0 0
      %2508 = vmatpush.bf16.msra.mxu0 %v2441
      %2509 = vmatmul.bf16.gmra.mxu0 %v2486
      %v2510 = vpop.f32.mrf.mxu0
      %v2511 = vadd.f32 0.0, %v2510
      %v2512 = vpop.f32.mrf.mxu0
      %2513 = vdwg.mxu0
      %v2515 = vsel %vm2412, %v1483, 0
      %2517 = vmatpush.bf16.msra.mxu0 0
      %2518 = vmatpush.bf16.msra.mxu0 0
      %2519 = vmatpush.bf16.msra.mxu0 0
      %2520 = vmatpush.bf16.msra.mxu0 0
      %2521 = vmatpush.bf16.msra.mxu0 0
      %2522 = vmatpush.bf16.msra.mxu0 0
      %2523 = vmatpush.bf16.msra.mxu0 0
      %2524 = vmatpush.bf16.msra.mxu0 %v2420
      %2525 = vmatmul.bf16.gmra.mxu0 %v2515
      %v2526 = vpop.f32.mrf.mxu0
      %v2527 = vadd.f32 0.0, %v2526
      %v2528 = vpop.f32.mrf.mxu0
      %2529 = vdwg.mxu0
      %2530 = vmatpush.bf16.msra.mxu0 0
      %2531 = vmatpush.bf16.msra.mxu0 0
      %2532 = vmatpush.bf16.msra.mxu0 0
      %2533 = vmatpush.bf16.msra.mxu0 0
      %2534 = vmatpush.bf16.msra.mxu0 0
      %2535 = vmatpush.bf16.msra.mxu0 0
      %2536 = vmatpush.bf16.msra.mxu0 0
      %2537 = vmatpush.bf16.msra.mxu0 %v2441
      %2538 = vmatmul.bf16.gmra.mxu0 %v2515
      %v2539 = vpop.f32.mrf.mxu0
      %v2540 = vadd.f32 0.0, %v2539
      %v2541 = vpop.f32.mrf.mxu0
      %2542 = vdwg.mxu0
      %v2543 = vld [vmem:[%s11] sm:$0xf]
      %v2544 = vld [vmem:[%s11 + $0x4] sm:$0xf]
      %v2545 = vld [vmem:[%s11 + $0x8] sm:$0xf]
      %v2546 = vld [vmem:[%s11 + $0xc] sm:$0xf]
      %v2547 = vld [vmem:[%s11 + $0x10] sm:$0xf]
      %v2548 = vld [vmem:[%s11 + $0x14] sm:$0xf]
      %v2549 = vld [vmem:[%s11 + $0x18] sm:$0xf]
      %v2550 = vld [vmem:[%s11 + $0x1c] sm:$0xf]
      %v2551 = vld [vmem:[%s11 + $0x20] sm:$0xf]
      %v2552 = vld [vmem:[%s11 + $0x24] sm:$0xf]
      %v2553 = vld [vmem:[%s11 + $0x28] sm:$0xf]
      %v2554 = vld [vmem:[%s11 + $0x2c] sm:$0xf]
      %v2555 = vld [vmem:[%s11 + $0x30] sm:$0xf]
      %v2556 = vld [vmem:[%s11 + $0x34] sm:$0xf]
      %v2557 = vld [vmem:[%s11 + $0x38] sm:$0xf]
      %v2558 = vld [vmem:[%s11 + $0x3c] sm:$0xf]
      %v2559 = vld [vmem:[%s11 + $0x40] sm:$0xf]
      %v2560 = vld [vmem:[%s11 + $0x44] sm:$0xf]
      %v2561 = vld [vmem:[%s11 + $0x48] sm:$0xf]
      %v2562 = vld [vmem:[%s11 + $0x4c] sm:$0xf]
      %v2563 = vld [vmem:[%s11 + $0x50] sm:$0xf]
      %v2564 = vld [vmem:[%s11 + $0x54] sm:$0xf]
      %v2565 = vld [vmem:[%s11 + $0x58] sm:$0xf]
      %v2566 = vld [vmem:[%s11 + $0x5c] sm:$0xf]
      %v2567 = vld [vmem:[%s12] sm:$0x1]
      %v2568 = vld [vmem:[%s13] sm:$0x1]
      %2571 = vrot.lane.b32.xlu0 %v2469, 64
      %v2572 = vpop.permute.xlu0 %2571
      %2573 = vrot.lane.b32.xlu0 %v2482, 64
      %v2574 = vpop.permute.xlu0 %2573
      %v2577 = vsel %vm761, %v2432, %v2572
      %v2578 = vsel %vm761, %v2453, %v2574
      %v2579 = vpack.c.bf16 %v2498, %v2577
      %v2580 = vpack.c.bf16 %v2511, %v2578
      %v2582 = vunpack.c.l.b16 %v2579
      %v2583 = vunpack.c.h.b16 %v2579
      %v2584 = vpack.c.b16 %v2582, %v2582
      %v2585 = vpack.c.b16 %v2583, %v2583
      %v2611 = vunpack.c.l.b16 %v2543
      %v2612 = vunpack.c.l.b16 %v2544
      %v2613 = vunpack.c.l.b16 %v2545
      %v2614 = vunpack.c.l.b16 %v2546
      %v2615 = vunpack.c.l.b16 %v2547
      %v2616 = vunpack.c.l.b16 %v2548
      %v2617 = vunpack.c.l.b16 %v2549
      %v2618 = vunpack.c.l.b16 %v2550
      %v2619 = vunpack.c.l.b16 %v2551
      %v2620 = vunpack.c.l.b16 %v2552
      %v2621 = vunpack.c.l.b16 %v2553
      %v2622 = vunpack.c.l.b16 %v2554
      %v2623 = vunpack.c.l.b16 %v2555
      %v2624 = vunpack.c.l.b16 %v2556
      %v2625 = vunpack.c.l.b16 %v2557
      %v2626 = vunpack.c.l.b16 %v2558
      %v2627 = vunpack.c.l.b16 %v2559
      %v2628 = vunpack.c.l.b16 %v2560
      %v2629 = vunpack.c.l.b16 %v2561
      %v2630 = vunpack.c.l.b16 %v2562
      %v2631 = vunpack.c.l.b16 %v2563
      %v2632 = vunpack.c.l.b16 %v2564
      %v2633 = vunpack.c.l.b16 %v2565
      %v2634 = vunpack.c.l.b16 %v2566
      %v2635 = vpack.c.b16 %v2612, %v2611
      %v2636 = vpack.c.b16 %v2614, %v2613
      %v2637 = vpack.c.b16 %v2616, %v2615
      %v2638 = vpack.c.b16 %v2618, %v2617
      %v2639 = vpack.c.b16 %v2620, %v2619
      %v2640 = vpack.c.b16 %v2622, %v2621
      %v2641 = vpack.c.b16 %v2624, %v2623
      %v2642 = vpack.c.b16 %v2626, %v2625
      %v2643 = vpack.c.b16 %v2628, %v2627
      %v2644 = vpack.c.b16 %v2630, %v2629
      %v2645 = vpack.c.b16 %v2632, %v2631
      %v2646 = vpack.c.b16 %v2634, %v2633
      %v2660 = vsel %vm761, %v2585, 0
      %2662 = vmatpush.bf16.msra.mxu0 %v2642
      %2663 = vmatpush.bf16.msra.mxu0 %v2641
      %2664 = vmatpush.bf16.msra.mxu0 %v2640
      %2665 = vmatpush.bf16.msra.mxu0 %v2639
      %2666 = vmatpush.bf16.msra.mxu0 %v2638
      %2667 = vmatpush.bf16.msra.mxu0 %v2637
      %2668 = vmatpush.bf16.msra.mxu0 %v2636
      %2669 = vmatpush.bf16.msra.mxu0 %v2635
      %2670 = vmatmul.bf16.gmra.mxu0 %v2584
      %v2671 = vpop.f32.mrf.mxu0
      %v2672 = vadd.f32 0.0, %v2671
      %v2673 = vpop.f32.mrf.mxu0
      %2674 = vdwg.mxu0
      %2675 = vmatpush.bf16.msra.mxu0 0
      %2676 = vmatpush.bf16.msra.mxu0 0
      %2677 = vmatpush.bf16.msra.mxu0 0
      %2678 = vmatpush.bf16.msra.mxu0 0
      %2679 = vmatpush.bf16.msra.mxu0 %v2646
      %2680 = vmatpush.bf16.msra.mxu0 %v2645
      %2681 = vmatpush.bf16.msra.mxu0 %v2644
      %2682 = vmatpush.bf16.msra.mxu0 %v2643
      %2683 = vmatmul.bf16.gmra.mxu0 %v2660
      %v2684 = vpop.f32.mrf.mxu0
      %v2685 = vadd.f32 %v2672, %v2684
      %v2686 = vpop.f32.mrf.mxu0
      %2687 = vdwg.mxu0
      %v2689 = vunpack.c.l.b16 %v2580
      %v2690 = vunpack.c.h.b16 %v2580
      %v2691 = vpack.c.b16 %v2689, %v2689
      %v2692 = vpack.c.b16 %v2690, %v2690
      %v2695 = vsel %vm761, %v2692, 0
      %2697 = vmatpush.bf16.msra.mxu0 %v2642
      %2698 = vmatpush.bf16.msra.mxu0 %v2641
      %2699 = vmatpush.bf16.msra.mxu0 %v2640
      %2700 = vmatpush.bf16.msra.mxu0 %v2639
      %2701 = vmatpush.bf16.msra.mxu0 %v2638
      %2702 = vmatpush.bf16.msra.mxu0 %v2637
      %2703 = vmatpush.bf16.msra.mxu0 %v2636
      %2704 = vmatpush.bf16.msra.mxu0 %v2635
      %2705 = vmatmul.bf16.gmra.mxu0 %v2691
      %v2706 = vpop.f32.mrf.mxu0
      %v2707 = vadd.f32 0.0, %v2706
      %v2708 = vpop.f32.mrf.mxu0
      %2709 = vdwg.mxu0
      %2710 = vmatpush.bf16.msra.mxu0 0
      %2711 = vmatpush.bf16.msra.mxu0 0
      %2712 = vmatpush.bf16.msra.mxu0 0
      %2713 = vmatpush.bf16.msra.mxu0 0
      %2714 = vmatpush.bf16.msra.mxu0 %v2646
      %2715 = vmatpush.bf16.msra.mxu0 %v2645
      %2716 = vmatpush.bf16.msra.mxu0 %v2644
      %2717 = vmatpush.bf16.msra.mxu0 %v2643
      %2718 = vmatmul.bf16.gmra.mxu0 %v2695
      %v2719 = vpop.f32.mrf.mxu0
      %v2720 = vadd.f32 %v2707, %v2719
      %v2721 = vpop.f32.mrf.mxu0
      %2722 = vdwg.mxu0
      %v2724 = vperm.slane %v2567, 0
      %v2726 = vmul.f32 %v2685, %v2724
      %v2727 = vmul.f32 %v2720, %v2724
      %v2729 = vperm.slane %v2568, 0
      %v2731 = vadd.f32 %v2726, %v2729
      %v2732 = vadd.f32 %v2727, %v2729
      %v2733 = vmax.f32 %v2731, -0.5
      %v2734 = vmax.f32 %v2732, -0.5
      %v2735 = vmin.f32 %v2733, 0.5
      %v2736 = vmin.f32 %v2734, 0.5
      %v2737 = vsub.f32 %v2731, %v2735
      %v2738 = vsub.f32 %v2732, %v2736
      %2741 = vrot.lane.b32.xlu0 %v2498, 64
      %v2742 = vpop.permute.xlu0 %2741
      %2743 = vrot.lane.b32.xlu0 %v2511, 64
      %v2744 = vpop.permute.xlu0 %2743
      %v2747 = vsel %vm761, %v2469, %v2742
      %v2748 = vsel %vm761, %v2482, %v2744
      %v2749 = vpack.c.bf16 %v2527, %v2747
      %v2750 = vpack.c.bf16 %v2540, %v2748
      %v2752 = vunpack.c.l.b16 %v2749
      %v2753 = vunpack.c.h.b16 %v2749
      %v2754 = vpack.c.b16 %v2752, %v2752
      %v2755 = vpack.c.b16 %v2753, %v2753
      %v2758 = vsel %vm761, %v2755, 0
      %2760 = vmatpush.bf16.msra.mxu0 %v2642
      %2761 = vmatpush.bf16.msra.mxu0 %v2641
      %2762 = vmatpush.bf16.msra.mxu0 %v2640
      %2763 = vmatpush.bf16.msra.mxu0 %v2639
      %2764 = vmatpush.bf16.msra.mxu0 %v2638
      %2765 = vmatpush.bf16.msra.mxu0 %v2637
      %2766 = vmatpush.bf16.msra.mxu0 %v2636
      %2767 = vmatpush.bf16.msra.mxu0 %v2635
      %2768 = vmatmul.bf16.gmra.mxu0 %v2754
      %v2769 = vpop.f32.mrf.mxu0
      %v2770 = vadd.f32 0.0, %v2769
      %v2771 = vpop.f32.mrf.mxu0
      %2772 = vdwg.mxu0
      %2773 = vmatpush.bf16.msra.mxu0 0
      %2774 = vmatpush.bf16.msra.mxu0 0
      %2775 = vmatpush.bf16.msra.mxu0 0
      %2776 = vmatpush.bf16.msra.mxu0 0
      %2777 = vmatpush.bf16.msra.mxu0 %v2646
      %2778 = vmatpush.bf16.msra.mxu0 %v2645
      %2779 = vmatpush.bf16.msra.mxu0 %v2644
      %2780 = vmatpush.bf16.msra.mxu0 %v2643
      %2781 = vmatmul.bf16.gmra.mxu0 %v2758
      %v2782 = vpop.f32.mrf.mxu0
      %v2783 = vadd.f32 %v2770, %v2782
      %v2784 = vpop.f32.mrf.mxu0
      %2785 = vdwg.mxu0
      %v2787 = vunpack.c.l.b16 %v2750
      %v2788 = vunpack.c.h.b16 %v2750
      %v2789 = vpack.c.b16 %v2787, %v2787
      %v2790 = vpack.c.b16 %v2788, %v2788
      %v2793 = vsel %vm761, %v2790, 0
      %2795 = vmatpush.bf16.msra.mxu0 %v2642
      %2796 = vmatpush.bf16.msra.mxu0 %v2641
      %2797 = vmatpush.bf16.msra.mxu0 %v2640
      %2798 = vmatpush.bf16.msra.mxu0 %v2639
      %2799 = vmatpush.bf16.msra.mxu0 %v2638
      %2800 = vmatpush.bf16.msra.mxu0 %v2637
      %2801 = vmatpush.bf16.msra.mxu0 %v2636
      %2802 = vmatpush.bf16.msra.mxu0 %v2635
      %2803 = vmatmul.bf16.gmra.mxu0 %v2789
      %v2804 = vpop.f32.mrf.mxu0
      %v2805 = vadd.f32 0.0, %v2804
      %v2806 = vpop.f32.mrf.mxu0
      %2807 = vdwg.mxu0
      %2808 = vmatpush.bf16.msra.mxu0 0
      %2809 = vmatpush.bf16.msra.mxu0 0
      %2810 = vmatpush.bf16.msra.mxu0 0
      %2811 = vmatpush.bf16.msra.mxu0 0
      %2812 = vmatpush.bf16.msra.mxu0 %v2646
      %2813 = vmatpush.bf16.msra.mxu0 %v2645
      %2814 = vmatpush.bf16.msra.mxu0 %v2644
      %2815 = vmatpush.bf16.msra.mxu0 %v2643
      %2816 = vmatmul.bf16.gmra.mxu0 %v2793
      %v2817 = vpop.f32.mrf.mxu0
      %v2818 = vadd.f32 %v2805, %v2817
      %v2819 = vpop.f32.mrf.mxu0
      %2820 = vdwg.mxu0
      %v2821 = vmul.f32 %v2783, %v2724
      %v2822 = vmul.f32 %v2818, %v2724
      %v2823 = vadd.f32 %v2821, %v2729
      %v2824 = vadd.f32 %v2822, %v2729
      %v2825 = vmax.f32 %v2823, -0.5
      %v2826 = vmax.f32 %v2824, -0.5
      %v2827 = vmin.f32 %v2825, 0.5
      %v2828 = vmin.f32 %v2826, 0.5
      %v2829 = vsub.f32 %v2823, %v2827
      %v2830 = vsub.f32 %v2824, %v2828
      %v2831 = vmax.f32 %v2737, %v2829
      %v2832 = vmax.f32 %v2738, %v2830
      %v2835 = vrot.slane %v2831, 1
      %v2836 = vrot.slane %v2832, 1
      %v2839 = vmax.f32 %v2831, %v2835
      %v2840 = vmax.f32 %v2832, %v2836
      %v2841 = vrot.slane %v2831, 2
      %v2842 = vrot.slane %v2832, 2
      %v2845 = vmax.f32 %v2839, %v2841
      %v2846 = vmax.f32 %v2840, %v2842
      %v2847 = vrot.slane %v2831, 3
      %v2848 = vrot.slane %v2832, 3
      %v2851 = vmax.f32 %v2845, %v2847
      %v2852 = vmax.f32 %v2846, %v2848
      %v2853 = vrot.slane %v2831, 4
      %v2854 = vrot.slane %v2832, 4
      %v2857 = vmax.f32 %v2851, %v2853
      %v2858 = vmax.f32 %v2852, %v2854
      %v2859 = vrot.slane %v2831, 5
      %v2860 = vrot.slane %v2832, 5
      %v2863 = vmax.f32 %v2857, %v2859
      %v2864 = vmax.f32 %v2858, %v2860
      %v2865 = vrot.slane %v2831, 6
      %v2866 = vrot.slane %v2832, 6
      %v2869 = vmax.f32 %v2863, %v2865
      %v2870 = vmax.f32 %v2864, %v2866
      %v2871 = vpack.c.bf16 %v2869, %v2869
      %v2872 = vpack.c.bf16 %v2870, %v2870
      %v2873 = vld [vmem:[%s14] sm:$0xf]
      %v2874 = vld [vmem:[%s14 + $0x4] sm:$0xf]
      %v2875 = vld [vmem:[%s14 + $0x8] sm:$0xf]
      %v2876 = vld [vmem:[%s14 + $0xc] sm:$0xf]
      %v2877 = vld [vmem:[%s14 + $0x10] sm:$0xf]
      %v2878 = vld [vmem:[%s14 + $0x14] sm:$0xf]
      %v2879 = vld [vmem:[%s14 + $0x18] sm:$0xf]
      %v2880 = vld [vmem:[%s14 + $0x1c] sm:$0xf]
      %v2881 = vld [vmem:[%s14 + $0x20] sm:$0xf]
      %v2882 = vld [vmem:[%s14 + $0x24] sm:$0xf]
      %v2883 = vld [vmem:[%s14 + $0x28] sm:$0xf]
      %v2884 = vld [vmem:[%s14 + $0x2c] sm:$0xf]
      %v2885 = vld [vmem:[%s14 + $0x30] sm:$0xf]
      %v2886 = vld [vmem:[%s14 + $0x34] sm:$0xf]
      %v2887 = vld [vmem:[%s14 + $0x38] sm:$0xf]
      %v2888 = vld [vmem:[%s14 + $0x3c] sm:$0xf]
      %v2889 = vld [vmem:[%s15] sm:$0x1]
      %v2906 = vunpack.c.l.b16 %v2873
      %v2907 = vunpack.c.l.b16 %v2874
      %v2908 = vunpack.c.l.b16 %v2875
      %v2909 = vunpack.c.l.b16 %v2876
      %v2910 = vunpack.c.l.b16 %v2877
      %v2911 = vunpack.c.l.b16 %v2878
      %v2912 = vunpack.c.l.b16 %v2879
      %v2913 = vunpack.c.l.b16 %v2880
      %v2914 = vunpack.c.l.b16 %v2881
      %v2915 = vunpack.c.l.b16 %v2882
      %v2916 = vunpack.c.l.b16 %v2883
      %v2917 = vunpack.c.l.b16 %v2884
      %v2918 = vunpack.c.l.b16 %v2885
      %v2919 = vunpack.c.l.b16 %v2886
      %v2920 = vunpack.c.l.b16 %v2887
      %v2921 = vunpack.c.l.b16 %v2888
      %v2922 = vpack.c.b16 %v2907, %v2906
      %v2923 = vpack.c.b16 %v2909, %v2908
      %v2924 = vpack.c.b16 %v2911, %v2910
      %v2925 = vpack.c.b16 %v2913, %v2912
      %v2926 = vpack.c.b16 %v2915, %v2914
      %v2927 = vpack.c.b16 %v2917, %v2916
      %v2928 = vpack.c.b16 %v2919, %v2918
      %v2929 = vpack.c.b16 %v2921, %v2920
      %2938 = vmatpush.bf16.msra.mxu0 %v2929
      %2939 = vmatpush.bf16.msra.mxu0 %v2928
      %2940 = vmatpush.bf16.msra.mxu0 %v2927
      %2941 = vmatpush.bf16.msra.mxu0 %v2926
      %2942 = vmatpush.bf16.msra.mxu0 %v2925
      %2943 = vmatpush.bf16.msra.mxu0 %v2924
      %2944 = vmatpush.bf16.msra.mxu0 %v2923
      %2945 = vmatpush.bf16.msra.mxu0 %v2922
      %2946 = vmatmul.bf16.gmra.mxu0 %v2871
      %v2947 = vpop.f32.mrf.mxu0
      %v2948 = vadd.f32 %v2889, %v2947
      %v2949 = vpop.f32.mrf.mxu0
      %2950 = vdwg.mxu0
      %2951 = vmatpush.bf16.msra.mxu0 %v2929
      %2952 = vmatpush.bf16.msra.mxu0 %v2928
      %2953 = vmatpush.bf16.msra.mxu0 %v2927
      %2954 = vmatpush.bf16.msra.mxu0 %v2926
      %2955 = vmatpush.bf16.msra.mxu0 %v2925
      %2956 = vmatpush.bf16.msra.mxu0 %v2924
      %2957 = vmatpush.bf16.msra.mxu0 %v2923
      %2958 = vmatpush.bf16.msra.mxu0 %v2922
      %2959 = vmatmul.bf16.gmra.mxu0 %v2872
      %v2960 = vpop.f32.mrf.mxu0
      %v2961 = vadd.f32 %v2889, %v2960
      %v2962 = vpop.f32.mrf.mxu0
      %2963 = vdwg.mxu0
      %2964 = vst [vmem:[%s685] sm:$0x1] %v2948
      %2965 = vst [vmem:[%s685 + $0x1] sm:$0x1] %v2961
      %v2966 = vpack.c.bf16 %v2948, %v2948
      %v2967 = vpack.c.bf16 %v2961, %v2961
      %v2968 = vld [vmem:[%s16] sm:$0xf]
      %v2969 = vld [vmem:[%s16 + $0x4] sm:$0xf]
      %v2970 = vld [vmem:[%s16 + $0x8] sm:$0xf]
      %v2971 = vld [vmem:[%s16 + $0xc] sm:$0xf]
      %v2972 = vld [vmem:[%s16 + $0x10] sm:$0xf]
      %v2973 = vld [vmem:[%s16 + $0x14] sm:$0xf]
      %v2974 = vld [vmem:[%s16 + $0x18] sm:$0xf]
      %v2975 = vld [vmem:[%s16 + $0x1c] sm:$0xf]
      %v2976 = vld [vmem:[%s16 + $0x20] sm:$0xf]
      %v2977 = vld [vmem:[%s16 + $0x24] sm:$0xf]
      %v2978 = vld [vmem:[%s16 + $0x28] sm:$0xf]
      %v2979 = vld [vmem:[%s16 + $0x2c] sm:$0xf]
      %v2980 = vld [vmem:[%s16 + $0x30] sm:$0xf]
      %v2981 = vld [vmem:[%s16 + $0x34] sm:$0xf]
      %v2982 = vld [vmem:[%s16 + $0x38] sm:$0xf]
      %v2983 = vld [vmem:[%s16 + $0x3c] sm:$0xf]
      %v2984 = vld [vmem:[%s17] sm:$0x1]
      %v3001 = vunpack.c.l.b16 %v2968
      %v3002 = vunpack.c.l.b16 %v2969
      %v3003 = vunpack.c.l.b16 %v2970
      %v3004 = vunpack.c.l.b16 %v2971
      %v3005 = vunpack.c.l.b16 %v2972
      %v3006 = vunpack.c.l.b16 %v2973
      %v3007 = vunpack.c.l.b16 %v2974
      %v3008 = vunpack.c.l.b16 %v2975
      %v3009 = vunpack.c.l.b16 %v2976
      %v3010 = vunpack.c.l.b16 %v2977
      %v3011 = vunpack.c.l.b16 %v2978
      %v3012 = vunpack.c.l.b16 %v2979
      %v3013 = vunpack.c.l.b16 %v2980
      %v3014 = vunpack.c.l.b16 %v2981
      %v3015 = vunpack.c.l.b16 %v2982
      %v3016 = vunpack.c.l.b16 %v2983
      %v3017 = vpack.c.b16 %v3002, %v3001
      %v3018 = vpack.c.b16 %v3004, %v3003
      %v3019 = vpack.c.b16 %v3006, %v3005
      %v3020 = vpack.c.b16 %v3008, %v3007
      %v3021 = vpack.c.b16 %v3010, %v3009
      %v3022 = vpack.c.b16 %v3012, %v3011
      %v3023 = vpack.c.b16 %v3014, %v3013
      %v3024 = vpack.c.b16 %v3016, %v3015
      %3033 = vmatpush.bf16.msra.mxu0 %v3024
      %3034 = vmatpush.bf16.msra.mxu0 %v3023
      %3035 = vmatpush.bf16.msra.mxu0 %v3022
      %3036 = vmatpush.bf16.msra.mxu0 %v3021
      %3037 = vmatpush.bf16.msra.mxu0 %v3020
      %3038 = vmatpush.bf16.msra.mxu0 %v3019
      %3039 = vmatpush.bf16.msra.mxu0 %v3018
      %3040 = vmatpush.bf16.msra.mxu0 %v3017
      %3041 = vmatmul.bf16.gmra.mxu0 %v2966
      %v3042 = vpop.f32.mrf.mxu0
      %v3043 = vadd.f32 %v2984, %v3042
      %v3044 = vpop.f32.mrf.mxu0
      %3045 = vdwg.mxu0
      %3046 = vmatpush.bf16.msra.mxu0 %v3024
      %3047 = vmatpush.bf16.msra.mxu0 %v3023
      %3048 = vmatpush.bf16.msra.mxu0 %v3022
      %3049 = vmatpush.bf16.msra.mxu0 %v3021
      %3050 = vmatpush.bf16.msra.mxu0 %v3020
      %3051 = vmatpush.bf16.msra.mxu0 %v3019
      %3052 = vmatpush.bf16.msra.mxu0 %v3018
      %3053 = vmatpush.bf16.msra.mxu0 %v3017
      %3054 = vmatmul.bf16.gmra.mxu0 %v2967
      %v3055 = vpop.f32.mrf.mxu0
      %v3056 = vadd.f32 %v2984, %v3055
      %v3057 = vpop.f32.mrf.mxu0
      %3058 = vdwg.mxu0
      %3059 = vst [vmem:[%s689] sm:$0x1] %v3043
      %3060 = vst [vmem:[%s689 + $0x1] sm:$0x1] %v3056
      %p3061 = scmp.lt.s32.totalorder %s31, 1
      %s3062 = scalar_select %p3061, %s31, 1
      %s3063 = smul.addr %s3062, 2
      %s3064 = scalar_lea.vmem %s18, %s3063
      %p3065 = scmp.lt.s32.totalorder %s31, 1
      %s3066 = scalar_select %p3065, %s31, 1
      %s3067 = smul.addr %s3066, 2
      %s3068 = scalar_lea.vmem %s19, %s3067
      // Predicated region
      $region93: #{ticnn_forward.1} parent=91 // pred_check
        %p3069 = pneg %p452
      $region94: #{ticnn_forward.1} parent=91 // pred_check_branch
        %3071 = sbr.rel (%p3069) target = $region96
      $region95: #{ticnn_forward.1} parent=91 // pred_region
        _
      $region96: #{ticnn_forward.1} parent=91 // pred_fallthru
        _
      // Predicated region
      $region97: #{ticnn_forward.1} parent=91 // pred_check
        %p3072 = pneg %p478
      $region98: #{ticnn_forward.1} parent=91 // pred_check_branch
        %3074 = sbr.rel (%p3072) target = $region100
      $region99: #{ticnn_forward.1} parent=91 // pred_region
        _
      $region100: #{ticnn_forward.1} parent=91 // pred_fallthru
        _
    $region92: #{ticnn_forward.1} parent=5 // pred_fallthru
      _
    %p3075 = scmp.le.s32.totalorder 2, %s26
    // Predicated region
    $region101: #{ticnn_forward.1} parent=5 // pred_check
      %p3076 = pneg %p3075
    $region102: #{ticnn_forward.1} parent=5 // pred_check_branch
      %3078 = sbr.rel (%p3076) target = $region104
    $region103: #{ticnn_forward.1} parent=5 // pred_region
      %s3079 = ssub.s32 %s26, 2
      // Predicated region
      $region105: #{ticnn_forward.1} parent=103 // pred_check
        %p3080 = pneg %p458
      $region106: #{ticnn_forward.1} parent=103 // pred_check_branch
        %3082 = sbr.rel (%p3080) target = $region108
      $region107: #{ticnn_forward.1} parent=103 // pred_region
        %p3083 = scmp.lt.s32.totalorder %s32, 1
        %s3084 = scalar_select %p3083, %s32, 1
        %s3085 = smul.addr %s3084, 2
        %s3086 = scalar_lea.vmem %s18, %s3085
      $region108: #{ticnn_forward.1} parent=103 // pred_fallthru
        _
      // Predicated region
      $region109: #{ticnn_forward.1} parent=103 // pred_check
        %p3087 = pneg %p484
      $region110: #{ticnn_forward.1} parent=103 // pred_check_branch
        %3089 = sbr.rel (%p3087) target = $region112
      $region111: #{ticnn_forward.1} parent=103 // pred_region
        %p3090 = scmp.lt.s32.totalorder %s32, 1
        %s3091 = scalar_select %p3090, %s32, 1
        %s3092 = smul.addr %s3091, 2
        %s3093 = scalar_lea.vmem %s19, %s3092
      $region112: #{ticnn_forward.1} parent=103 // pred_fallthru
        _
    $region104: #{ticnn_forward.1} parent=5 // pred_fallthru
      _
  $region6: #{ticnn_forward.1} parent=0 // loop_footer
    %s30 = sadd.s32 1, %s26
  $region7: #{ticnn_forward.1} parent=0 // loop_footer_branch
    %25 = sbr.rel target = $region3
  $region8: #{ticnn_forward.1} parent=0 // loop_exit
    _

</llo_original>
